<compile_context>
chip_gen: v6e
topology: v6e:2x2x1
jax: 0.10.0
libtpu: 0.0.40
codegen_flags: <defaults>
</compile_context>

<pallas_src>
import functools

import jax
import jax.numpy as jnp
from jax import lax
from jax.experimental import pallas as pl
from jax.experimental.pallas import tpu as pltpu


LANE = 128  # TPU lane width.


def _round_up(x, m):
    return (x + m - 1) // m * m


# ----------------------------------------------------------------------------
# Fused kernel: gather -> L bidirectional LSTM layers -> GELU -> Linear.
# ----------------------------------------------------------------------------
def _fused_kernel(ids_ref, emb_ref, wih_ref, whh_ref, b_ref, fcw_ref, fcb_ref,
                  out_ref, xa_sc, xb_sc, *, T, B, H, L):
    TB = T * B
    G = 4 * H
    DP, Fin = emb_ref.shape

    # Zero the second ping-pong slab once so lanes beyond 2H (only present if
    # embed_size > 2*hid_size) are exact zeros when deeper layers read them.
    xb_sc[...] = jnp.zeros_like(xb_sc)

    # -- In-kernel embedding gather: one-hot(ids) @ table (exact in f32). -----
    ids = ids_ref[...]                                          # (TB, 1) int32
    vocab = lax.broadcasted_iota(jnp.int32, (TB, DP), 1)
    onehot = (vocab == ids).astype(jnp.float32)                 # (TB, DP)
    xa_sc[...] = jnp.dot(onehot, emb_ref[...],
                         preferred_element_type=jnp.float32)    # (TB, Fin)

    # Per-lane constants: sigmoid(x)=0.5*tanh(0.5x)+0.5 on i/f/o lanes,
    # plain tanh on g lanes -> ONE EUP tanh per step over the full gate vreg.
    lane = lax.broadcasted_iota(jnp.int32, (1, G), 1)
    is_g = jnp.logical_and(lane >= 2 * H, lane < 3 * H)
    scale = jnp.where(is_g, 1.0, 0.5).astype(jnp.float32)       # pre & post mul
    shift = jnp.where(is_g, 0.0, 0.5).astype(jnp.float32)       # post add

    h_fwd_last = None
    h_bwd_last = None
    src, dst = xa_sc, xb_sc
    for l in range(L):                                          # static unroll
        x_b16 = src[...].astype(jnp.bfloat16)                   # (TB, Fin)
        for d in range(2):                                      # 0=fwd, 1=bwd
            wih = wih_ref[l, d]                                 # (Fin, G) bf16
            whh = whh_ref[l, d]                                 # (H, G) bf16, stays in vregs
            bias = b_ref[l, d]                                  # (1, G) f32 (b_ih+b_hh)

            # Hoisted input projection: one MXU matmul for the whole sequence.
            gx = jnp.dot(x_b16, wih,
                         preferred_element_type=jnp.float32) + bias   # (TB, G)

            h = jnp.zeros((B, H), jnp.float32)
            c = jnp.zeros((B, H), jnp.float32)
            for t in range(T):                                  # static unroll
                tt = (T - 1 - t) if d == 1 else t               # original-time idx
                row = tt * B                                    # compile-time const
                gates = gx[row:row + B, :] + jnp.dot(
                    h.astype(jnp.bfloat16), whh,
                    preferred_element_type=jnp.float32)         # (B, G)
                act = jnp.tanh(gates * scale) * scale + shift   # all 4 gates, 1 tanh
                i_g = act[:, 0 * H:1 * H]
                f_g = act[:, 1 * H:2 * H]
                g_g = act[:, 2 * H:3 * H]
                o_g = act[:, 3 * H:4 * H]
                c = f_g * c + i_g * g_g
                h = o_g * jnp.tanh(c)
                if l < L - 1:
                    # Store hidden at its original-time row, [fwd | bwd] lanes.
                    dst[row:row + B, d * H:(d + 1) * H] = h
            if l == L - 1:
                if d == 0:
                    h_fwd_last = h
                else:
                    h_bwd_last = h
        src, dst = dst, src

    # -- Head: torch does cat([h_bwd_final, h_fwd_final]) -> GELU -> Linear. --
    hidden = jnp.concatenate([h_bwd_last, h_fwd_last], axis=1)  # (B, 2H)
    inv_sqrt2 = jnp.float32(0.7071067811865476)
    gelu = 0.5 * hidden * (1.0 + lax.erf(hidden * inv_sqrt2))   # exact GELU
    out_ref[...] = (jnp.dot(gelu, fcw_ref[...],
                            preferred_element_type=jnp.float32)
                    + fcb_ref[...])


def _fused_lstm_classifier(ids, emb, wih, whh, b, fcw, fcb, *, T, B, H, L):
    TB = T * B
    G = 4 * H
    DP, Fin = emb.shape
    CP = fcw.shape[1]
    kernel = functools.partial(_fused_kernel, T=T, B=B, H=H, L=L)
    return pl.pallas_call(
        kernel,
        out_shape=jax.ShapeDtypeStruct((B, CP), jnp.float32),
        grid=(1,),
        in_specs=[
            pl.BlockSpec((TB, 1), lambda i: (0, 0)),            # token ids
            pl.BlockSpec((DP, Fin), lambda i: (0, 0)),          # padded embedding
            pl.BlockSpec((L, 2, Fin, G), lambda i: (0, 0, 0, 0)),
            pl.BlockSpec((L, 2, H, G), lambda i: (0, 0, 0, 0)),
            pl.BlockSpec((L, 2, 1, G), lambda i: (0, 0, 0, 0)),
            pl.BlockSpec((2 * H, CP), lambda i: (0, 0)),        # fc weight^T
            pl.BlockSpec((1, CP), lambda i: (0, 0)),            # fc bias
        ],
        out_specs=pl.BlockSpec((B, CP), lambda i: (0, 0)),
        scratch_shapes=[
            pltpu.VMEM((TB, Fin), jnp.float32),                 # layer-input slab A
            pltpu.VMEM((TB, Fin), jnp.float32),                 # layer-input slab B
        ],
        compiler_params=pltpu.CompilerParams(
            dimension_semantics=("arbitrary",)),
    )(ids, emb, wih, whh, b, fcw, fcb)


# ----------------------------------------------------------------------------
# One-time parameter preparation (transpose, pad, bias-fuse, bf16 cast).
# ----------------------------------------------------------------------------
def prepare_params(params, *, dct_size, embed_size, hid_size, num_layers,
                   num_classes):
    H = hid_size
    G = 4 * H
    Fin = _round_up(max(embed_size, 2 * H), 8)    # unified input width per layer
    DP = _round_up(dct_size, LANE)                # one-hot gather width
    CP = _round_up(num_classes, LANE)             # lane-dense logits

    emb = params["embedding"].astype(jnp.float32)
    emb_p = jnp.zeros((DP, Fin), jnp.float32).at[:dct_size, :embed_size].set(emb)

    wih_all, whh_all, b_all = [], [], []
    for l in range(num_layers):
        lp = params["lstm"][l]
        wih_dirs, whh_dirs, b_dirs = [], [], []
        for suff in ("f", "b"):                   # dir 0 = forward, 1 = backward
            w_ih = lp[f"w_ih_{suff}"].astype(jnp.float32)     # (4H, Din)
            w_hh = lp[f"w_hh_{suff}"].astype(jnp.float32)     # (4H, H)
            bias = (lp[f"b_ih_{suff}"] + lp[f"b_hh_{suff}"]).astype(jnp.float32)
            din = w_ih.shape[1]
            wih_dirs.append(
                jnp.zeros((Fin, G), jnp.float32).at[:din].set(w_ih.T))
            whh_dirs.append(w_hh.T)                            # (H, 4H)
            b_dirs.append(bias.reshape(1, G))
        wih_all.append(jnp.stack(wih_dirs))
        whh_all.append(jnp.stack(whh_dirs))
        b_all.append(jnp.stack(b_dirs))

    wih = jnp.stack(wih_all).astype(jnp.bfloat16)   # (L, 2, Fin, 4H)
    whh = jnp.stack(whh_all).astype(jnp.bfloat16)   # (L, 2, H, 4H)
    b = jnp.stack(b_all)                            # (L, 2, 1, 4H) f32

    fcw = jnp.zeros((2 * H, CP), jnp.float32)
    fcw = fcw.at[:, :num_classes].set(params["fc_w"].astype(jnp.float32).T)
    fcb = jnp.zeros((1, CP), jnp.float32).at[0, :num_classes].set(
        params["fc_b"].astype(jnp.float32))

    return dict(emb=emb_p, wih=wih, whh=whh, b=b, fcw=fcw, fcb=fcb)


# ----------------------------------------------------------------------------
# Full forward pass (PyTorch-equivalent semantics, inference path).
# ----------------------------------------------------------------------------
def lstm_classifier_forward(prep, inp_ids, *, num_classes):
    B, T = inp_ids.shape
    L = prep["wih"].shape[0]
    H = prep["whh"].shape[2]
    # Time-major flattened ids (row = t*B + b) for the in-kernel gather.
    ids_tm = jnp.transpose(inp_ids).astype(jnp.int32).reshape(T * B, 1)
    logits_p = _fused_lstm_classifier(
        ids_tm, prep["emb"], prep["wih"], prep["whh"], prep["b"],
        prep["fcw"], prep["fcb"], T=T, B=B, H=H, L=L)
    return logits_p[:, :num_classes]


# ----------------------------------------------------------------------------
# Deterministic parameter init (shapes match the nn.Module __init__).
# ----------------------------------------------------------------------------
def init_params(key, dct_size, embed_size, hid_size, num_layers, num_classes):
    keys = jax.random.split(key, 2 + num_layers)
    emb = jax.random.normal(keys[0], (dct_size, embed_size), jnp.float32)
    emb = emb.at[0].set(0.0)  # padding_idx=0 row is zero

    k = 1.0 / jnp.sqrt(jnp.float32(hid_size))
    lstm_layers = []
    for l in range(num_layers):
        in_size = embed_size if l == 0 else 2 * hid_size
        lk = jax.random.split(keys[2 + l], 8)
        u = lambda kk, shape: jax.random.uniform(kk, shape, jnp.float32, -k, k)
        lstm_layers.append(dict(
            w_ih_f=u(lk[0], (4 * hid_size, in_size)),
            w_hh_f=u(lk[1], (4 * hid_size, hid_size)),
            b_ih_f=u(lk[2], (4 * hid_size,)),
            b_hh_f=u(lk[3], (4 * hid_size,)),
            w_ih_b=u(lk[4], (4 * hid_size, in_size)),
            w_hh_b=u(lk[5], (4 * hid_size, hid_size)),
            b_ih_b=u(lk[6], (4 * hid_size,)),
            b_hh_b=u(lk[7], (4 * hid_size,)),
        ))

    fk = jax.random.split(keys[1], 2)
    kf = 1.0 / jnp.sqrt(jnp.float32(2 * hid_size))
    fc_w = jax.random.uniform(fk[0], (num_classes, 2 * hid_size), jnp.float32, -kf, kf)
    fc_b = jax.random.uniform(fk[1], (num_classes,), jnp.float32, -kf, kf)

    return dict(embedding=emb, lstm=lstm_layers, fc_w=fc_w, fc_b=fc_b)


# ----------------------------------------------------------------------------
# Pure-JAX f32 reference for the correctness check.
# ----------------------------------------------------------------------------
def _ref_lstm_dir(x_tm, w_ih, w_hh, b_ih, b_hh):
    T, B, _ = x_tm.shape
    H = w_hh.shape[1]
    def step(carry, xt):
        h, c = carry
        gates = xt @ w_ih.T + h @ w_hh.T + b_ih + b_hh
        i = jax.nn.sigmoid(gates[:, 0 * H:1 * H])
        f = jax.nn.sigmoid(gates[:, 1 * H:2 * H])
        g = jnp.tanh(gates[:, 2 * H:3 * H])
        o = jax.nn.sigmoid(gates[:, 3 * H:4 * H])
        c = f * c + i * g
        h = o * jnp.tanh(c)
        return (h, c), h
    (h_fin, _), y = lax.scan(step, (jnp.zeros((B, H)), jnp.zeros((B, H))), x_tm)
    return y, h_fin


def _ref_forward(params, inp_ids, num_layers):
    emb = jnp.take(params["embedding"], inp_ids, axis=0)
    x = jnp.transpose(emb, (1, 0, 2))
    h_f = h_b = None
    for l in range(num_layers):
        lp = params["lstm"][l]
        y_f, h_f = _ref_lstm_dir(x, lp["w_ih_f"], lp["w_hh_f"], lp["b_ih_f"], lp["b_hh_f"])
        y_b_rev, h_b = _ref_lstm_dir(x[::-1], lp["w_ih_b"], lp["w_hh_b"], lp["b_ih_b"], lp["b_hh_b"])
        x = jnp.concatenate([y_f, y_b_rev[::-1]], axis=-1)
    hidden = jnp.concatenate([h_b, h_f], axis=-1)
    g = 0.5 * hidden * (1.0 + lax.erf(hidden / jnp.sqrt(2.0)))
    return g @ params["fc_w"].T + params["fc_b"]


if __name__ == "__main__":
    DCT_SIZE, EMBED, HID, NUM_LAYERS, NUM_CLASSES = 100, 32, 32, 2, 4
    B, T = 8, 8

    key = jax.random.PRNGKey(0)
    pkey, dkey = jax.random.split(key)
    params = init_params(pkey, DCT_SIZE, EMBED, HID, NUM_LAYERS, NUM_CLASSES)
    prep = prepare_params(params, dct_size=DCT_SIZE, embed_size=EMBED,
                          hid_size=HID, num_layers=NUM_LAYERS,
                          num_classes=NUM_CLASSES)

    inp_ids = jax.random.randint(dkey, (B, T), 0, DCT_SIZE, dtype=jnp.int32)

    fwd = jax.jit(functools.partial(lstm_classifier_forward,
                                    num_classes=NUM_CLASSES))
    logits = jax.block_until_ready(fwd(prep, inp_ids))

    ref = _ref_forward(params, inp_ids, NUM_LAYERS)
    assert logits.shape == (B, NUM_CLASSES)
    # Tolerance widened vs. the pure-f32 version because the kernel uses bf16
    # MXU operands (f32 accumulation) on the LSTM recurrence.
    assert jnp.allclose(logits, ref, rtol=2e-2, atol=2e-2), (logits, ref)

    print("KERNEL_OK")
</pallas_src>

<mosaic_0001>
module attributes {stable_mosaic.version = 11 : i64} {
  func.func @_fused_kernel(%arg0: i32, %arg1: memref<64x1xi32, #tpu.memory_space<vmem>>, %arg2: memref<128x64xf32, #tpu.memory_space<vmem>>, %arg3: memref<2x2x64x128xbf16, #tpu.memory_space<vmem>>, %arg4: memref<2x2x32x128xbf16, #tpu.memory_space<vmem>>, %arg5: memref<2x2x1x128xf32, #tpu.memory_space<vmem>>, %arg6: memref<64x128xf32, #tpu.memory_space<vmem>>, %arg7: memref<1x128xf32, #tpu.memory_space<vmem>>, %arg8: memref<8x128xf32, #tpu.memory_space<vmem>>, %arg9: memref<64x64xf32, #tpu.memory_space<vmem>>, %arg10: memref<64x64xf32, #tpu.memory_space<vmem>>) attributes {dimension_semantics = [#tpu.dimension_semantics<arbitrary>], iteration_bounds = array<i64: 1>, scalar_prefetch = 0 : i64, scratch_operands = 2 : i64, tpu.core_type = #tpu.core_type<tc>, window_params = [{pipeline_mode = #tpu.pipeline_mode<synchronous>, transform_indices = @transform_0, window_bounds = array<i64: 64, 1>}, {pipeline_mode = #tpu.pipeline_mode<synchronous>, transform_indices = @transform_1, window_bounds = array<i64: 128, 64>}, {pipeline_mode = #tpu.pipeline_mode<synchronous>, transform_indices = @transform_2, window_bounds = array<i64: 2, 2, 64, 128>}, {pipeline_mode = #tpu.pipeline_mode<synchronous>, transform_indices = @transform_3, window_bounds = array<i64: 2, 2, 32, 128>}, {pipeline_mode = #tpu.pipeline_mode<synchronous>, transform_indices = @transform_4, window_bounds = array<i64: 2, 2, 1, 128>}, {pipeline_mode = #tpu.pipeline_mode<synchronous>, transform_indices = @transform_5, window_bounds = array<i64: 64, 128>}, {pipeline_mode = #tpu.pipeline_mode<synchronous>, transform_indices = @transform_6, window_bounds = array<i64: 1, 128>}, {pipeline_mode = #tpu.pipeline_mode<synchronous>, transform_indices = @transform_7, window_bounds = array<i64: 8, 128>}]} {
    %cst = arith.constant 0.000000e+00 : f32
    %0 = vector.broadcast %cst : f32 to vector<64x64xf32>
    %c0 = arith.constant 0 : index
    %c0_0 = arith.constant 0 : index
    %1 = vector.load %arg10[%c0, %c0_0] : memref<64x64xf32, #tpu.memory_space<vmem>>, vector<64x64xf32>
    tpu.vector_store %arg10[%c0, %c0_0], %0 {strides = array<i32>} : memref<64x64xf32, #tpu.memory_space<vmem>>, vector<64x64xf32>,
    %c0_1 = arith.constant 0 : index
    %c0_2 = arith.constant 0 : index
    %2 = vector.load %arg1[%c0_1, %c0_2] : memref<64x1xi32, #tpu.memory_space<vmem>>, vector<64x1xi32>
    %3 = tpu.iota {dimensions = array<i32: 1>} : vector<64x128xi32>
    %4 = vector.broadcast %2 : vector<64x1xi32> to vector<64x128xi32>
    %5 = arith.cmpi eq, %3, %4 : vector<64x128xi32>
    %6 = arith.extui %5 : vector<64x128xi1> to vector<64x128xi32>
    %7 = arith.sitofp %6 : vector<64x128xi32> to vector<64x128xf32>
    %c0_3 = arith.constant 0 : index
    %c0_4 = arith.constant 0 : index
    %8 = vector.load %arg2[%c0_3, %c0_4] : memref<128x64xf32, #tpu.memory_space<vmem>>, vector<128x64xf32>
    %cst_5 = arith.constant dense<0.000000e+00> : vector<64x64xf32>
    %9 = tpu.matmul %7, %8, %cst_5 {dimension_numbers = #tpu.dot_dimension_numbers<[1], [0], [0], [1], [0, 0, 1, 1], [], []>} : vector<64x128xf32>, vector<128x64xf32>, vector<64x64xf32> -> vector<64x64xf32>
    %c0_6 = arith.constant 0 : index
    %c0_7 = arith.constant 0 : index
    %10 = vector.load %arg9[%c0_6, %c0_7] : memref<64x64xf32, #tpu.memory_space<vmem>>, vector<64x64xf32>
    tpu.vector_store %arg9[%c0_6, %c0_7], %9 {strides = array<i32>} : memref<64x64xf32, #tpu.memory_space<vmem>>, vector<64x64xf32>,
    %11 = tpu.iota {dimensions = array<i32: 1>} : vector<1x128xi32>
    %c64_i32 = arith.constant 64 : i32
    %12 = vector.broadcast %c64_i32 : i32 to vector<1x128xi32>
    %13 = arith.cmpi sge, %11, %12 : vector<1x128xi32>
    %c96_i32 = arith.constant 96 : i32
    %14 = vector.broadcast %c96_i32 : i32 to vector<1x128xi32>
    %15 = arith.cmpi slt, %11, %14 : vector<1x128xi32>
    %16 = arith.andi %13, %15 : vector<1x128xi1>
    %cst_8 = arith.constant 1.000000e+00 : f32
    %cst_9 = arith.constant 5.000000e-01 : f32
    %17 = vector.broadcast %cst_8 : f32 to vector<1x128xf32>
    %18 = vector.broadcast %cst_9 : f32 to vector<1x128xf32>
    %19 = arith.select %16, %17, %18 : vector<1x128xi1>, vector<1x128xf32>
    %cst_10 = arith.constant 0.000000e+00 : f32
    %cst_11 = arith.constant 5.000000e-01 : f32
    %20 = vector.broadcast %cst_10 : f32 to vector<1x128xf32>
    %21 = vector.broadcast %cst_11 : f32 to vector<1x128xf32>
    %22 = arith.select %16, %20, %21 : vector<1x128xi1>, vector<1x128xf32>
    %c0_12 = arith.constant 0 : index
    %c0_13 = arith.constant 0 : index
    %23 = vector.load %arg9[%c0_12, %c0_13] : memref<64x64xf32, #tpu.memory_space<vmem>>, vector<64x64xf32>
    %24 = arith.truncf %23 : vector<64x64xf32> to vector<64x64xbf16>
    %c0_14 = arith.constant 0 : index
    %c0_15 = arith.constant 0 : index
    %c0_16 = arith.constant 0 : index
    %c0_17 = arith.constant 0 : index
    %25 = vector.load %arg3[%c0_14, %c0_15, %c0_16, %c0_17] : memref<2x2x64x128xbf16, #tpu.memory_space<vmem>>, vector<1x1x64x128xbf16>
    %26 = vector.shape_cast %25 : vector<1x1x64x128xbf16> to vector<64x128xbf16>
    %c0_18 = arith.constant 0 : index
    %c0_19 = arith.constant 0 : index
    %c0_20 = arith.constant 0 : index
    %c0_21 = arith.constant 0 : index
    %27 = vector.load %arg4[%c0_18, %c0_19, %c0_20, %c0_21] : memref<2x2x32x128xbf16, #tpu.memory_space<vmem>>, vector<1x1x32x128xbf16>
    %28 = vector.shape_cast %27 : vector<1x1x32x128xbf16> to vector<32x128xbf16>
    %c0_22 = arith.constant 0 : index
    %c0_23 = arith.constant 0 : index
    %c0_24 = arith.constant 0 : index
    %c0_25 = arith.constant 0 : index
    %29 = vector.load %arg5[%c0_22, %c0_23, %c0_24, %c0_25] : memref<2x2x1x128xf32, #tpu.memory_space<vmem>>, vector<1x1x1x128xf32>
    %30 = vector.shape_cast %29 : vector<1x1x1x128xf32> to vector<1x128xf32>
    %cst_26 = arith.constant dense<0.000000e+00> : vector<64x128xf32>
    %31 = tpu.matmul %24, %26, %cst_26 {dimension_numbers = #tpu.dot_dimension_numbers<[1], [0], [0], [1], [0, 0, 1, 1], [], []>} : vector<64x64xbf16>, vector<64x128xbf16>, vector<64x128xf32> -> vector<64x128xf32>
    %32 = vector.broadcast %30 : vector<1x128xf32> to vector<64x128xf32>
    %33 = arith.addf %31, %32 : vector<64x128xf32>
    %cst_27 = arith.constant 0.000000e+00 : f32
    %34 = vector.broadcast %cst_27 : f32 to vector<8x32xf32>
    %cst_28 = arith.constant 0.000000e+00 : f32
    %35 = vector.broadcast %cst_28 : f32 to vector<8x32xf32>
    %36 = vector.extract_strided_slice %33 {offsets = [0, 0], sizes = [8, 128], strides = [1, 1]} : vector<64x128xf32> to vector<8x128xf32>
    %37 = arith.truncf %34 : vector<8x32xf32> to vector<8x32xbf16>
    %cst_29 = arith.constant dense<0.000000e+00> : vector<8x128xf32>
    %38 = tpu.matmul %37, %28, %cst_29 {dimension_numbers = #tpu.dot_dimension_numbers<[1], [0], [0], [1], [0, 0, 1, 1], [], []>} : vector<8x32xbf16>, vector<32x128xbf16>, vector<8x128xf32> -> vector<8x128xf32>
    %39 = arith.addf %36, %38 : vector<8x128xf32>
    %40 = vector.broadcast %19 : vector<1x128xf32> to vector<8x128xf32>
    %41 = arith.mulf %39, %40 : vector<8x128xf32>
    %42 = math.tanh %41 : vector<8x128xf32>
    %43 = vector.broadcast %19 : vector<1x128xf32> to vector<8x128xf32>
    %44 = arith.mulf %42, %43 : vector<8x128xf32>
    %45 = vector.broadcast %22 : vector<1x128xf32> to vector<8x128xf32>
    %46 = arith.addf %44, %45 : vector<8x128xf32>
    %47 = vector.extract_strided_slice %46 {offsets = [0, 0], sizes = [8, 32], strides = [1, 1]} : vector<8x128xf32> to vector<8x32xf32>
    %48 = vector.extract_strided_slice %46 {offsets = [0, 32], sizes = [8, 32], strides = [1, 1]} : vector<8x128xf32> to vector<8x32xf32>
    %49 = vector.extract_strided_slice %46 {offsets = [0, 64], sizes = [8, 32], strides = [1, 1]} : vector<8x128xf32> to vector<8x32xf32>
    %50 = vector.extract_strided_slice %46 {offsets = [0, 96], sizes = [8, 32], strides = [1, 1]} : vector<8x128xf32> to vector<8x32xf32>
    %51 = arith.mulf %48, %35 : vector<8x32xf32>
    %52 = arith.mulf %47, %49 : vector<8x32xf32>
    %53 = arith.addf %51, %52 : vector<8x32xf32>
    %54 = math.tanh %53 : vector<8x32xf32>
    %55 = arith.mulf %50, %54 : vector<8x32xf32>
    %c0_30 = arith.constant 0 : index
    %c0_31 = arith.constant 0 : index
    %56 = vector.load %arg10[%c0_30, %c0_31] : memref<64x64xf32, #tpu.memory_space<vmem>>, vector<8x32xf32>
    tpu.vector_store %arg10[%c0_30, %c0_31], %55 {strides = array<i32>} : memref<64x64xf32, #tpu.memory_space<vmem>>, vector<8x32xf32>,
    %57 = vector.extract_strided_slice %33 {offsets = [8, 0], sizes = [8, 128], strides = [1, 1]} : vector<64x128xf32> to vector<8x128xf32>
    %58 = arith.truncf %55 : vector<8x32xf32> to vector<8x32xbf16>
    %cst_32 = arith.constant dense<0.000000e+00> : vector<8x128xf32>
    %59 = tpu.matmul %58, %28, %cst_32 {dimension_numbers = #tpu.dot_dimension_numbers<[1], [0], [0], [1], [0, 0, 1, 1], [], []>} : vector<8x32xbf16>, vector<32x128xbf16>, vector<8x128xf32> -> vector<8x128xf32>
    %60 = arith.addf %57, %59 : vector<8x128xf32>
    %61 = vector.broadcast %19 : vector<1x128xf32> to vector<8x128xf32>
    %62 = arith.mulf %60, %61 : vector<8x128xf32>
    %63 = math.tanh %62 : vector<8x128xf32>
    %64 = vector.broadcast %19 : vector<1x128xf32> to vector<8x128xf32>
    %65 = arith.mulf %63, %64 : vector<8x128xf32>
    %66 = vector.broadcast %22 : vector<1x128xf32> to vector<8x128xf32>
    %67 = arith.addf %65, %66 : vector<8x128xf32>
    %68 = vector.extract_strided_slice %67 {offsets = [0, 0], sizes = [8, 32], strides = [1, 1]} : vector<8x128xf32> to vector<8x32xf32>
    %69 = vector.extract_strided_slice %67 {offsets = [0, 32], sizes = [8, 32], strides = [1, 1]} : vector<8x128xf32> to vector<8x32xf32>
    %70 = vector.extract_strided_slice %67 {offsets = [0, 64], sizes = [8, 32], strides = [1, 1]} : vector<8x128xf32> to vector<8x32xf32>
    %71 = vector.extract_strided_slice %67 {offsets = [0, 96], sizes = [8, 32], strides = [1, 1]} : vector<8x128xf32> to vector<8x32xf32>
    %72 = arith.mulf %69, %53 : vector<8x32xf32>
    %73 = arith.mulf %68, %70 : vector<8x32xf32>
    %74 = arith.addf %72, %73 : vector<8x32xf32>
    %75 = math.tanh %74 : vector<8x32xf32>
    %76 = arith.mulf %71, %75 : vector<8x32xf32>
    %c8 = arith.constant 8 : index
    %c0_33 = arith.constant 0 : index
    %77 = vector.load %arg10[%c8, %c0_33] : memref<64x64xf32, #tpu.memory_space<vmem>>, vector<8x32xf32>
    tpu.vector_store %arg10[%c8, %c0_33], %76 {strides = array<i32>} : memref<64x64xf32, #tpu.memory_space<vmem>>, vector<8x32xf32>,
    %78 = vector.extract_strided_slice %33 {offsets = [16, 0], sizes = [8, 128], strides = [1, 1]} : vector<64x128xf32> to vector<8x128xf32>
    %79 = arith.truncf %76 : vector<8x32xf32> to vector<8x32xbf16>
    %cst_34 = arith.constant dense<0.000000e+00> : vector<8x128xf32>
    %80 = tpu.matmul %79, %28, %cst_34 {dimension_numbers = #tpu.dot_dimension_numbers<[1], [0], [0], [1], [0, 0, 1, 1], [], []>} : vector<8x32xbf16>, vector<32x128xbf16>, vector<8x128xf32> -> vector<8x128xf32>
    %81 = arith.addf %78, %80 : vector<8x128xf32>
    %82 = vector.broadcast %19 : vector<1x128xf32> to vector<8x128xf32>
    %83 = arith.mulf %81, %82 : vector<8x128xf32>
    %84 = math.tanh %83 : vector<8x128xf32>
    %85 = vector.broadcast %19 : vector<1x128xf32> to vector<8x128xf32>
    %86 = arith.mulf %84, %85 : vector<8x128xf32>
    %87 = vector.broadcast %22 : vector<1x128xf32> to vector<8x128xf32>
    %88 = arith.addf %86, %87 : vector<8x128xf32>
    %89 = vector.extract_strided_slice %88 {offsets = [0, 0], sizes = [8, 32], strides = [1, 1]} : vector<8x128xf32> to vector<8x32xf32>
    %90 = vector.extract_strided_slice %88 {offsets = [0, 32], sizes = [8, 32], strides = [1, 1]} : vector<8x128xf32> to vector<8x32xf32>
    %91 = vector.extract_strided_slice %88 {offsets = [0, 64], sizes = [8, 32], strides = [1, 1]} : vector<8x128xf32> to vector<8x32xf32>
    %92 = vector.extract_strided_slice %88 {offsets = [0, 96], sizes = [8, 32], strides = [1, 1]} : vector<8x128xf32> to vector<8x32xf32>
    %93 = arith.mulf %90, %74 : vector<8x32xf32>
    %94 = arith.mulf %89, %91 : vector<8x32xf32>
    %95 = arith.addf %93, %94 : vector<8x32xf32>
    %96 = math.tanh %95 : vector<8x32xf32>
    %97 = arith.mulf %92, %96 : vector<8x32xf32>
    %c16 = arith.constant 16 : index
    %c0_35 = arith.constant 0 : index
    %98 = vector.load %arg10[%c16, %c0_35] : memref<64x64xf32, #tpu.memory_space<vmem>>, vector<8x32xf32>
    tpu.vector_store %arg10[%c16, %c0_35], %97 {strides = array<i32>} : memref<64x64xf32, #tpu.memory_space<vmem>>, vector<8x32xf32>,
    %99 = vector.extract_strided_slice %33 {offsets = [24, 0], sizes = [8, 128], strides = [1, 1]} : vector<64x128xf32> to vector<8x128xf32>
    %100 = arith.truncf %97 : vector<8x32xf32> to vector<8x32xbf16>
    %cst_36 = arith.constant dense<0.000000e+00> : vector<8x128xf32>
    %101 = tpu.matmul %100, %28, %cst_36 {dimension_numbers = #tpu.dot_dimension_numbers<[1], [0], [0], [1], [0, 0, 1, 1], [], []>} : vector<8x32xbf16>, vector<32x128xbf16>, vector<8x128xf32> -> vector<8x128xf32>
    %102 = arith.addf %99, %101 : vector<8x128xf32>
    %103 = vector.broadcast %19 : vector<1x128xf32> to vector<8x128xf32>
    %104 = arith.mulf %102, %103 : vector<8x128xf32>
    %105 = math.tanh %104 : vector<8x128xf32>
    %106 = vector.broadcast %19 : vector<1x128xf32> to vector<8x128xf32>
    %107 = arith.mulf %105, %106 : vector<8x128xf32>
    %108 = vector.broadcast %22 : vector<1x128xf32> to vector<8x128xf32>
    %109 = arith.addf %107, %108 : vector<8x128xf32>
    %110 = vector.extract_strided_slice %109 {offsets = [0, 0], sizes = [8, 32], strides = [1, 1]} : vector<8x128xf32> to vector<8x32xf32>
    %111 = vector.extract_strided_slice %109 {offsets = [0, 32], sizes = [8, 32], strides = [1, 1]} : vector<8x128xf32> to vector<8x32xf32>
    %112 = vector.extract_strided_slice %109 {offsets = [0, 64], sizes = [8, 32], strides = [1, 1]} : vector<8x128xf32> to vector<8x32xf32>
    %113 = vector.extract_strided_slice %109 {offsets = [0, 96], sizes = [8, 32], strides = [1, 1]} : vector<8x128xf32> to vector<8x32xf32>
    %114 = arith.mulf %111, %95 : vector<8x32xf32>
    %115 = arith.mulf %110, %112 : vector<8x32xf32>
    %116 = arith.addf %114, %115 : vector<8x32xf32>
    %117 = math.tanh %116 : vector<8x32xf32>
    %118 = arith.mulf %113, %117 : vector<8x32xf32>
    %c24 = arith.constant 24 : index
    %c0_37 = arith.constant 0 : index
    %119 = vector.load %arg10[%c24, %c0_37] : memref<64x64xf32, #tpu.memory_space<vmem>>, vector<8x32xf32>
    tpu.vector_store %arg10[%c24, %c0_37], %118 {strides = array<i32>} : memref<64x64xf32, #tpu.memory_space<vmem>>, vector<8x32xf32>,
    %120 = vector.extract_strided_slice %33 {offsets = [32, 0], sizes = [8, 128], strides = [1, 1]} : vector<64x128xf32> to vector<8x128xf32>
    %121 = arith.truncf %118 : vector<8x32xf32> to vector<8x32xbf16>
    %cst_38 = arith.constant dense<0.000000e+00> : vector<8x128xf32>
    %122 = tpu.matmul %121, %28, %cst_38 {dimension_numbers = #tpu.dot_dimension_numbers<[1], [0], [0], [1], [0, 0, 1, 1], [], []>} : vector<8x32xbf16>, vector<32x128xbf16>, vector<8x128xf32> -> vector<8x128xf32>
    %123 = arith.addf %120, %122 : vector<8x128xf32>
    %124 = vector.broadcast %19 : vector<1x128xf32> to vector<8x128xf32>
    %125 = arith.mulf %123, %124 : vector<8x128xf32>
    %126 = math.tanh %125 : vector<8x128xf32>
    %127 = vector.broadcast %19 : vector<1x128xf32> to vector<8x128xf32>
    %128 = arith.mulf %126, %127 : vector<8x128xf32>
    %129 = vector.broadcast %22 : vector<1x128xf32> to vector<8x128xf32>
    %130 = arith.addf %128, %129 : vector<8x128xf32>
    %131 = vector.extract_strided_slice %130 {offsets = [0, 0], sizes = [8, 32], strides = [1, 1]} : vector<8x128xf32> to vector<8x32xf32>
    %132 = vector.extract_strided_slice %130 {offsets = [0, 32], sizes = [8, 32], strides = [1, 1]} : vector<8x128xf32> to vector<8x32xf32>
    %133 = vector.extract_strided_slice %130 {offsets = [0, 64], sizes = [8, 32], strides = [1, 1]} : vector<8x128xf32> to vector<8x32xf32>
    %134 = vector.extract_strided_slice %130 {offsets = [0, 96], sizes = [8, 32], strides = [1, 1]} : vector<8x128xf32> to vector<8x32xf32>
    %135 = arith.mulf %132, %116 : vector<8x32xf32>
    %136 = arith.mulf %131, %133 : vector<8x32xf32>
    %137 = arith.addf %135, %136 : vector<8x32xf32>
    %138 = math.tanh %137 : vector<8x32xf32>
    %139 = arith.mulf %134, %138 : vector<8x32xf32>
    %c32 = arith.constant 32 : index
    %c0_39 = arith.constant 0 : index
    %140 = vector.load %arg10[%c32, %c0_39] : memref<64x64xf32, #tpu.memory_space<vmem>>, vector<8x32xf32>
    tpu.vector_store %arg10[%c32, %c0_39], %139 {strides = array<i32>} : memref<64x64xf32, #tpu.memory_space<vmem>>, vector<8x32xf32>,
    %141 = vector.extract_strided_slice %33 {offsets = [40, 0], sizes = [8, 128], strides = [1, 1]} : vector<64x128xf32> to vector<8x128xf32>
    %142 = arith.truncf %139 : vector<8x32xf32> to vector<8x32xbf16>
    %cst_40 = arith.constant dense<0.000000e+00> : vector<8x128xf32>
    %143 = tpu.matmul %142, %28, %cst_40 {dimension_numbers = #tpu.dot_dimension_numbers<[1], [0], [0], [1], [0, 0, 1, 1], [], []>} : vector<8x32xbf16>, vector<32x128xbf16>, vector<8x128xf32> -> vector<8x128xf32>
    %144 = arith.addf %141, %143 : vector<8x128xf32>
    %145 = vector.broadcast %19 : vector<1x128xf32> to vector<8x128xf32>
    %146 = arith.mulf %144, %145 : vector<8x128xf32>
    %147 = math.tanh %146 : vector<8x128xf32>
    %148 = vector.broadcast %19 : vector<1x128xf32> to vector<8x128xf32>
    %149 = arith.mulf %147, %148 : vector<8x128xf32>
    %150 = vector.broadcast %22 : vector<1x128xf32> to vector<8x128xf32>
    %151 = arith.addf %149, %150 : vector<8x128xf32>
    %152 = vector.extract_strided_slice %151 {offsets = [0, 0], sizes = [8, 32], strides = [1, 1]} : vector<8x128xf32> to vector<8x32xf32>
    %153 = vector.extract_strided_slice %151 {offsets = [0, 32], sizes = [8, 32], strides = [1, 1]} : vector<8x128xf32> to vector<8x32xf32>
    %154 = vector.extract_strided_slice %151 {offsets = [0, 64], sizes = [8, 32], strides = [1, 1]} : vector<8x128xf32> to vector<8x32xf32>
    %155 = vector.extract_strided_slice %151 {offsets = [0, 96], sizes = [8, 32], strides = [1, 1]} : vector<8x128xf32> to vector<8x32xf32>
    %156 = arith.mulf %153, %137 : vector<8x32xf32>
    %157 = arith.mulf %152, %154 : vector<8x32xf32>
    %158 = arith.addf %156, %157 : vector<8x32xf32>
    %159 = math.tanh %158 : vector<8x32xf32>
    %160 = arith.mulf %155, %159 : vector<8x32xf32>
    %c40 = arith.constant 40 : index
    %c0_41 = arith.constant 0 : index
    %161 = vector.load %arg10[%c40, %c0_41] : memref<64x64xf32, #tpu.memory_space<vmem>>, vector<8x32xf32>
    tpu.vector_store %arg10[%c40, %c0_41], %160 {strides = array<i32>} : memref<64x64xf32, #tpu.memory_space<vmem>>, vector<8x32xf32>,
    %162 = vector.extract_strided_slice %33 {offsets = [48, 0], sizes = [8, 128], strides = [1, 1]} : vector<64x128xf32> to vector<8x128xf32>
    %163 = arith.truncf %160 : vector<8x32xf32> to vector<8x32xbf16>
    %cst_42 = arith.constant dense<0.000000e+00> : vector<8x128xf32>
    %164 = tpu.matmul %163, %28, %cst_42 {dimension_numbers = #tpu.dot_dimension_numbers<[1], [0], [0], [1], [0, 0, 1, 1], [], []>} : vector<8x32xbf16>, vector<32x128xbf16>, vector<8x128xf32> -> vector<8x128xf32>
    %165 = arith.addf %162, %164 : vector<8x128xf32>
    %166 = vector.broadcast %19 : vector<1x128xf32> to vector<8x128xf32>
    %167 = arith.mulf %165, %166 : vector<8x128xf32>
    %168 = math.tanh %167 : vector<8x128xf32>
    %169 = vector.broadcast %19 : vector<1x128xf32> to vector<8x128xf32>
    %170 = arith.mulf %168, %169 : vector<8x128xf32>
    %171 = vector.broadcast %22 : vector<1x128xf32> to vector<8x128xf32>
    %172 = arith.addf %170, %171 : vector<8x128xf32>
    %173 = vector.extract_strided_slice %172 {offsets = [0, 0], sizes = [8, 32], strides = [1, 1]} : vector<8x128xf32> to vector<8x32xf32>
    %174 = vector.extract_strided_slice %172 {offsets = [0, 32], sizes = [8, 32], strides = [1, 1]} : vector<8x128xf32> to vector<8x32xf32>
    %175 = vector.extract_strided_slice %172 {offsets = [0, 64], sizes = [8, 32], strides = [1, 1]} : vector<8x128xf32> to vector<8x32xf32>
    %176 = vector.extract_strided_slice %172 {offsets = [0, 96], sizes = [8, 32], strides = [1, 1]} : vector<8x128xf32> to vector<8x32xf32>
    %177 = arith.mulf %174, %158 : vector<8x32xf32>
    %178 = arith.mulf %173, %175 : vector<8x32xf32>
    %179 = arith.addf %177, %178 : vector<8x32xf32>
    %180 = math.tanh %179 : vector<8x32xf32>
    %181 = arith.mulf %176, %180 : vector<8x32xf32>
    %c48 = arith.constant 48 : index
    %c0_43 = arith.constant 0 : index
    %182 = vector.load %arg10[%c48, %c0_43] : memref<64x64xf32, #tpu.memory_space<vmem>>, vector<8x32xf32>
    tpu.vector_store %arg10[%c48, %c0_43], %181 {strides = array<i32>} : memref<64x64xf32, #tpu.memory_space<vmem>>, vector<8x32xf32>,
    %183 = vector.extract_strided_slice %33 {offsets = [56, 0], sizes = [8, 128], strides = [1, 1]} : vector<64x128xf32> to vector<8x128xf32>
    %184 = arith.truncf %181 : vector<8x32xf32> to vector<8x32xbf16>
    %cst_44 = arith.constant dense<0.000000e+00> : vector<8x128xf32>
    %185 = tpu.matmul %184, %28, %cst_44 {dimension_numbers = #tpu.dot_dimension_numbers<[1], [0], [0], [1], [0, 0, 1, 1], [], []>} : vector<8x32xbf16>, vector<32x128xbf16>, vector<8x128xf32> -> vector<8x128xf32>
    %186 = arith.addf %183, %185 : vector<8x128xf32>
    %187 = vector.broadcast %19 : vector<1x128xf32> to vector<8x128xf32>
    %188 = arith.mulf %186, %187 : vector<8x128xf32>
    %189 = math.tanh %188 : vector<8x128xf32>
    %190 = vector.broadcast %19 : vector<1x128xf32> to vector<8x128xf32>
    %191 = arith.mulf %189, %190 : vector<8x128xf32>
    %192 = vector.broadcast %22 : vector<1x128xf32> to vector<8x128xf32>
    %193 = arith.addf %191, %192 : vector<8x128xf32>
    %194 = vector.extract_strided_slice %193 {offsets = [0, 0], sizes = [8, 32], strides = [1, 1]} : vector<8x128xf32> to vector<8x32xf32>
    %195 = vector.extract_strided_slice %193 {offsets = [0, 32], sizes = [8, 32], strides = [1, 1]} : vector<8x128xf32> to vector<8x32xf32>
    %196 = vector.extract_strided_slice %193 {offsets = [0, 64], sizes = [8, 32], strides = [1, 1]} : vector<8x128xf32> to vector<8x32xf32>
    %197 = vector.extract_strided_slice %193 {offsets = [0, 96], sizes = [8, 32], strides = [1, 1]} : vector<8x128xf32> to vector<8x32xf32>
    %198 = arith.mulf %195, %179 : vector<8x32xf32>
    %199 = arith.mulf %194, %196 : vector<8x32xf32>
    %200 = arith.addf %198, %199 : vector<8x32xf32>
    %201 = math.tanh %200 : vector<8x32xf32>
    %202 = arith.mulf %197, %201 : vector<8x32xf32>
    %c56 = arith.constant 56 : index
    %c0_45 = arith.constant 0 : index
    %203 = vector.load %arg10[%c56, %c0_45] : memref<64x64xf32, #tpu.memory_space<vmem>>, vector<8x32xf32>
    tpu.vector_store %arg10[%c56, %c0_45], %202 {strides = array<i32>} : memref<64x64xf32, #tpu.memory_space<vmem>>, vector<8x32xf32>,
    %c0_46 = arith.constant 0 : index
    %c1 = arith.constant 1 : index
    %c0_47 = arith.constant 0 : index
    %c0_48 = arith.constant 0 : index
    %204 = vector.load %arg3[%c0_46, %c1, %c0_47, %c0_48] : memref<2x2x64x128xbf16, #tpu.memory_space<vmem>>, vector<1x1x64x128xbf16>
    %205 = vector.shape_cast %204 : vector<1x1x64x128xbf16> to vector<64x128xbf16>
    %c0_49 = arith.constant 0 : index
    %c1_50 = arith.constant 1 : index
    %c0_51 = arith.constant 0 : index
    %c0_52 = arith.constant 0 : index
    %206 = vector.load %arg4[%c0_49, %c1_50, %c0_51, %c0_52] : memref<2x2x32x128xbf16, #tpu.memory_space<vmem>>, vector<1x1x32x128xbf16>
    %207 = vector.shape_cast %206 : vector<1x1x32x128xbf16> to vector<32x128xbf16>
    %c0_53 = arith.constant 0 : index
    %c1_54 = arith.constant 1 : index
    %c0_55 = arith.constant 0 : index
    %c0_56 = arith.constant 0 : index
    %208 = vector.load %arg5[%c0_53, %c1_54, %c0_55, %c0_56] : memref<2x2x1x128xf32, #tpu.memory_space<vmem>>, vector<1x1x1x128xf32>
    %209 = vector.shape_cast %208 : vector<1x1x1x128xf32> to vector<1x128xf32>
    %cst_57 = arith.constant dense<0.000000e+00> : vector<64x128xf32>
    %210 = tpu.matmul %24, %205, %cst_57 {dimension_numbers = #tpu.dot_dimension_numbers<[1], [0], [0], [1], [0, 0, 1, 1], [], []>} : vector<64x64xbf16>, vector<64x128xbf16>, vector<64x128xf32> -> vector<64x128xf32>
    %211 = vector.broadcast %209 : vector<1x128xf32> to vector<64x128xf32>
    %212 = arith.addf %210, %211 : vector<64x128xf32>
    %cst_58 = arith.constant 0.000000e+00 : f32
    %213 = vector.broadcast %cst_58 : f32 to vector<8x32xf32>
    %cst_59 = arith.constant 0.000000e+00 : f32
    %214 = vector.broadcast %cst_59 : f32 to vector<8x32xf32>
    %215 = vector.extract_strided_slice %212 {offsets = [56, 0], sizes = [8, 128], strides = [1, 1]} : vector<64x128xf32> to vector<8x128xf32>
    %216 = arith.truncf %213 : vector<8x32xf32> to vector<8x32xbf16>
    %cst_60 = arith.constant dense<0.000000e+00> : vector<8x128xf32>
    %217 = tpu.matmul %216, %207, %cst_60 {dimension_numbers = #tpu.dot_dimension_numbers<[1], [0], [0], [1], [0, 0, 1, 1], [], []>} : vector<8x32xbf16>, vector<32x128xbf16>, vector<8x128xf32> -> vector<8x128xf32>
    %218 = arith.addf %215, %217 : vector<8x128xf32>
    %219 = vector.broadcast %19 : vector<1x128xf32> to vector<8x128xf32>
    %220 = arith.mulf %218, %219 : vector<8x128xf32>
    %221 = math.tanh %220 : vector<8x128xf32>
    %222 = vector.broadcast %19 : vector<1x128xf32> to vector<8x128xf32>
    %223 = arith.mulf %221, %222 : vector<8x128xf32>
    %224 = vector.broadcast %22 : vector<1x128xf32> to vector<8x128xf32>
    %225 = arith.addf %223, %224 : vector<8x128xf32>
    %226 = vector.extract_strided_slice %225 {offsets = [0, 0], sizes = [8, 32], strides = [1, 1]} : vector<8x128xf32> to vector<8x32xf32>
    %227 = vector.extract_strided_slice %225 {offsets = [0, 32], sizes = [8, 32], strides = [1, 1]} : vector<8x128xf32> to vector<8x32xf32>
    %228 = vector.extract_strided_slice %225 {offsets = [0, 64], sizes = [8, 32], strides = [1, 1]} : vector<8x128xf32> to vector<8x32xf32>
    %229 = vector.extract_strided_slice %225 {offsets = [0, 96], sizes = [8, 32], strides = [1, 1]} : vector<8x128xf32> to vector<8x32xf32>
    %230 = arith.mulf %227, %214 : vector<8x32xf32>
    %231 = arith.mulf %226, %228 : vector<8x32xf32>
    %232 = arith.addf %230, %231 : vector<8x32xf32>
    %233 = math.tanh %232 : vector<8x32xf32>
    %234 = arith.mulf %229, %233 : vector<8x32xf32>
    %c56_61 = arith.constant 56 : index
    %c32_62 = arith.constant 32 : index
    %235 = vector.load %arg10[%c56_61, %c32_62] : memref<64x64xf32, #tpu.memory_space<vmem>>, vector<8x32xf32>
    tpu.vector_store %arg10[%c56_61, %c32_62], %234 {strides = array<i32>} : memref<64x64xf32, #tpu.memory_space<vmem>>, vector<8x32xf32>,
    %236 = vector.extract_strided_slice %212 {offsets = [48, 0], sizes = [8, 128], strides = [1, 1]} : vector<64x128xf32> to vector<8x128xf32>
    %237 = arith.truncf %234 : vector<8x32xf32> to vector<8x32xbf16>
    %cst_63 = arith.constant dense<0.000000e+00> : vector<8x128xf32>
    %238 = tpu.matmul %237, %207, %cst_63 {dimension_numbers = #tpu.dot_dimension_numbers<[1], [0], [0], [1], [0, 0, 1, 1], [], []>} : vector<8x32xbf16>, vector<32x128xbf16>, vector<8x128xf32> -> vector<8x128xf32>
    %239 = arith.addf %236, %238 : vector<8x128xf32>
    %240 = vector.broadcast %19 : vector<1x128xf32> to vector<8x128xf32>
    %241 = arith.mulf %239, %240 : vector<8x128xf32>
    %242 = math.tanh %241 : vector<8x128xf32>
    %243 = vector.broadcast %19 : vector<1x128xf32> to vector<8x128xf32>
    %244 = arith.mulf %242, %243 : vector<8x128xf32>
    %245 = vector.broadcast %22 : vector<1x128xf32> to vector<8x128xf32>
    %246 = arith.addf %244, %245 : vector<8x128xf32>
    %247 = vector.extract_strided_slice %246 {offsets = [0, 0], sizes = [8, 32], strides = [1, 1]} : vector<8x128xf32> to vector<8x32xf32>
    %248 = vector.extract_strided_slice %246 {offsets = [0, 32], sizes = [8, 32], strides = [1, 1]} : vector<8x128xf32> to vector<8x32xf32>
    %249 = vector.extract_strided_slice %246 {offsets = [0, 64], sizes = [8, 32], strides = [1, 1]} : vector<8x128xf32> to vector<8x32xf32>
    %250 = vector.extract_strided_slice %246 {offsets = [0, 96], sizes = [8, 32], strides = [1, 1]} : vector<8x128xf32> to vector<8x32xf32>
    %251 = arith.mulf %248, %232 : vector<8x32xf32>
    %252 = arith.mulf %247, %249 : vector<8x32xf32>
    %253 = arith.addf %251, %252 : vector<8x32xf32>
    %254 = math.tanh %253 : vector<8x32xf32>
    %255 = arith.mulf %250, %254 : vector<8x32xf32>
    %c48_64 = arith.constant 48 : index
    %c32_65 = arith.constant 32 : index
    %256 = vector.load %arg10[%c48_64, %c32_65] : memref<64x64xf32, #tpu.memory_space<vmem>>, vector<8x32xf32>
    tpu.vector_store %arg10[%c48_64, %c32_65], %255 {strides = array<i32>} : memref<64x64xf32, #tpu.memory_space<vmem>>, vector<8x32xf32>,
    %257 = vector.extract_strided_slice %212 {offsets = [40, 0], sizes = [8, 128], strides = [1, 1]} : vector<64x128xf32> to vector<8x128xf32>
    %258 = arith.truncf %255 : vector<8x32xf32> to vector<8x32xbf16>
    %cst_66 = arith.constant dense<0.000000e+00> : vector<8x128xf32>
    %259 = tpu.matmul %258, %207, %cst_66 {dimension_numbers = #tpu.dot_dimension_numbers<[1], [0], [0], [1], [0, 0, 1, 1], [], []>} : vector<8x32xbf16>, vector<32x128xbf16>, vector<8x128xf32> -> vector<8x128xf32>
    %260 = arith.addf %257, %259 : vector<8x128xf32>
    %261 = vector.broadcast %19 : vector<1x128xf32> to vector<8x128xf32>
    %262 = arith.mulf %260, %261 : vector<8x128xf32>
    %263 = math.tanh %262 : vector<8x128xf32>
    %264 = vector.broadcast %19 : vector<1x128xf32> to vector<8x128xf32>
    %265 = arith.mulf %263, %264 : vector<8x128xf32>
    %266 = vector.broadcast %22 : vector<1x128xf32> to vector<8x128xf32>
    %267 = arith.addf %265, %266 : vector<8x128xf32>
    %268 = vector.extract_strided_slice %267 {offsets = [0, 0], sizes = [8, 32], strides = [1, 1]} : vector<8x128xf32> to vector<8x32xf32>
    %269 = vector.extract_strided_slice %267 {offsets = [0, 32], sizes = [8, 32], strides = [1, 1]} : vector<8x128xf32> to vector<8x32xf32>
    %270 = vector.extract_strided_slice %267 {offsets = [0, 64], sizes = [8, 32], strides = [1, 1]} : vector<8x128xf32> to vector<8x32xf32>
    %271 = vector.extract_strided_slice %267 {offsets = [0, 96], sizes = [8, 32], strides = [1, 1]} : vector<8x128xf32> to vector<8x32xf32>
    %272 = arith.mulf %269, %253 : vector<8x32xf32>
    %273 = arith.mulf %268, %270 : vector<8x32xf32>
    %274 = arith.addf %272, %273 : vector<8x32xf32>
    %275 = math.tanh %274 : vector<8x32xf32>
    %276 = arith.mulf %271, %275 : vector<8x32xf32>
    %c40_67 = arith.constant 40 : index
    %c32_68 = arith.constant 32 : index
    %277 = vector.load %arg10[%c40_67, %c32_68] : memref<64x64xf32, #tpu.memory_space<vmem>>, vector<8x32xf32>
    tpu.vector_store %arg10[%c40_67, %c32_68], %276 {strides = array<i32>} : memref<64x64xf32, #tpu.memory_space<vmem>>, vector<8x32xf32>,
    %278 = vector.extract_strided_slice %212 {offsets = [32, 0], sizes = [8, 128], strides = [1, 1]} : vector<64x128xf32> to vector<8x128xf32>
    %279 = arith.truncf %276 : vector<8x32xf32> to vector<8x32xbf16>
    %cst_69 = arith.constant dense<0.000000e+00> : vector<8x128xf32>
    %280 = tpu.matmul %279, %207, %cst_69 {dimension_numbers = #tpu.dot_dimension_numbers<[1], [0], [0], [1], [0, 0, 1, 1], [], []>} : vector<8x32xbf16>, vector<32x128xbf16>, vector<8x128xf32> -> vector<8x128xf32>
    %281 = arith.addf %278, %280 : vector<8x128xf32>
    %282 = vector.broadcast %19 : vector<1x128xf32> to vector<8x128xf32>
    %283 = arith.mulf %281, %282 : vector<8x128xf32>
    %284 = math.tanh %283 : vector<8x128xf32>
    %285 = vector.broadcast %19 : vector<1x128xf32> to vector<8x128xf32>
    %286 = arith.mulf %284, %285 : vector<8x128xf32>
    %287 = vector.broadcast %22 : vector<1x128xf32> to vector<8x128xf32>
    %288 = arith.addf %286, %287 : vector<8x128xf32>
    %289 = vector.extract_strided_slice %288 {offsets = [0, 0], sizes = [8, 32], strides = [1, 1]} : vector<8x128xf32> to vector<8x32xf32>
    %290 = vector.extract_strided_slice %288 {offsets = [0, 32], sizes = [8, 32], strides = [1, 1]} : vector<8x128xf32> to vector<8x32xf32>
    %291 = vector.extract_strided_slice %288 {offsets = [0, 64], sizes = [8, 32], strides = [1, 1]} : vector<8x128xf32> to vector<8x32xf32>
    %292 = vector.extract_strided_slice %288 {offsets = [0, 96], sizes = [8, 32], strides = [1, 1]} : vector<8x128xf32> to vector<8x32xf32>
    %293 = arith.mulf %290, %274 : vector<8x32xf32>
    %294 = arith.mulf %289, %291 : vector<8x32xf32>
    %295 = arith.addf %293, %294 : vector<8x32xf32>
    %296 = math.tanh %295 : vector<8x32xf32>
    %297 = arith.mulf %292, %296 : vector<8x32xf32>
    %c32_70 = arith.constant 32 : index
    %c32_71 = arith.constant 32 : index
    %298 = vector.load %arg10[%c32_70, %c32_71] : memref<64x64xf32, #tpu.memory_space<vmem>>, vector<8x32xf32>
    tpu.vector_store %arg10[%c32_70, %c32_71], %297 {strides = array<i32>} : memref<64x64xf32, #tpu.memory_space<vmem>>, vector<8x32xf32>,
    %299 = vector.extract_strided_slice %212 {offsets = [24, 0], sizes = [8, 128], strides = [1, 1]} : vector<64x128xf32> to vector<8x128xf32>
    %300 = arith.truncf %297 : vector<8x32xf32> to vector<8x32xbf16>
    %cst_72 = arith.constant dense<0.000000e+00> : vector<8x128xf32>
    %301 = tpu.matmul %300, %207, %cst_72 {dimension_numbers = #tpu.dot_dimension_numbers<[1], [0], [0], [1], [0, 0, 1, 1], [], []>} : vector<8x32xbf16>, vector<32x128xbf16>, vector<8x128xf32> -> vector<8x128xf32>
    %302 = arith.addf %299, %301 : vector<8x128xf32>
    %303 = vector.broadcast %19 : vector<1x128xf32> to vector<8x128xf32>
    %304 = arith.mulf %302, %303 : vector<8x128xf32>
    %305 = math.tanh %304 : vector<8x128xf32>
    %306 = vector.broadcast %19 : vector<1x128xf32> to vector<8x128xf32>
    %307 = arith.mulf %305, %306 : vector<8x128xf32>
    %308 = vector.broadcast %22 : vector<1x128xf32> to vector<8x128xf32>
    %309 = arith.addf %307, %308 : vector<8x128xf32>
    %310 = vector.extract_strided_slice %309 {offsets = [0, 0], sizes = [8, 32], strides = [1, 1]} : vector<8x128xf32> to vector<8x32xf32>
    %311 = vector.extract_strided_slice %309 {offsets = [0, 32], sizes = [8, 32], strides = [1, 1]} : vector<8x128xf32> to vector<8x32xf32>
    %312 = vector.extract_strided_slice %309 {offsets = [0, 64], sizes = [8, 32], strides = [1, 1]} : vector<8x128xf32> to vector<8x32xf32>
    %313 = vector.extract_strided_slice %309 {offsets = [0, 96], sizes = [8, 32], strides = [1, 1]} : vector<8x128xf32> to vector<8x32xf32>
    %314 = arith.mulf %311, %295 : vector<8x32xf32>
    %315 = arith.mulf %310, %312 : vector<8x32xf32>
    %316 = arith.addf %314, %315 : vector<8x32xf32>
    %317 = math.tanh %316 : vector<8x32xf32>
    %318 = arith.mulf %313, %317 : vector<8x32xf32>
    %c24_73 = arith.constant 24 : index
    %c32_74 = arith.constant 32 : index
    %319 = vector.load %arg10[%c24_73, %c32_74] : memref<64x64xf32, #tpu.memory_space<vmem>>, vector<8x32xf32>
    tpu.vector_store %arg10[%c24_73, %c32_74], %318 {strides = array<i32>} : memref<64x64xf32, #tpu.memory_space<vmem>>, vector<8x32xf32>,
    %320 = vector.extract_strided_slice %212 {offsets = [16, 0], sizes = [8, 128], strides = [1, 1]} : vector<64x128xf32> to vector<8x128xf32>
    %321 = arith.truncf %318 : vector<8x32xf32> to vector<8x32xbf16>
    %cst_75 = arith.constant dense<0.000000e+00> : vector<8x128xf32>
    %322 = tpu.matmul %321, %207, %cst_75 {dimension_numbers = #tpu.dot_dimension_numbers<[1], [0], [0], [1], [0, 0, 1, 1], [], []>} : vector<8x32xbf16>, vector<32x128xbf16>, vector<8x128xf32> -> vector<8x128xf32>
    %323 = arith.addf %320, %322 : vector<8x128xf32>
    %324 = vector.broadcast %19 : vector<1x128xf32> to vector<8x128xf32>
    %325 = arith.mulf %323, %324 : vector<8x128xf32>
    %326 = math.tanh %325 : vector<8x128xf32>
    %327 = vector.broadcast %19 : vector<1x128xf32> to vector<8x128xf32>
    %328 = arith.mulf %326, %327 : vector<8x128xf32>
    %329 = vector.broadcast %22 : vector<1x128xf32> to vector<8x128xf32>
    %330 = arith.addf %328, %329 : vector<8x128xf32>
    %331 = vector.extract_strided_slice %330 {offsets = [0, 0], sizes = [8, 32], strides = [1, 1]} : vector<8x128xf32> to vector<8x32xf32>
    %332 = vector.extract_strided_slice %330 {offsets = [0, 32], sizes = [8, 32], strides = [1, 1]} : vector<8x128xf32> to vector<8x32xf32>
    %333 = vector.extract_strided_slice %330 {offsets = [0, 64], sizes = [8, 32], strides = [1, 1]} : vector<8x128xf32> to vector<8x32xf32>
    %334 = vector.extract_strided_slice %330 {offsets = [0, 96], sizes = [8, 32], strides = [1, 1]} : vector<8x128xf32> to vector<8x32xf32>
    %335 = arith.mulf %332, %316 : vector<8x32xf32>
    %336 = arith.mulf %331, %333 : vector<8x32xf32>
    %337 = arith.addf %335, %336 : vector<8x32xf32>
    %338 = math.tanh %337 : vector<8x32xf32>
    %339 = arith.mulf %334, %338 : vector<8x32xf32>
    %c16_76 = arith.constant 16 : index
    %c32_77 = arith.constant 32 : index
    %340 = vector.load %arg10[%c16_76, %c32_77] : memref<64x64xf32, #tpu.memory_space<vmem>>, vector<8x32xf32>
    tpu.vector_store %arg10[%c16_76, %c32_77], %339 {strides = array<i32>} : memref<64x64xf32, #tpu.memory_space<vmem>>, vector<8x32xf32>,
    %341 = vector.extract_strided_slice %212 {offsets = [8, 0], sizes = [8, 128], strides = [1, 1]} : vector<64x128xf32> to vector<8x128xf32>
    %342 = arith.truncf %339 : vector<8x32xf32> to vector<8x32xbf16>
    %cst_78 = arith.constant dense<0.000000e+00> : vector<8x128xf32>
    %343 = tpu.matmul %342, %207, %cst_78 {dimension_numbers = #tpu.dot_dimension_numbers<[1], [0], [0], [1], [0, 0, 1, 1], [], []>} : vector<8x32xbf16>, vector<32x128xbf16>, vector<8x128xf32> -> vector<8x128xf32>
    %344 = arith.addf %341, %343 : vector<8x128xf32>
    %345 = vector.broadcast %19 : vector<1x128xf32> to vector<8x128xf32>
    %346 = arith.mulf %344, %345 : vector<8x128xf32>
    %347 = math.tanh %346 : vector<8x128xf32>
    %348 = vector.broadcast %19 : vector<1x128xf32> to vector<8x128xf32>
    %349 = arith.mulf %347, %348 : vector<8x128xf32>
    %350 = vector.broadcast %22 : vector<1x128xf32> to vector<8x128xf32>
    %351 = arith.addf %349, %350 : vector<8x128xf32>
    %352 = vector.extract_strided_slice %351 {offsets = [0, 0], sizes = [8, 32], strides = [1, 1]} : vector<8x128xf32> to vector<8x32xf32>
    %353 = vector.extract_strided_slice %351 {offsets = [0, 32], sizes = [8, 32], strides = [1, 1]} : vector<8x128xf32> to vector<8x32xf32>
    %354 = vector.extract_strided_slice %351 {offsets = [0, 64], sizes = [8, 32], strides = [1, 1]} : vector<8x128xf32> to vector<8x32xf32>
    %355 = vector.extract_strided_slice %351 {offsets = [0, 96], sizes = [8, 32], strides = [1, 1]} : vector<8x128xf32> to vector<8x32xf32>
    %356 = arith.mulf %353, %337 : vector<8x32xf32>
    %357 = arith.mulf %352, %354 : vector<8x32xf32>
    %358 = arith.addf %356, %357 : vector<8x32xf32>
    %359 = math.tanh %358 : vector<8x32xf32>
    %360 = arith.mulf %355, %359 : vector<8x32xf32>
    %c8_79 = arith.constant 8 : index
    %c32_80 = arith.constant 32 : index
    %361 = vector.load %arg10[%c8_79, %c32_80] : memref<64x64xf32, #tpu.memory_space<vmem>>, vector<8x32xf32>
    tpu.vector_store %arg10[%c8_79, %c32_80], %360 {strides = array<i32>} : memref<64x64xf32, #tpu.memory_space<vmem>>, vector<8x32xf32>,
    %362 = vector.extract_strided_slice %212 {offsets = [0, 0], sizes = [8, 128], strides = [1, 1]} : vector<64x128xf32> to vector<8x128xf32>
    %363 = arith.truncf %360 : vector<8x32xf32> to vector<8x32xbf16>
    %cst_81 = arith.constant dense<0.000000e+00> : vector<8x128xf32>
    %364 = tpu.matmul %363, %207, %cst_81 {dimension_numbers = #tpu.dot_dimension_numbers<[1], [0], [0], [1], [0, 0, 1, 1], [], []>} : vector<8x32xbf16>, vector<32x128xbf16>, vector<8x128xf32> -> vector<8x128xf32>
    %365 = arith.addf %362, %364 : vector<8x128xf32>
    %366 = vector.broadcast %19 : vector<1x128xf32> to vector<8x128xf32>
    %367 = arith.mulf %365, %366 : vector<8x128xf32>
    %368 = math.tanh %367 : vector<8x128xf32>
    %369 = vector.broadcast %19 : vector<1x128xf32> to vector<8x128xf32>
    %370 = arith.mulf %368, %369 : vector<8x128xf32>
    %371 = vector.broadcast %22 : vector<1x128xf32> to vector<8x128xf32>
    %372 = arith.addf %370, %371 : vector<8x128xf32>
    %373 = vector.extract_strided_slice %372 {offsets = [0, 0], sizes = [8, 32], strides = [1, 1]} : vector<8x128xf32> to vector<8x32xf32>
    %374 = vector.extract_strided_slice %372 {offsets = [0, 32], sizes = [8, 32], strides = [1, 1]} : vector<8x128xf32> to vector<8x32xf32>
    %375 = vector.extract_strided_slice %372 {offsets = [0, 64], sizes = [8, 32], strides = [1, 1]} : vector<8x128xf32> to vector<8x32xf32>
    %376 = vector.extract_strided_slice %372 {offsets = [0, 96], sizes = [8, 32], strides = [1, 1]} : vector<8x128xf32> to vector<8x32xf32>
    %377 = arith.mulf %374, %358 : vector<8x32xf32>
    %378 = arith.mulf %373, %375 : vector<8x32xf32>
    %379 = arith.addf %377, %378 : vector<8x32xf32>
    %380 = math.tanh %379 : vector<8x32xf32>
    %381 = arith.mulf %376, %380 : vector<8x32xf32>
    %c0_82 = arith.constant 0 : index
    %c32_83 = arith.constant 32 : index
    %382 = vector.load %arg10[%c0_82, %c32_83] : memref<64x64xf32, #tpu.memory_space<vmem>>, vector<8x32xf32>
    tpu.vector_store %arg10[%c0_82, %c32_83], %381 {strides = array<i32>} : memref<64x64xf32, #tpu.memory_space<vmem>>, vector<8x32xf32>,
    %c0_84 = arith.constant 0 : index
    %c0_85 = arith.constant 0 : index
    %383 = vector.load %arg10[%c0_84, %c0_85] : memref<64x64xf32, #tpu.memory_space<vmem>>, vector<64x64xf32>
    %384 = arith.truncf %383 : vector<64x64xf32> to vector<64x64xbf16>
    %c1_86 = arith.constant 1 : index
    %c0_87 = arith.constant 0 : index
    %c0_88 = arith.constant 0 : index
    %c0_89 = arith.constant 0 : index
    %385 = vector.load %arg3[%c1_86, %c0_87, %c0_88, %c0_89] : memref<2x2x64x128xbf16, #tpu.memory_space<vmem>>, vector<1x1x64x128xbf16>
    %386 = vector.shape_cast %385 : vector<1x1x64x128xbf16> to vector<64x128xbf16>
    %c1_90 = arith.constant 1 : index
    %c0_91 = arith.constant 0 : index
    %c0_92 = arith.constant 0 : index
    %c0_93 = arith.constant 0 : index
    %387 = vector.load %arg4[%c1_90, %c0_91, %c0_92, %c0_93] : memref<2x2x32x128xbf16, #tpu.memory_space<vmem>>, vector<1x1x32x128xbf16>
    %388 = vector.shape_cast %387 : vector<1x1x32x128xbf16> to vector<32x128xbf16>
    %c1_94 = arith.constant 1 : index
    %c0_95 = arith.constant 0 : index
    %c0_96 = arith.constant 0 : index
    %c0_97 = arith.constant 0 : index
    %389 = vector.load %arg5[%c1_94, %c0_95, %c0_96, %c0_97] : memref<2x2x1x128xf32, #tpu.memory_space<vmem>>, vector<1x1x1x128xf32>
    %390 = vector.shape_cast %389 : vector<1x1x1x128xf32> to vector<1x128xf32>
    %cst_98 = arith.constant dense<0.000000e+00> : vector<64x128xf32>
    %391 = tpu.matmul %384, %386, %cst_98 {dimension_numbers = #tpu.dot_dimension_numbers<[1], [0], [0], [1], [0, 0, 1, 1], [], []>} : vector<64x64xbf16>, vector<64x128xbf16>, vector<64x128xf32> -> vector<64x128xf32>
    %392 = vector.broadcast %390 : vector<1x128xf32> to vector<64x128xf32>
    %393 = arith.addf %391, %392 : vector<64x128xf32>
    %cst_99 = arith.constant 0.000000e+00 : f32
    %394 = vector.broadcast %cst_99 : f32 to vector<8x32xf32>
    %cst_100 = arith.constant 0.000000e+00 : f32
    %395 = vector.broadcast %cst_100 : f32 to vector<8x32xf32>
    %396 = vector.extract_strided_slice %393 {offsets = [0, 0], sizes = [8, 128], strides = [1, 1]} : vector<64x128xf32> to vector<8x128xf32>
    %397 = arith.truncf %394 : vector<8x32xf32> to vector<8x32xbf16>
    %cst_101 = arith.constant dense<0.000000e+00> : vector<8x128xf32>
    %398 = tpu.matmul %397, %388, %cst_101 {dimension_numbers = #tpu.dot_dimension_numbers<[1], [0], [0], [1], [0, 0, 1, 1], [], []>} : vector<8x32xbf16>, vector<32x128xbf16>, vector<8x128xf32> -> vector<8x128xf32>
    %399 = arith.addf %396, %398 : vector<8x128xf32>
    %400 = vector.broadcast %19 : vector<1x128xf32> to vector<8x128xf32>
    %401 = arith.mulf %399, %400 : vector<8x128xf32>
    %402 = math.tanh %401 : vector<8x128xf32>
    %403 = vector.broadcast %19 : vector<1x128xf32> to vector<8x128xf32>
    %404 = arith.mulf %402, %403 : vector<8x128xf32>
    %405 = vector.broadcast %22 : vector<1x128xf32> to vector<8x128xf32>
    %406 = arith.addf %404, %405 : vector<8x128xf32>
    %407 = vector.extract_strided_slice %406 {offsets = [0, 0], sizes = [8, 32], strides = [1, 1]} : vector<8x128xf32> to vector<8x32xf32>
    %408 = vector.extract_strided_slice %406 {offsets = [0, 32], sizes = [8, 32], strides = [1, 1]} : vector<8x128xf32> to vector<8x32xf32>
    %409 = vector.extract_strided_slice %406 {offsets = [0, 64], sizes = [8, 32], strides = [1, 1]} : vector<8x128xf32> to vector<8x32xf32>
    %410 = vector.extract_strided_slice %406 {offsets = [0, 96], sizes = [8, 32], strides = [1, 1]} : vector<8x128xf32> to vector<8x32xf32>
    %411 = arith.mulf %408, %395 : vector<8x32xf32>
    %412 = arith.mulf %407, %409 : vector<8x32xf32>
    %413 = arith.addf %411, %412 : vector<8x32xf32>
    %414 = math.tanh %413 : vector<8x32xf32>
    %415 = arith.mulf %410, %414 : vector<8x32xf32>
    %416 = vector.extract_strided_slice %393 {offsets = [8, 0], sizes = [8, 128], strides = [1, 1]} : vector<64x128xf32> to vector<8x128xf32>
    %417 = arith.truncf %415 : vector<8x32xf32> to vector<8x32xbf16>
    %cst_102 = arith.constant dense<0.000000e+00> : vector<8x128xf32>
    %418 = tpu.matmul %417, %388, %cst_102 {dimension_numbers = #tpu.dot_dimension_numbers<[1], [0], [0], [1], [0, 0, 1, 1], [], []>} : vector<8x32xbf16>, vector<32x128xbf16>, vector<8x128xf32> -> vector<8x128xf32>
    %419 = arith.addf %416, %418 : vector<8x128xf32>
    %420 = vector.broadcast %19 : vector<1x128xf32> to vector<8x128xf32>
    %421 = arith.mulf %419, %420 : vector<8x128xf32>
    %422 = math.tanh %421 : vector<8x128xf32>
    %423 = vector.broadcast %19 : vector<1x128xf32> to vector<8x128xf32>
    %424 = arith.mulf %422, %423 : vector<8x128xf32>
    %425 = vector.broadcast %22 : vector<1x128xf32> to vector<8x128xf32>
    %426 = arith.addf %424, %425 : vector<8x128xf32>
    %427 = vector.extract_strided_slice %426 {offsets = [0, 0], sizes = [8, 32], strides = [1, 1]} : vector<8x128xf32> to vector<8x32xf32>
    %428 = vector.extract_strided_slice %426 {offsets = [0, 32], sizes = [8, 32], strides = [1, 1]} : vector<8x128xf32> to vector<8x32xf32>
    %429 = vector.extract_strided_slice %426 {offsets = [0, 64], sizes = [8, 32], strides = [1, 1]} : vector<8x128xf32> to vector<8x32xf32>
    %430 = vector.extract_strided_slice %426 {offsets = [0, 96], sizes = [8, 32], strides = [1, 1]} : vector<8x128xf32> to vector<8x32xf32>
    %431 = arith.mulf %428, %413 : vector<8x32xf32>
    %432 = arith.mulf %427, %429 : vector<8x32xf32>
    %433 = arith.addf %431, %432 : vector<8x32xf32>
    %434 = math.tanh %433 : vector<8x32xf32>
    %435 = arith.mulf %430, %434 : vector<8x32xf32>
    %436 = vector.extract_strided_slice %393 {offsets = [16, 0], sizes = [8, 128], strides = [1, 1]} : vector<64x128xf32> to vector<8x128xf32>
    %437 = arith.truncf %435 : vector<8x32xf32> to vector<8x32xbf16>
    %cst_103 = arith.constant dense<0.000000e+00> : vector<8x128xf32>
    %438 = tpu.matmul %437, %388, %cst_103 {dimension_numbers = #tpu.dot_dimension_numbers<[1], [0], [0], [1], [0, 0, 1, 1], [], []>} : vector<8x32xbf16>, vector<32x128xbf16>, vector<8x128xf32> -> vector<8x128xf32>
    %439 = arith.addf %436, %438 : vector<8x128xf32>
    %440 = vector.broadcast %19 : vector<1x128xf32> to vector<8x128xf32>
    %441 = arith.mulf %439, %440 : vector<8x128xf32>
    %442 = math.tanh %441 : vector<8x128xf32>
    %443 = vector.broadcast %19 : vector<1x128xf32> to vector<8x128xf32>
    %444 = arith.mulf %442, %443 : vector<8x128xf32>
    %445 = vector.broadcast %22 : vector<1x128xf32> to vector<8x128xf32>
    %446 = arith.addf %444, %445 : vector<8x128xf32>
    %447 = vector.extract_strided_slice %446 {offsets = [0, 0], sizes = [8, 32], strides = [1, 1]} : vector<8x128xf32> to vector<8x32xf32>
    %448 = vector.extract_strided_slice %446 {offsets = [0, 32], sizes = [8, 32], strides = [1, 1]} : vector<8x128xf32> to vector<8x32xf32>
    %449 = vector.extract_strided_slice %446 {offsets = [0, 64], sizes = [8, 32], strides = [1, 1]} : vector<8x128xf32> to vector<8x32xf32>
    %450 = vector.extract_strided_slice %446 {offsets = [0, 96], sizes = [8, 32], strides = [1, 1]} : vector<8x128xf32> to vector<8x32xf32>
    %451 = arith.mulf %448, %433 : vector<8x32xf32>
    %452 = arith.mulf %447, %449 : vector<8x32xf32>
    %453 = arith.addf %451, %452 : vector<8x32xf32>
    %454 = math.tanh %453 : vector<8x32xf32>
    %455 = arith.mulf %450, %454 : vector<8x32xf32>
    %456 = vector.extract_strided_slice %393 {offsets = [24, 0], sizes = [8, 128], strides = [1, 1]} : vector<64x128xf32> to vector<8x128xf32>
    %457 = arith.truncf %455 : vector<8x32xf32> to vector<8x32xbf16>
    %cst_104 = arith.constant dense<0.000000e+00> : vector<8x128xf32>
    %458 = tpu.matmul %457, %388, %cst_104 {dimension_numbers = #tpu.dot_dimension_numbers<[1], [0], [0], [1], [0, 0, 1, 1], [], []>} : vector<8x32xbf16>, vector<32x128xbf16>, vector<8x128xf32> -> vector<8x128xf32>
    %459 = arith.addf %456, %458 : vector<8x128xf32>
    %460 = vector.broadcast %19 : vector<1x128xf32> to vector<8x128xf32>
    %461 = arith.mulf %459, %460 : vector<8x128xf32>
    %462 = math.tanh %461 : vector<8x128xf32>
    %463 = vector.broadcast %19 : vector<1x128xf32> to vector<8x128xf32>
    %464 = arith.mulf %462, %463 : vector<8x128xf32>
    %465 = vector.broadcast %22 : vector<1x128xf32> to vector<8x128xf32>
    %466 = arith.addf %464, %465 : vector<8x128xf32>
    %467 = vector.extract_strided_slice %466 {offsets = [0, 0], sizes = [8, 32], strides = [1, 1]} : vector<8x128xf32> to vector<8x32xf32>
    %468 = vector.extract_strided_slice %466 {offsets = [0, 32], sizes = [8, 32], strides = [1, 1]} : vector<8x128xf32> to vector<8x32xf32>
    %469 = vector.extract_strided_slice %466 {offsets = [0, 64], sizes = [8, 32], strides = [1, 1]} : vector<8x128xf32> to vector<8x32xf32>
    %470 = vector.extract_strided_slice %466 {offsets = [0, 96], sizes = [8, 32], strides = [1, 1]} : vector<8x128xf32> to vector<8x32xf32>
    %471 = arith.mulf %468, %453 : vector<8x32xf32>
    %472 = arith.mulf %467, %469 : vector<8x32xf32>
    %473 = arith.addf %471, %472 : vector<8x32xf32>
    %474 = math.tanh %473 : vector<8x32xf32>
    %475 = arith.mulf %470, %474 : vector<8x32xf32>
    %476 = vector.extract_strided_slice %393 {offsets = [32, 0], sizes = [8, 128], strides = [1, 1]} : vector<64x128xf32> to vector<8x128xf32>
    %477 = arith.truncf %475 : vector<8x32xf32> to vector<8x32xbf16>
    %cst_105 = arith.constant dense<0.000000e+00> : vector<8x128xf32>
    %478 = tpu.matmul %477, %388, %cst_105 {dimension_numbers = #tpu.dot_dimension_numbers<[1], [0], [0], [1], [0, 0, 1, 1], [], []>} : vector<8x32xbf16>, vector<32x128xbf16>, vector<8x128xf32> -> vector<8x128xf32>
    %479 = arith.addf %476, %478 : vector<8x128xf32>
    %480 = vector.broadcast %19 : vector<1x128xf32> to vector<8x128xf32>
    %481 = arith.mulf %479, %480 : vector<8x128xf32>
    %482 = math.tanh %481 : vector<8x128xf32>
    %483 = vector.broadcast %19 : vector<1x128xf32> to vector<8x128xf32>
    %484 = arith.mulf %482, %483 : vector<8x128xf32>
    %485 = vector.broadcast %22 : vector<1x128xf32> to vector<8x128xf32>
    %486 = arith.addf %484, %485 : vector<8x128xf32>
    %487 = vector.extract_strided_slice %486 {offsets = [0, 0], sizes = [8, 32], strides = [1, 1]} : vector<8x128xf32> to vector<8x32xf32>
    %488 = vector.extract_strided_slice %486 {offsets = [0, 32], sizes = [8, 32], strides = [1, 1]} : vector<8x128xf32> to vector<8x32xf32>
    %489 = vector.extract_strided_slice %486 {offsets = [0, 64], sizes = [8, 32], strides = [1, 1]} : vector<8x128xf32> to vector<8x32xf32>
    %490 = vector.extract_strided_slice %486 {offsets = [0, 96], sizes = [8, 32], strides = [1, 1]} : vector<8x128xf32> to vector<8x32xf32>
    %491 = arith.mulf %488, %473 : vector<8x32xf32>
    %492 = arith.mulf %487, %489 : vector<8x32xf32>
    %493 = arith.addf %491, %492 : vector<8x32xf32>
    %494 = math.tanh %493 : vector<8x32xf32>
    %495 = arith.mulf %490, %494 : vector<8x32xf32>
    %496 = vector.extract_strided_slice %393 {offsets = [40, 0], sizes = [8, 128], strides = [1, 1]} : vector<64x128xf32> to vector<8x128xf32>
    %497 = arith.truncf %495 : vector<8x32xf32> to vector<8x32xbf16>
    %cst_106 = arith.constant dense<0.000000e+00> : vector<8x128xf32>
    %498 = tpu.matmul %497, %388, %cst_106 {dimension_numbers = #tpu.dot_dimension_numbers<[1], [0], [0], [1], [0, 0, 1, 1], [], []>} : vector<8x32xbf16>, vector<32x128xbf16>, vector<8x128xf32> -> vector<8x128xf32>
    %499 = arith.addf %496, %498 : vector<8x128xf32>
    %500 = vector.broadcast %19 : vector<1x128xf32> to vector<8x128xf32>
    %501 = arith.mulf %499, %500 : vector<8x128xf32>
    %502 = math.tanh %501 : vector<8x128xf32>
    %503 = vector.broadcast %19 : vector<1x128xf32> to vector<8x128xf32>
    %504 = arith.mulf %502, %503 : vector<8x128xf32>
    %505 = vector.broadcast %22 : vector<1x128xf32> to vector<8x128xf32>
    %506 = arith.addf %504, %505 : vector<8x128xf32>
    %507 = vector.extract_strided_slice %506 {offsets = [0, 0], sizes = [8, 32], strides = [1, 1]} : vector<8x128xf32> to vector<8x32xf32>
    %508 = vector.extract_strided_slice %506 {offsets = [0, 32], sizes = [8, 32], strides = [1, 1]} : vector<8x128xf32> to vector<8x32xf32>
    %509 = vector.extract_strided_slice %506 {offsets = [0, 64], sizes = [8, 32], strides = [1, 1]} : vector<8x128xf32> to vector<8x32xf32>
    %510 = vector.extract_strided_slice %506 {offsets = [0, 96], sizes = [8, 32], strides = [1, 1]} : vector<8x128xf32> to vector<8x32xf32>
    %511 = arith.mulf %508, %493 : vector<8x32xf32>
    %512 = arith.mulf %507, %509 : vector<8x32xf32>
    %513 = arith.addf %511, %512 : vector<8x32xf32>
    %514 = math.tanh %513 : vector<8x32xf32>
    %515 = arith.mulf %510, %514 : vector<8x32xf32>
    %516 = vector.extract_strided_slice %393 {offsets = [48, 0], sizes = [8, 128], strides = [1, 1]} : vector<64x128xf32> to vector<8x128xf32>
    %517 = arith.truncf %515 : vector<8x32xf32> to vector<8x32xbf16>
    %cst_107 = arith.constant dense<0.000000e+00> : vector<8x128xf32>
    %518 = tpu.matmul %517, %388, %cst_107 {dimension_numbers = #tpu.dot_dimension_numbers<[1], [0], [0], [1], [0, 0, 1, 1], [], []>} : vector<8x32xbf16>, vector<32x128xbf16>, vector<8x128xf32> -> vector<8x128xf32>
    %519 = arith.addf %516, %518 : vector<8x128xf32>
    %520 = vector.broadcast %19 : vector<1x128xf32> to vector<8x128xf32>
    %521 = arith.mulf %519, %520 : vector<8x128xf32>
    %522 = math.tanh %521 : vector<8x128xf32>
    %523 = vector.broadcast %19 : vector<1x128xf32> to vector<8x128xf32>
    %524 = arith.mulf %522, %523 : vector<8x128xf32>
    %525 = vector.broadcast %22 : vector<1x128xf32> to vector<8x128xf32>
    %526 = arith.addf %524, %525 : vector<8x128xf32>
    %527 = vector.extract_strided_slice %526 {offsets = [0, 0], sizes = [8, 32], strides = [1, 1]} : vector<8x128xf32> to vector<8x32xf32>
    %528 = vector.extract_strided_slice %526 {offsets = [0, 32], sizes = [8, 32], strides = [1, 1]} : vector<8x128xf32> to vector<8x32xf32>
    %529 = vector.extract_strided_slice %526 {offsets = [0, 64], sizes = [8, 32], strides = [1, 1]} : vector<8x128xf32> to vector<8x32xf32>
    %530 = vector.extract_strided_slice %526 {offsets = [0, 96], sizes = [8, 32], strides = [1, 1]} : vector<8x128xf32> to vector<8x32xf32>
    %531 = arith.mulf %528, %513 : vector<8x32xf32>
    %532 = arith.mulf %527, %529 : vector<8x32xf32>
    %533 = arith.addf %531, %532 : vector<8x32xf32>
    %534 = math.tanh %533 : vector<8x32xf32>
    %535 = arith.mulf %530, %534 : vector<8x32xf32>
    %536 = vector.extract_strided_slice %393 {offsets = [56, 0], sizes = [8, 128], strides = [1, 1]} : vector<64x128xf32> to vector<8x128xf32>
    %537 = arith.truncf %535 : vector<8x32xf32> to vector<8x32xbf16>
    %cst_108 = arith.constant dense<0.000000e+00> : vector<8x128xf32>
    %538 = tpu.matmul %537, %388, %cst_108 {dimension_numbers = #tpu.dot_dimension_numbers<[1], [0], [0], [1], [0, 0, 1, 1], [], []>} : vector<8x32xbf16>, vector<32x128xbf16>, vector<8x128xf32> -> vector<8x128xf32>
    %539 = arith.addf %536, %538 : vector<8x128xf32>
    %540 = vector.broadcast %19 : vector<1x128xf32> to vector<8x128xf32>
    %541 = arith.mulf %539, %540 : vector<8x128xf32>
    %542 = math.tanh %541 : vector<8x128xf32>
    %543 = vector.broadcast %19 : vector<1x128xf32> to vector<8x128xf32>
    %544 = arith.mulf %542, %543 : vector<8x128xf32>
    %545 = vector.broadcast %22 : vector<1x128xf32> to vector<8x128xf32>
    %546 = arith.addf %544, %545 : vector<8x128xf32>
    %547 = vector.extract_strided_slice %546 {offsets = [0, 0], sizes = [8, 32], strides = [1, 1]} : vector<8x128xf32> to vector<8x32xf32>
    %548 = vector.extract_strided_slice %546 {offsets = [0, 32], sizes = [8, 32], strides = [1, 1]} : vector<8x128xf32> to vector<8x32xf32>
    %549 = vector.extract_strided_slice %546 {offsets = [0, 64], sizes = [8, 32], strides = [1, 1]} : vector<8x128xf32> to vector<8x32xf32>
    %550 = vector.extract_strided_slice %546 {offsets = [0, 96], sizes = [8, 32], strides = [1, 1]} : vector<8x128xf32> to vector<8x32xf32>
    %551 = arith.mulf %548, %533 : vector<8x32xf32>
    %552 = arith.mulf %547, %549 : vector<8x32xf32>
    %553 = arith.addf %551, %552 : vector<8x32xf32>
    %554 = math.tanh %553 : vector<8x32xf32>
    %555 = arith.mulf %550, %554 : vector<8x32xf32>
    %c1_109 = arith.constant 1 : index
    %c1_110 = arith.constant 1 : index
    %c0_111 = arith.constant 0 : index
    %c0_112 = arith.constant 0 : index
    %556 = vector.load %arg3[%c1_109, %c1_110, %c0_111, %c0_112] : memref<2x2x64x128xbf16, #tpu.memory_space<vmem>>, vector<1x1x64x128xbf16>
    %557 = vector.shape_cast %556 : vector<1x1x64x128xbf16> to vector<64x128xbf16>
    %c1_113 = arith.constant 1 : index
    %c1_114 = arith.constant 1 : index
    %c0_115 = arith.constant 0 : index
    %c0_116 = arith.constant 0 : index
    %558 = vector.load %arg4[%c1_113, %c1_114, %c0_115, %c0_116] : memref<2x2x32x128xbf16, #tpu.memory_space<vmem>>, vector<1x1x32x128xbf16>
    %559 = vector.shape_cast %558 : vector<1x1x32x128xbf16> to vector<32x128xbf16>
    %c1_117 = arith.constant 1 : index
    %c1_118 = arith.constant 1 : index
    %c0_119 = arith.constant 0 : index
    %c0_120 = arith.constant 0 : index
    %560 = vector.load %arg5[%c1_117, %c1_118, %c0_119, %c0_120] : memref<2x2x1x128xf32, #tpu.memory_space<vmem>>, vector<1x1x1x128xf32>
    %561 = vector.shape_cast %560 : vector<1x1x1x128xf32> to vector<1x128xf32>
    %cst_121 = arith.constant dense<0.000000e+00> : vector<64x128xf32>
    %562 = tpu.matmul %384, %557, %cst_121 {dimension_numbers = #tpu.dot_dimension_numbers<[1], [0], [0], [1], [0, 0, 1, 1], [], []>} : vector<64x64xbf16>, vector<64x128xbf16>, vector<64x128xf32> -> vector<64x128xf32>
    %563 = vector.broadcast %561 : vector<1x128xf32> to vector<64x128xf32>
    %564 = arith.addf %562, %563 : vector<64x128xf32>
    %cst_122 = arith.constant 0.000000e+00 : f32
    %565 = vector.broadcast %cst_122 : f32 to vector<8x32xf32>
    %cst_123 = arith.constant 0.000000e+00 : f32
    %566 = vector.broadcast %cst_123 : f32 to vector<8x32xf32>
    %567 = vector.extract_strided_slice %564 {offsets = [56, 0], sizes = [8, 128], strides = [1, 1]} : vector<64x128xf32> to vector<8x128xf32>
    %568 = arith.truncf %565 : vector<8x32xf32> to vector<8x32xbf16>
    %cst_124 = arith.constant dense<0.000000e+00> : vector<8x128xf32>
    %569 = tpu.matmul %568, %559, %cst_124 {dimension_numbers = #tpu.dot_dimension_numbers<[1], [0], [0], [1], [0, 0, 1, 1], [], []>} : vector<8x32xbf16>, vector<32x128xbf16>, vector<8x128xf32> -> vector<8x128xf32>
    %570 = arith.addf %567, %569 : vector<8x128xf32>
    %571 = vector.broadcast %19 : vector<1x128xf32> to vector<8x128xf32>
    %572 = arith.mulf %570, %571 : vector<8x128xf32>
    %573 = math.tanh %572 : vector<8x128xf32>
    %574 = vector.broadcast %19 : vector<1x128xf32> to vector<8x128xf32>
    %575 = arith.mulf %573, %574 : vector<8x128xf32>
    %576 = vector.broadcast %22 : vector<1x128xf32> to vector<8x128xf32>
    %577 = arith.addf %575, %576 : vector<8x128xf32>
    %578 = vector.extract_strided_slice %577 {offsets = [0, 0], sizes = [8, 32], strides = [1, 1]} : vector<8x128xf32> to vector<8x32xf32>
    %579 = vector.extract_strided_slice %577 {offsets = [0, 32], sizes = [8, 32], strides = [1, 1]} : vector<8x128xf32> to vector<8x32xf32>
    %580 = vector.extract_strided_slice %577 {offsets = [0, 64], sizes = [8, 32], strides = [1, 1]} : vector<8x128xf32> to vector<8x32xf32>
    %581 = vector.extract_strided_slice %577 {offsets = [0, 96], sizes = [8, 32], strides = [1, 1]} : vector<8x128xf32> to vector<8x32xf32>
    %582 = arith.mulf %579, %566 : vector<8x32xf32>
    %583 = arith.mulf %578, %580 : vector<8x32xf32>
    %584 = arith.addf %582, %583 : vector<8x32xf32>
    %585 = math.tanh %584 : vector<8x32xf32>
    %586 = arith.mulf %581, %585 : vector<8x32xf32>
    %587 = vector.extract_strided_slice %564 {offsets = [48, 0], sizes = [8, 128], strides = [1, 1]} : vector<64x128xf32> to vector<8x128xf32>
    %588 = arith.truncf %586 : vector<8x32xf32> to vector<8x32xbf16>
    %cst_125 = arith.constant dense<0.000000e+00> : vector<8x128xf32>
    %589 = tpu.matmul %588, %559, %cst_125 {dimension_numbers = #tpu.dot_dimension_numbers<[1], [0], [0], [1], [0, 0, 1, 1], [], []>} : vector<8x32xbf16>, vector<32x128xbf16>, vector<8x128xf32> -> vector<8x128xf32>
    %590 = arith.addf %587, %589 : vector<8x128xf32>
    %591 = vector.broadcast %19 : vector<1x128xf32> to vector<8x128xf32>
    %592 = arith.mulf %590, %591 : vector<8x128xf32>
    %593 = math.tanh %592 : vector<8x128xf32>
    %594 = vector.broadcast %19 : vector<1x128xf32> to vector<8x128xf32>
    %595 = arith.mulf %593, %594 : vector<8x128xf32>
    %596 = vector.broadcast %22 : vector<1x128xf32> to vector<8x128xf32>
    %597 = arith.addf %595, %596 : vector<8x128xf32>
    %598 = vector.extract_strided_slice %597 {offsets = [0, 0], sizes = [8, 32], strides = [1, 1]} : vector<8x128xf32> to vector<8x32xf32>
    %599 = vector.extract_strided_slice %597 {offsets = [0, 32], sizes = [8, 32], strides = [1, 1]} : vector<8x128xf32> to vector<8x32xf32>
    %600 = vector.extract_strided_slice %597 {offsets = [0, 64], sizes = [8, 32], strides = [1, 1]} : vector<8x128xf32> to vector<8x32xf32>
    %601 = vector.extract_strided_slice %597 {offsets = [0, 96], sizes = [8, 32], strides = [1, 1]} : vector<8x128xf32> to vector<8x32xf32>
    %602 = arith.mulf %599, %584 : vector<8x32xf32>
    %603 = arith.mulf %598, %600 : vector<8x32xf32>
    %604 = arith.addf %602, %603 : vector<8x32xf32>
    %605 = math.tanh %604 : vector<8x32xf32>
    %606 = arith.mulf %601, %605 : vector<8x32xf32>
    %607 = vector.extract_strided_slice %564 {offsets = [40, 0], sizes = [8, 128], strides = [1, 1]} : vector<64x128xf32> to vector<8x128xf32>
    %608 = arith.truncf %606 : vector<8x32xf32> to vector<8x32xbf16>
    %cst_126 = arith.constant dense<0.000000e+00> : vector<8x128xf32>
    %609 = tpu.matmul %608, %559, %cst_126 {dimension_numbers = #tpu.dot_dimension_numbers<[1], [0], [0], [1], [0, 0, 1, 1], [], []>} : vector<8x32xbf16>, vector<32x128xbf16>, vector<8x128xf32> -> vector<8x128xf32>
    %610 = arith.addf %607, %609 : vector<8x128xf32>
    %611 = vector.broadcast %19 : vector<1x128xf32> to vector<8x128xf32>
    %612 = arith.mulf %610, %611 : vector<8x128xf32>
    %613 = math.tanh %612 : vector<8x128xf32>
    %614 = vector.broadcast %19 : vector<1x128xf32> to vector<8x128xf32>
    %615 = arith.mulf %613, %614 : vector<8x128xf32>
    %616 = vector.broadcast %22 : vector<1x128xf32> to vector<8x128xf32>
    %617 = arith.addf %615, %616 : vector<8x128xf32>
    %618 = vector.extract_strided_slice %617 {offsets = [0, 0], sizes = [8, 32], strides = [1, 1]} : vector<8x128xf32> to vector<8x32xf32>
    %619 = vector.extract_strided_slice %617 {offsets = [0, 32], sizes = [8, 32], strides = [1, 1]} : vector<8x128xf32> to vector<8x32xf32>
    %620 = vector.extract_strided_slice %617 {offsets = [0, 64], sizes = [8, 32], strides = [1, 1]} : vector<8x128xf32> to vector<8x32xf32>
    %621 = vector.extract_strided_slice %617 {offsets = [0, 96], sizes = [8, 32], strides = [1, 1]} : vector<8x128xf32> to vector<8x32xf32>
    %622 = arith.mulf %619, %604 : vector<8x32xf32>
    %623 = arith.mulf %618, %620 : vector<8x32xf32>
    %624 = arith.addf %622, %623 : vector<8x32xf32>
    %625 = math.tanh %624 : vector<8x32xf32>
    %626 = arith.mulf %621, %625 : vector<8x32xf32>
    %627 = vector.extract_strided_slice %564 {offsets = [32, 0], sizes = [8, 128], strides = [1, 1]} : vector<64x128xf32> to vector<8x128xf32>
    %628 = arith.truncf %626 : vector<8x32xf32> to vector<8x32xbf16>
    %cst_127 = arith.constant dense<0.000000e+00> : vector<8x128xf32>
    %629 = tpu.matmul %628, %559, %cst_127 {dimension_numbers = #tpu.dot_dimension_numbers<[1], [0], [0], [1], [0, 0, 1, 1], [], []>} : vector<8x32xbf16>, vector<32x128xbf16>, vector<8x128xf32> -> vector<8x128xf32>
    %630 = arith.addf %627, %629 : vector<8x128xf32>
    %631 = vector.broadcast %19 : vector<1x128xf32> to vector<8x128xf32>
    %632 = arith.mulf %630, %631 : vector<8x128xf32>
    %633 = math.tanh %632 : vector<8x128xf32>
    %634 = vector.broadcast %19 : vector<1x128xf32> to vector<8x128xf32>
    %635 = arith.mulf %633, %634 : vector<8x128xf32>
    %636 = vector.broadcast %22 : vector<1x128xf32> to vector<8x128xf32>
    %637 = arith.addf %635, %636 : vector<8x128xf32>
    %638 = vector.extract_strided_slice %637 {offsets = [0, 0], sizes = [8, 32], strides = [1, 1]} : vector<8x128xf32> to vector<8x32xf32>
    %639 = vector.extract_strided_slice %637 {offsets = [0, 32], sizes = [8, 32], strides = [1, 1]} : vector<8x128xf32> to vector<8x32xf32>
    %640 = vector.extract_strided_slice %637 {offsets = [0, 64], sizes = [8, 32], strides = [1, 1]} : vector<8x128xf32> to vector<8x32xf32>
    %641 = vector.extract_strided_slice %637 {offsets = [0, 96], sizes = [8, 32], strides = [1, 1]} : vector<8x128xf32> to vector<8x32xf32>
    %642 = arith.mulf %639, %624 : vector<8x32xf32>
    %643 = arith.mulf %638, %640 : vector<8x32xf32>
    %644 = arith.addf %642, %643 : vector<8x32xf32>
    %645 = math.tanh %644 : vector<8x32xf32>
    %646 = arith.mulf %641, %645 : vector<8x32xf32>
    %647 = vector.extract_strided_slice %564 {offsets = [24, 0], sizes = [8, 128], strides = [1, 1]} : vector<64x128xf32> to vector<8x128xf32>
    %648 = arith.truncf %646 : vector<8x32xf32> to vector<8x32xbf16>
    %cst_128 = arith.constant dense<0.000000e+00> : vector<8x128xf32>
    %649 = tpu.matmul %648, %559, %cst_128 {dimension_numbers = #tpu.dot_dimension_numbers<[1], [0], [0], [1], [0, 0, 1, 1], [], []>} : vector<8x32xbf16>, vector<32x128xbf16>, vector<8x128xf32> -> vector<8x128xf32>
    %650 = arith.addf %647, %649 : vector<8x128xf32>
    %651 = vector.broadcast %19 : vector<1x128xf32> to vector<8x128xf32>
    %652 = arith.mulf %650, %651 : vector<8x128xf32>
    %653 = math.tanh %652 : vector<8x128xf32>
    %654 = vector.broadcast %19 : vector<1x128xf32> to vector<8x128xf32>
    %655 = arith.mulf %653, %654 : vector<8x128xf32>
    %656 = vector.broadcast %22 : vector<1x128xf32> to vector<8x128xf32>
    %657 = arith.addf %655, %656 : vector<8x128xf32>
    %658 = vector.extract_strided_slice %657 {offsets = [0, 0], sizes = [8, 32], strides = [1, 1]} : vector<8x128xf32> to vector<8x32xf32>
    %659 = vector.extract_strided_slice %657 {offsets = [0, 32], sizes = [8, 32], strides = [1, 1]} : vector<8x128xf32> to vector<8x32xf32>
    %660 = vector.extract_strided_slice %657 {offsets = [0, 64], sizes = [8, 32], strides = [1, 1]} : vector<8x128xf32> to vector<8x32xf32>
    %661 = vector.extract_strided_slice %657 {offsets = [0, 96], sizes = [8, 32], strides = [1, 1]} : vector<8x128xf32> to vector<8x32xf32>
    %662 = arith.mulf %659, %644 : vector<8x32xf32>
    %663 = arith.mulf %658, %660 : vector<8x32xf32>
    %664 = arith.addf %662, %663 : vector<8x32xf32>
    %665 = math.tanh %664 : vector<8x32xf32>
    %666 = arith.mulf %661, %665 : vector<8x32xf32>
    %667 = vector.extract_strided_slice %564 {offsets = [16, 0], sizes = [8, 128], strides = [1, 1]} : vector<64x128xf32> to vector<8x128xf32>
    %668 = arith.truncf %666 : vector<8x32xf32> to vector<8x32xbf16>
    %cst_129 = arith.constant dense<0.000000e+00> : vector<8x128xf32>
    %669 = tpu.matmul %668, %559, %cst_129 {dimension_numbers = #tpu.dot_dimension_numbers<[1], [0], [0], [1], [0, 0, 1, 1], [], []>} : vector<8x32xbf16>, vector<32x128xbf16>, vector<8x128xf32> -> vector<8x128xf32>
    %670 = arith.addf %667, %669 : vector<8x128xf32>
    %671 = vector.broadcast %19 : vector<1x128xf32> to vector<8x128xf32>
    %672 = arith.mulf %670, %671 : vector<8x128xf32>
    %673 = math.tanh %672 : vector<8x128xf32>
    %674 = vector.broadcast %19 : vector<1x128xf32> to vector<8x128xf32>
    %675 = arith.mulf %673, %674 : vector<8x128xf32>
    %676 = vector.broadcast %22 : vector<1x128xf32> to vector<8x128xf32>
    %677 = arith.addf %675, %676 : vector<8x128xf32>
    %678 = vector.extract_strided_slice %677 {offsets = [0, 0], sizes = [8, 32], strides = [1, 1]} : vector<8x128xf32> to vector<8x32xf32>
    %679 = vector.extract_strided_slice %677 {offsets = [0, 32], sizes = [8, 32], strides = [1, 1]} : vector<8x128xf32> to vector<8x32xf32>
    %680 = vector.extract_strided_slice %677 {offsets = [0, 64], sizes = [8, 32], strides = [1, 1]} : vector<8x128xf32> to vector<8x32xf32>
    %681 = vector.extract_strided_slice %677 {offsets = [0, 96], sizes = [8, 32], strides = [1, 1]} : vector<8x128xf32> to vector<8x32xf32>
    %682 = arith.mulf %679, %664 : vector<8x32xf32>
    %683 = arith.mulf %678, %680 : vector<8x32xf32>
    %684 = arith.addf %682, %683 : vector<8x32xf32>
    %685 = math.tanh %684 : vector<8x32xf32>
    %686 = arith.mulf %681, %685 : vector<8x32xf32>
    %687 = vector.extract_strided_slice %564 {offsets = [8, 0], sizes = [8, 128], strides = [1, 1]} : vector<64x128xf32> to vector<8x128xf32>
    %688 = arith.truncf %686 : vector<8x32xf32> to vector<8x32xbf16>
    %cst_130 = arith.constant dense<0.000000e+00> : vector<8x128xf32>
    %689 = tpu.matmul %688, %559, %cst_130 {dimension_numbers = #tpu.dot_dimension_numbers<[1], [0], [0], [1], [0, 0, 1, 1], [], []>} : vector<8x32xbf16>, vector<32x128xbf16>, vector<8x128xf32> -> vector<8x128xf32>
    %690 = arith.addf %687, %689 : vector<8x128xf32>
    %691 = vector.broadcast %19 : vector<1x128xf32> to vector<8x128xf32>
    %692 = arith.mulf %690, %691 : vector<8x128xf32>
    %693 = math.tanh %692 : vector<8x128xf32>
    %694 = vector.broadcast %19 : vector<1x128xf32> to vector<8x128xf32>
    %695 = arith.mulf %693, %694 : vector<8x128xf32>
    %696 = vector.broadcast %22 : vector<1x128xf32> to vector<8x128xf32>
    %697 = arith.addf %695, %696 : vector<8x128xf32>
    %698 = vector.extract_strided_slice %697 {offsets = [0, 0], sizes = [8, 32], strides = [1, 1]} : vector<8x128xf32> to vector<8x32xf32>
    %699 = vector.extract_strided_slice %697 {offsets = [0, 32], sizes = [8, 32], strides = [1, 1]} : vector<8x128xf32> to vector<8x32xf32>
    %700 = vector.extract_strided_slice %697 {offsets = [0, 64], sizes = [8, 32], strides = [1, 1]} : vector<8x128xf32> to vector<8x32xf32>
    %701 = vector.extract_strided_slice %697 {offsets = [0, 96], sizes = [8, 32], strides = [1, 1]} : vector<8x128xf32> to vector<8x32xf32>
    %702 = arith.mulf %699, %684 : vector<8x32xf32>
    %703 = arith.mulf %698, %700 : vector<8x32xf32>
    %704 = arith.addf %702, %703 : vector<8x32xf32>
    %705 = math.tanh %704 : vector<8x32xf32>
    %706 = arith.mulf %701, %705 : vector<8x32xf32>
    %707 = vector.extract_strided_slice %564 {offsets = [0, 0], sizes = [8, 128], strides = [1, 1]} : vector<64x128xf32> to vector<8x128xf32>
    %708 = arith.truncf %706 : vector<8x32xf32> to vector<8x32xbf16>
    %cst_131 = arith.constant dense<0.000000e+00> : vector<8x128xf32>
    %709 = tpu.matmul %708, %559, %cst_131 {dimension_numbers = #tpu.dot_dimension_numbers<[1], [0], [0], [1], [0, 0, 1, 1], [], []>} : vector<8x32xbf16>, vector<32x128xbf16>, vector<8x128xf32> -> vector<8x128xf32>
    %710 = arith.addf %707, %709 : vector<8x128xf32>
    %711 = vector.broadcast %19 : vector<1x128xf32> to vector<8x128xf32>
    %712 = arith.mulf %710, %711 : vector<8x128xf32>
    %713 = math.tanh %712 : vector<8x128xf32>
    %714 = vector.broadcast %19 : vector<1x128xf32> to vector<8x128xf32>
    %715 = arith.mulf %713, %714 : vector<8x128xf32>
    %716 = vector.broadcast %22 : vector<1x128xf32> to vector<8x128xf32>
    %717 = arith.addf %715, %716 : vector<8x128xf32>
    %718 = vector.extract_strided_slice %717 {offsets = [0, 0], sizes = [8, 32], strides = [1, 1]} : vector<8x128xf32> to vector<8x32xf32>
    %719 = vector.extract_strided_slice %717 {offsets = [0, 32], sizes = [8, 32], strides = [1, 1]} : vector<8x128xf32> to vector<8x32xf32>
    %720 = vector.extract_strided_slice %717 {offsets = [0, 64], sizes = [8, 32], strides = [1, 1]} : vector<8x128xf32> to vector<8x32xf32>
    %721 = vector.extract_strided_slice %717 {offsets = [0, 96], sizes = [8, 32], strides = [1, 1]} : vector<8x128xf32> to vector<8x32xf32>
    %722 = arith.mulf %719, %704 : vector<8x32xf32>
    %723 = arith.mulf %718, %720 : vector<8x32xf32>
    %724 = arith.addf %722, %723 : vector<8x32xf32>
    %725 = math.tanh %724 : vector<8x32xf32>
    %726 = arith.mulf %721, %725 : vector<8x32xf32>
    %727 = tpu.concatenate %726, %555 in 1 : vector<8x32xf32>, vector<8x32xf32> -> vector<8x64xf32>
    %cst_132 = arith.constant 5.000000e-01 : f32
    %728 = vector.broadcast %cst_132 : f32 to vector<8x64xf32>
    %729 = arith.mulf %728, %727 : vector<8x64xf32>
    %cst_133 = arith.constant 0.707106769 : f32
    %730 = vector.broadcast %cst_133 : f32 to vector<8x64xf32>
    %731 = arith.mulf %727, %730 : vector<8x64xf32>
    %732 = math.erf %731 : vector<8x64xf32>
    %cst_134 = arith.constant 1.000000e+00 : f32
    %733 = vector.broadcast %cst_134 : f32 to vector<8x64xf32>
    %734 = arith.addf %733, %732 : vector<8x64xf32>
    %735 = arith.mulf %729, %734 : vector<8x64xf32>
    %c0_135 = arith.constant 0 : index
    %c0_136 = arith.constant 0 : index
    %736 = vector.load %arg6[%c0_135, %c0_136] : memref<64x128xf32, #tpu.memory_space<vmem>>, vector<64x128xf32>
    %cst_137 = arith.constant dense<0.000000e+00> : vector<8x128xf32>
    %737 = tpu.matmul %735, %736, %cst_137 {dimension_numbers = #tpu.dot_dimension_numbers<[1], [0], [0], [1], [0, 0, 1, 1], [], []>} : vector<8x64xf32>, vector<64x128xf32>, vector<8x128xf32> -> vector<8x128xf32>
    %c0_138 = arith.constant 0 : index
    %c0_139 = arith.constant 0 : index
    %738 = vector.load %arg7[%c0_138, %c0_139] : memref<1x128xf32, #tpu.memory_space<vmem>>, vector<1x128xf32>
    %739 = vector.broadcast %738 : vector<1x128xf32> to vector<8x128xf32>
    %740 = arith.addf %737, %739 : vector<8x128xf32>
    %c0_140 = arith.constant 0 : index
    %c0_141 = arith.constant 0 : index
    %741 = vector.load %arg8[%c0_140, %c0_141] : memref<8x128xf32, #tpu.memory_space<vmem>>, vector<8x128xf32>
    tpu.vector_store %arg8[%c0_140, %c0_141], %740 {strides = array<i32>} : memref<8x128xf32, #tpu.memory_space<vmem>>, vector<8x128xf32>,
    return
  }
  func.func @transform_0(%arg0: i32) -> (i32, i32) {
    %c0_i32 = arith.constant 0 : i32
    %c0_i32_0 = arith.constant 0 : i32
    %c0_i32_1 = arith.constant 0 : i32
    return %c0_i32, %c0_i32_0 : i32, i32
  }
  func.func @transform_1(%arg0: i32) -> (i32, i32) {
    %c0_i32 = arith.constant 0 : i32
    %c0_i32_0 = arith.constant 0 : i32
    %c0_i32_1 = arith.constant 0 : i32
    return %c0_i32, %c0_i32_0 : i32, i32
  }
  func.func @transform_2(%arg0: i32) -> (i32, i32, i32, i32) {
    %c0_i32 = arith.constant 0 : i32
    %c0_i32_0 = arith.constant 0 : i32
    %c0_i32_1 = arith.constant 0 : i32
    %c0_i32_2 = arith.constant 0 : i32
    %c0_i32_3 = arith.constant 0 : i32
    return %c0_i32, %c0_i32_0, %c0_i32_1, %c0_i32_2 : i32, i32, i32, i32
  }
  func.func @transform_3(%arg0: i32) -> (i32, i32, i32, i32) {
    %c0_i32 = arith.constant 0 : i32
    %c0_i32_0 = arith.constant 0 : i32
    %c0_i32_1 = arith.constant 0 : i32
    %c0_i32_2 = arith.constant 0 : i32
    %c0_i32_3 = arith.constant 0 : i32
    return %c0_i32, %c0_i32_0, %c0_i32_1, %c0_i32_2 : i32, i32, i32, i32
  }
  func.func @transform_4(%arg0: i32) -> (i32, i32, i32, i32) {
    %c0_i32 = arith.constant 0 : i32
    %c0_i32_0 = arith.constant 0 : i32
    %c0_i32_1 = arith.constant 0 : i32
    %c0_i32_2 = arith.constant 0 : i32
    %c0_i32_3 = arith.constant 0 : i32
    return %c0_i32, %c0_i32_0, %c0_i32_1, %c0_i32_2 : i32, i32, i32, i32
  }
  func.func @transform_5(%arg0: i32) -> (i32, i32) {
    %c0_i32 = arith.constant 0 : i32
    %c0_i32_0 = arith.constant 0 : i32
    %c0_i32_1 = arith.constant 0 : i32
    return %c0_i32, %c0_i32_0 : i32, i32
  }
  func.func @transform_6(%arg0: i32) -> (i32, i32) {
    %c0_i32 = arith.constant 0 : i32
    %c0_i32_0 = arith.constant 0 : i32
    %c0_i32_1 = arith.constant 0 : i32
    return %c0_i32, %c0_i32_0 : i32, i32
  }
  func.func @transform_7(%arg0: i32) -> (i32, i32) {
    %c0_i32 = arith.constant 0 : i32
    %c0_i32_0 = arith.constant 0 : i32
    %c0_i32_1 = arith.constant 0 : i32
    return %c0_i32, %c0_i32_0 : i32, i32
  }
}

</mosaic_0001>

<llo_original>
// kernel: lstm_classifier_forward.1
$region0: #{lstm_classifier_forward.1}
  #allocation0 [shape = 'u32[]', space=smem, size = 0x4, offset = 0x4, fixed_abs, tag = 'smem constant byte address 0x4 - core index']
  #allocation1 [shape = 'u32[144,128]{1,0:T(1,128)}', space=vmem, size = 0x12000, scoped, tag = 'internal scratch']
  #allocation2 [shape = 'f32[64,64]{1,0:T(8,128)}', space=vmem, size = 0x8000, scoped, tag = 'scratch operand']
  #allocation3 [shape = 'f32[64,64]{1,0:T(8,128)}', space=vmem, size = 0x8000, scoped, tag = 'scratch operand']
  %s0 = inlined_call_operand.vmem [shape: s32[64,1], index: 0, kind: input, shape index: {}]
  %s1 = inlined_call_operand.vmem [shape: f32[128,64], index: 1, kind: input, shape index: {}]
  %s2 = inlined_call_operand.vmem [shape: bf16[2,2,64,128], index: 2, kind: input, shape index: {}]
  %s3 = inlined_call_operand.vmem [shape: bf16[2,2,32,128], index: 3, kind: input, shape index: {}]
  %s4 = inlined_call_operand.vmem [shape: f32[2,2,1,128], index: 4, kind: input, shape index: {}]
  %s5 = inlined_call_operand.vmem [shape: f32[64,128], index: 5, kind: input, shape index: {}]
  %s6 = inlined_call_operand.vmem [shape: f32[1,128], index: 6, kind: input, shape index: {}]
  %s7 = inlined_call_operand.vmem [shape: f32[8,128], index: 7, kind: output, shape index: {}]
  %s8 = sld [smem:[#allocation0]]
  $region38: #{lstm_classifier_forward.1} parent=0
    _
  %s10 = ssub.s32 1, %s8
  %s11 = scalar_select 0, %s10, %s8
  // Predicated region
  $region2: #{lstm_classifier_forward.1} parent=0 // pred_check
    _
  $region3: #{lstm_classifier_forward.1} parent=0 // pred_check_branch
    %13 = sbr.rel (0) target = $region5
  $region4: #{lstm_classifier_forward.1} parent=0 // pred_region
    _
  $region5: #{lstm_classifier_forward.1} parent=0 // pred_fallthru
    _
  // Predicated region
  $region6: #{lstm_classifier_forward.1} parent=0 // pred_check
    _
  $region7: #{lstm_classifier_forward.1} parent=0 // pred_check_branch
    %15 = sbr.rel (0) target = $region9
  $region8: #{lstm_classifier_forward.1} parent=0 // pred_region
    _
  $region9: #{lstm_classifier_forward.1} parent=0 // pred_fallthru
    _
  // Predicated region
  $region10: #{lstm_classifier_forward.1} parent=0 // pred_check
    _
  $region11: #{lstm_classifier_forward.1} parent=0 // pred_check_branch
    %17 = sbr.rel (0) target = $region13
  $region12: #{lstm_classifier_forward.1} parent=0 // pred_region
    _
  $region13: #{lstm_classifier_forward.1} parent=0 // pred_fallthru
    _
  // Predicated region
  $region14: #{lstm_classifier_forward.1} parent=0 // pred_check
    _
  $region15: #{lstm_classifier_forward.1} parent=0 // pred_check_branch
    %19 = sbr.rel (0) target = $region17
  $region16: #{lstm_classifier_forward.1} parent=0 // pred_region
    _
  $region17: #{lstm_classifier_forward.1} parent=0 // pred_fallthru
    _
  // Predicated region
  $region18: #{lstm_classifier_forward.1} parent=0 // pred_check
    _
  $region19: #{lstm_classifier_forward.1} parent=0 // pred_check_branch
    %21 = sbr.rel (0) target = $region21
  $region20: #{lstm_classifier_forward.1} parent=0 // pred_region
    _
  $region21: #{lstm_classifier_forward.1} parent=0 // pred_fallthru
    _
  // Predicated region
  $region22: #{lstm_classifier_forward.1} parent=0 // pred_check
    _
  $region23: #{lstm_classifier_forward.1} parent=0 // pred_check_branch
    %23 = sbr.rel (0) target = $region25
  $region24: #{lstm_classifier_forward.1} parent=0 // pred_region
    _
  $region25: #{lstm_classifier_forward.1} parent=0 // pred_fallthru
    _
  // Predicated region
  $region26: #{lstm_classifier_forward.1} parent=0 // pred_check
    _
  $region27: #{lstm_classifier_forward.1} parent=0 // pred_check_branch
    %25 = sbr.rel (0) target = $region29
  $region28: #{lstm_classifier_forward.1} parent=0 // pred_region
    _
  $region29: #{lstm_classifier_forward.1} parent=0 // pred_fallthru
    _
  %vm27 = vcmask 523264
  %28 = vst.msk [vmem:[#allocation3] sm:$0xff] %vm27, 0.0
  %29 = vst.msk [vmem:[#allocation3 + $0x8] sm:$0xff] %vm27, 0.0
  %30 = vst.msk [vmem:[#allocation3 + $0x10] sm:$0xff] %vm27, 0.0
  %31 = vst.msk [vmem:[#allocation3 + $0x18] sm:$0xff] %vm27, 0.0
  %32 = vst.msk [vmem:[#allocation3 + $0x20] sm:$0xff] %vm27, 0.0
  %33 = vst.msk [vmem:[#allocation3 + $0x28] sm:$0xff] %vm27, 0.0
  %34 = vst.msk [vmem:[#allocation3 + $0x30] sm:$0xff] %vm27, 0.0
  %35 = vst.msk [vmem:[#allocation3 + $0x38] sm:$0xff] %vm27, 0.0
  %v36 = vld [vmem:[%s0] sm:$0xff]
  %v37 = vld [vmem:[%s0 + $0x8] sm:$0xff]
  %v38 = vld [vmem:[%s0 + $0x10] sm:$0xff]
  %v39 = vld [vmem:[%s0 + $0x18] sm:$0xff]
  %v40 = vld [vmem:[%s0 + $0x20] sm:$0xff]
  %v41 = vld [vmem:[%s0 + $0x28] sm:$0xff]
  %v42 = vld [vmem:[%s0 + $0x30] sm:$0xff]
  %v43 = vld [vmem:[%s0 + $0x38] sm:$0xff]
  %v44 = vlaneseq
  %v45 = vand.u32 %v44, 127
  %46 = vset.pattern.permute.xlu0 0
  %47 = vperm.xlu0 %46, %v36
  %v48 = vpop.permute.xlu0 %47
  %49 = vset.pattern.permute.xlu0 0
  %50 = vperm.xlu0 %49, %v37
  %v51 = vpop.permute.xlu0 %50
  %52 = vset.pattern.permute.xlu0 0
  %53 = vperm.xlu0 %52, %v38
  %v54 = vpop.permute.xlu0 %53
  %55 = vset.pattern.permute.xlu0 0
  %56 = vperm.xlu0 %55, %v39
  %v57 = vpop.permute.xlu0 %56
  %58 = vset.pattern.permute.xlu0 0
  %59 = vperm.xlu0 %58, %v40
  %v60 = vpop.permute.xlu0 %59
  %61 = vset.pattern.permute.xlu0 0
  %62 = vperm.xlu0 %61, %v41
  %v63 = vpop.permute.xlu0 %62
  %64 = vset.pattern.permute.xlu0 0
  %65 = vperm.xlu0 %64, %v42
  %v66 = vpop.permute.xlu0 %65
  %67 = vset.pattern.permute.xlu0 0
  %68 = vperm.xlu0 %67, %v43
  %v69 = vpop.permute.xlu0 %68
  %vm70 = vcmp.eq.s32.totalorder %v45, %v48
  %vm71 = vcmp.eq.s32.totalorder %v45, %v51
  %vm72 = vcmp.eq.s32.totalorder %v45, %v54
  %vm73 = vcmp.eq.s32.totalorder %v45, %v57
  %vm74 = vcmp.eq.s32.totalorder %v45, %v60
  %vm75 = vcmp.eq.s32.totalorder %v45, %v63
  %vm76 = vcmp.eq.s32.totalorder %v45, %v66
  %vm77 = vcmp.eq.s32.totalorder %v45, %v69
  %v78 = vsel %vm70, 1, 0
  %v79 = vsel %vm71, 1, 0
  %v80 = vsel %vm72, 1, 0
  %v81 = vsel %vm73, 1, 0
  %v82 = vsel %vm74, 1, 0
  %v83 = vsel %vm75, 1, 0
  %v84 = vsel %vm76, 1, 0
  %v85 = vsel %vm77, 1, 0
  %v86 = vcvt.s32.f32 %v78
  %v87 = vcvt.s32.f32 %v79
  %v88 = vcvt.s32.f32 %v80
  %v89 = vcvt.s32.f32 %v81
  %v90 = vcvt.s32.f32 %v82
  %v91 = vcvt.s32.f32 %v83
  %v92 = vcvt.s32.f32 %v84
  %v93 = vcvt.s32.f32 %v85
  %v94 = vld [vmem:[%s1] sm:$0xff]
  %v95 = vld [vmem:[%s1 + $0x8] sm:$0xff]
  %v96 = vld [vmem:[%s1 + $0x10] sm:$0xff]
  %v97 = vld [vmem:[%s1 + $0x18] sm:$0xff]
  %v98 = vld [vmem:[%s1 + $0x20] sm:$0xff]
  %v99 = vld [vmem:[%s1 + $0x28] sm:$0xff]
  %v100 = vld [vmem:[%s1 + $0x30] sm:$0xff]
  %v101 = vld [vmem:[%s1 + $0x38] sm:$0xff]
  %v102 = vld [vmem:[%s1 + $0x40] sm:$0xff]
  %v103 = vld [vmem:[%s1 + $0x48] sm:$0xff]
  %v104 = vld [vmem:[%s1 + $0x50] sm:$0xff]
  %v105 = vld [vmem:[%s1 + $0x58] sm:$0xff]
  %v106 = vld [vmem:[%s1 + $0x60] sm:$0xff]
  %v107 = vld [vmem:[%s1 + $0x68] sm:$0xff]
  %v108 = vld [vmem:[%s1 + $0x70] sm:$0xff]
  %v109 = vld [vmem:[%s1 + $0x78] sm:$0xff]
  %110 = vmatprep.subr.mxu0 0.0
  %111 = vmatpush1.msra.mxu0 %v109
  %112 = vmatprep.subr.mxu0 0.0
  %113 = vmatpush1.msra.mxu0 %v108
  %114 = vmatprep.subr.mxu0 0.0
  %115 = vmatpush1.msra.mxu0 %v107
  %116 = vmatprep.subr.mxu0 0.0
  %117 = vmatpush1.msra.mxu0 %v106
  %118 = vmatprep.subr.mxu0 0.0
  %119 = vmatpush1.msra.mxu0 %v105
  %120 = vmatprep.subr.mxu0 0.0
  %121 = vmatpush1.msra.mxu0 %v104
  %122 = vmatprep.subr.mxu0 0.0
  %123 = vmatpush1.msra.mxu0 %v103
  %124 = vmatprep.subr.mxu0 0.0
  %125 = vmatpush1.msra.mxu0 %v102
  %126 = vmatprep.subr.mxu0 0.0
  %127 = vmatpush1.msra.mxu0 %v101
  %128 = vmatprep.subr.mxu0 0.0
  %129 = vmatpush1.msra.mxu0 %v100
  %130 = vmatprep.subr.mxu0 0.0
  %131 = vmatpush1.msra.mxu0 %v99
  %132 = vmatprep.subr.mxu0 0.0
  %133 = vmatpush1.msra.mxu0 %v98
  %134 = vmatprep.subr.mxu0 0.0
  %135 = vmatpush1.msra.mxu0 %v97
  %136 = vmatprep.subr.mxu0 0.0
  %137 = vmatpush1.msra.mxu0 %v96
  %138 = vmatprep.subr.mxu0 0.0
  %139 = vmatpush1.msra.mxu0 %v95
  %140 = vmatprep.subr.mxu0 0.0
  %141 = vmatpush1.msra.mxu0 %v94
  %142 = vmatprep.subr.mxu0 0.0
  %143 = vmatpush2.msra.mxu0 0.0
  %144 = vmatprep.subr.mxu0 0.0
  %145 = vmatpush2.msra.mxu0 0.0
  %146 = vmatprep.subr.mxu0 0.0
  %147 = vmatpush2.msra.mxu0 0.0
  %148 = vmatprep.subr.mxu0 0.0
  %149 = vmatpush2.msra.mxu0 0.0
  %150 = vmatprep.subr.mxu0 0.0
  %151 = vmatpush2.msra.mxu0 0.0
  %152 = vmatprep.subr.mxu0 0.0
  %153 = vmatpush2.msra.mxu0 0.0
  %154 = vmatprep.subr.mxu0 0.0
  %155 = vmatpush2.msra.mxu0 0.0
  %156 = vmatprep.subr.mxu0 0.0
  %157 = vmatpush2.msra.mxu0 0.0
  %158 = vmatprep.subr.mxu0 0.0
  %159 = vmatpush2.msra.mxu0 0.0
  %160 = vmatprep.subr.mxu0 0.0
  %161 = vmatpush2.msra.mxu0 0.0
  %162 = vmatprep.subr.mxu0 0.0
  %163 = vmatpush2.msra.mxu0 0.0
  %164 = vmatprep.subr.mxu0 0.0
  %165 = vmatpush2.msra.mxu0 0.0
  %166 = vmatprep.subr.mxu0 0.0
  %167 = vmatpush2.msra.mxu0 0.0
  %168 = vmatprep.subr.mxu0 0.0
  %169 = vmatpush2.msra.mxu0 0.0
  %170 = vmatprep.subr.mxu0 0.0
  %171 = vmatpush2.msra.mxu0 0.0
  %172 = vmatprep.subr.mxu0 0.0
  %173 = vmatpush2.msra.mxu0 0.0
  %174 = vmatprep.mubr.f32.mxu0 0.0
  %175 = vmatmul.mubr.f32.gmra.mxu0 %v86
  %v176 = vpop.f32.mrf.mxu0
  %v177 = vadd.f32 0.0, %v176
  %v178 = vpop.f32.mrf.mxu0
  %179 = vmatprep.mubr.f32.mxu0 0.0
  %180 = vmatmul.mubr.f32.gmra.mxu0 %v87
  %v181 = vpop.f32.mrf.mxu0
  %v182 = vadd.f32 0.0, %v181
  %v183 = vpop.f32.mrf.mxu0
  %184 = vmatprep.mubr.f32.mxu0 0.0
  %185 = vmatmul.mubr.f32.gmra.mxu0 %v88
  %v186 = vpop.f32.mrf.mxu0
  %v187 = vadd.f32 0.0, %v186
  %v188 = vpop.f32.mrf.mxu0
  %189 = vmatprep.mubr.f32.mxu0 0.0
  %190 = vmatmul.mubr.f32.gmra.mxu0 %v89
  %v191 = vpop.f32.mrf.mxu0
  %v192 = vadd.f32 0.0, %v191
  %v193 = vpop.f32.mrf.mxu0
  %194 = vmatprep.mubr.f32.mxu0 0.0
  %195 = vmatmul.mubr.f32.gmra.mxu0 %v90
  %v196 = vpop.f32.mrf.mxu0
  %v197 = vadd.f32 0.0, %v196
  %v198 = vpop.f32.mrf.mxu0
  %199 = vmatprep.mubr.f32.mxu0 0.0
  %200 = vmatmul.mubr.f32.gmra.mxu0 %v91
  %v201 = vpop.f32.mrf.mxu0
  %v202 = vadd.f32 0.0, %v201
  %v203 = vpop.f32.mrf.mxu0
  %204 = vmatprep.mubr.f32.mxu0 0.0
  %205 = vmatmul.mubr.f32.gmra.mxu0 %v92
  %v206 = vpop.f32.mrf.mxu0
  %v207 = vadd.f32 0.0, %v206
  %v208 = vpop.f32.mrf.mxu0
  %209 = vmatprep.mubr.f32.mxu0 0.0
  %210 = vmatmul.mubr.f32.gmra.mxu0 %v93
  %v211 = vpop.f32.mrf.mxu0
  %v212 = vadd.f32 0.0, %v211
  %v213 = vpop.f32.mrf.mxu0
  %214 = vdwg.mxu0
  %215 = vst.msk [vmem:[#allocation2] sm:$0xff] %vm27, %v177
  %216 = vst.msk [vmem:[#allocation2 + $0x8] sm:$0xff] %vm27, %v182
  %217 = vst.msk [vmem:[#allocation2 + $0x10] sm:$0xff] %vm27, %v187
  %218 = vst.msk [vmem:[#allocation2 + $0x18] sm:$0xff] %vm27, %v192
  %219 = vst.msk [vmem:[#allocation2 + $0x20] sm:$0xff] %vm27, %v197
  %220 = vst.msk [vmem:[#allocation2 + $0x28] sm:$0xff] %vm27, %v202
  %221 = vst.msk [vmem:[#allocation2 + $0x30] sm:$0xff] %vm27, %v207
  %222 = vst.msk [vmem:[#allocation2 + $0x38] sm:$0xff] %vm27, %v212
  %vm223 = vcmp.ge.s32.totalorder %v45, 64
  %vm224 = vcmp.lt.s32.totalorder %v45, 96
  %vm225 = vmand %vm223, %vm224
  %v226 = vsel %vm225, 1.0, 0.5
  %v227 = vsel %vm225, 0.0, 0.5
  %v228 = vld [vmem:[#allocation2] sm:$0xff]
  %v229 = vld [vmem:[#allocation2 + $0x8] sm:$0xff]
  %v230 = vld [vmem:[#allocation2 + $0x10] sm:$0xff]
  %v231 = vld [vmem:[#allocation2 + $0x18] sm:$0xff]
  %v232 = vld [vmem:[#allocation2 + $0x20] sm:$0xff]
  %v233 = vld [vmem:[#allocation2 + $0x28] sm:$0xff]
  %v234 = vld [vmem:[#allocation2 + $0x30] sm:$0xff]
  %v235 = vld [vmem:[#allocation2 + $0x38] sm:$0xff]
  %v236 = vpack.c.bf16 %v229, %v228
  %v237 = vpack.c.bf16 %v231, %v230
  %v238 = vpack.c.bf16 %v233, %v232
  %v239 = vpack.c.bf16 %v235, %v234
  %v240 = vld [vmem:[%s2] sm:$0xf]
  %v241 = vld [vmem:[%s2 + $0x4] sm:$0xf]
  %v242 = vld [vmem:[%s2 + $0x8] sm:$0xf]
  %v243 = vld [vmem:[%s2 + $0xc] sm:$0xf]
  %v244 = vld [vmem:[%s2 + $0x10] sm:$0xf]
  %v245 = vld [vmem:[%s2 + $0x14] sm:$0xf]
  %v246 = vld [vmem:[%s2 + $0x18] sm:$0xf]
  %v247 = vld [vmem:[%s2 + $0x1c] sm:$0xf]
  %v248 = vld [vmem:[%s3] sm:$0xf]
  %v249 = vld [vmem:[%s3 + $0x4] sm:$0xf]
  %v250 = vld [vmem:[%s3 + $0x8] sm:$0xf]
  %v251 = vld [vmem:[%s3 + $0xc] sm:$0xf]
  %v252 = vld [vmem:[%s4] sm:$0x1]
  %v254 = vlaneseq
  %v255 = vshrl.u32 %v254, 7
  %v256 = vsub.s32 0, %v255
  %v257 = vrot.slane %v252, %v256
  %v267 = vunpack.c.l.b16 %v240
  %v268 = vunpack.c.l.b16 %v241
  %v269 = vunpack.c.l.b16 %v242
  %v270 = vunpack.c.l.b16 %v243
  %v271 = vunpack.c.l.b16 %v244
  %v272 = vunpack.c.l.b16 %v245
  %v273 = vunpack.c.l.b16 %v246
  %v274 = vunpack.c.l.b16 %v247
  %v275 = vpack.c.b16 %v268, %v267
  %v276 = vpack.c.b16 %v270, %v269
  %v277 = vpack.c.b16 %v272, %v271
  %v278 = vpack.c.b16 %v274, %v273
  %v284 = vsel %vm27, %v236, 0
  %v287 = vsel %vm27, %v237, 0
  %v290 = vsel %vm27, %v238, 0
  %v293 = vsel %vm27, %v239, 0
  %295 = vmatprep.subr.bf16.mxu0 0
  %296 = vmatpush1.bf16.msra.mxu0 0
  %297 = vmatprep.subr.bf16.mxu0 0
  %298 = vmatpush1.bf16.msra.mxu0 0
  %299 = vmatprep.subr.bf16.mxu0 0
  %300 = vmatpush1.bf16.msra.mxu0 0
  %301 = vmatprep.subr.bf16.mxu0 0
  %302 = vmatpush1.bf16.msra.mxu0 0
  %303 = vmatprep.subr.bf16.mxu0 0
  %304 = vmatpush1.bf16.msra.mxu0 %v278
  %305 = vmatprep.subr.bf16.mxu0 0
  %306 = vmatpush1.bf16.msra.mxu0 %v277
  %307 = vmatprep.subr.bf16.mxu0 0
  %308 = vmatpush1.bf16.msra.mxu0 %v276
  %309 = vmatprep.subr.bf16.mxu0 0
  %310 = vmatpush1.bf16.msra.mxu0 %v275
  %311 = vmatprep.subr.bf16.mxu0 0
  %312 = vmatpush2.bf16.msra.mxu0 0
  %313 = vmatprep.subr.bf16.mxu0 0
  %314 = vmatpush2.bf16.msra.mxu0 0
  %315 = vmatprep.subr.bf16.mxu0 0
  %316 = vmatpush2.bf16.msra.mxu0 0
  %317 = vmatprep.subr.bf16.mxu0 0
  %318 = vmatpush2.bf16.msra.mxu0 0
  %319 = vmatprep.subr.bf16.mxu0 0
  %320 = vmatpush2.bf16.msra.mxu0 0
  %321 = vmatprep.subr.bf16.mxu0 0
  %322 = vmatpush2.bf16.msra.mxu0 0
  %323 = vmatprep.subr.bf16.mxu0 0
  %324 = vmatpush2.bf16.msra.mxu0 0
  %325 = vmatprep.subr.bf16.mxu0 0
  %326 = vmatpush2.bf16.msra.mxu0 0
  %327 = vmatprep.mubr.bf16.mxu0 0
  %328 = vmatmul.mubr.bf16.gmra.mxu0 %v284
  %v329 = vpop.f32.mrf.mxu0
  %v330 = vadd.f32 %v257, %v329
  %v331 = vpop.f32.mrf.mxu0
  %v332 = vpop.f32.mrf.mxu0
  %v333 = vadd.f32 %v257, %v332
  %v334 = vpop.f32.mrf.mxu0
  %335 = vmatprep.mubr.bf16.mxu0 0
  %336 = vmatmul.mubr.bf16.gmra.mxu0 %v287
  %v337 = vpop.f32.mrf.mxu0
  %v338 = vadd.f32 %v257, %v337
  %v339 = vpop.f32.mrf.mxu0
  %v340 = vpop.f32.mrf.mxu0
  %v341 = vadd.f32 %v257, %v340
  %v342 = vpop.f32.mrf.mxu0
  %343 = vmatprep.mubr.bf16.mxu0 0
  %344 = vmatmul.mubr.bf16.gmra.mxu0 %v290
  %v345 = vpop.f32.mrf.mxu0
  %v346 = vadd.f32 %v257, %v345
  %v347 = vpop.f32.mrf.mxu0
  %v348 = vpop.f32.mrf.mxu0
  %v349 = vadd.f32 %v257, %v348
  %v350 = vpop.f32.mrf.mxu0
  %351 = vmatprep.mubr.bf16.mxu0 0
  %352 = vmatmul.mubr.bf16.gmra.mxu0 %v293
  %v353 = vpop.f32.mrf.mxu0
  %v354 = vadd.f32 %v257, %v353
  %v355 = vpop.f32.mrf.mxu0
  %v356 = vpop.f32.mrf.mxu0
  %v357 = vadd.f32 %v257, %v356
  %v358 = vpop.f32.mrf.mxu0
  %359 = vdwg.mxu0
  %v364 = vunpack.c.l.b16 %v248
  %v365 = vunpack.c.l.b16 %v249
  %v366 = vunpack.c.l.b16 %v250
  %v367 = vunpack.c.l.b16 %v251
  %v368 = vpack.c.b16 %v365, %v364
  %v369 = vpack.c.b16 %v367, %v366
  %vm372 = vcmask 261120
  %v374 = vsel %vm372, 0, 0
  %376 = vmatprep.subr.bf16.mxu0 0
  %377 = vmatpush1.bf16.msra.mxu0 0
  %378 = vmatprep.subr.bf16.mxu0 0
  %379 = vmatpush1.bf16.msra.mxu0 0
  %380 = vmatprep.subr.bf16.mxu0 0
  %381 = vmatpush1.bf16.msra.mxu0 0
  %382 = vmatprep.subr.bf16.mxu0 0
  %383 = vmatpush1.bf16.msra.mxu0 0
  %384 = vmatprep.subr.bf16.mxu0 0
  %385 = vmatpush1.bf16.msra.mxu0 0
  %386 = vmatprep.subr.bf16.mxu0 0
  %387 = vmatpush1.bf16.msra.mxu0 0
  %388 = vmatprep.subr.bf16.mxu0 0
  %389 = vmatpush1.bf16.msra.mxu0 %v369
  %390 = vmatprep.subr.bf16.mxu0 0
  %391 = vmatpush1.bf16.msra.mxu0 %v368
  %392 = vmatprep.subr.bf16.mxu0 0
  %393 = vmatpush2.bf16.msra.mxu0 0
  %394 = vmatprep.subr.bf16.mxu0 0
  %395 = vmatpush2.bf16.msra.mxu0 0
  %396 = vmatprep.subr.bf16.mxu0 0
  %397 = vmatpush2.bf16.msra.mxu0 0
  %398 = vmatprep.subr.bf16.mxu0 0
  %399 = vmatpush2.bf16.msra.mxu0 0
  %400 = vmatprep.subr.bf16.mxu0 0
  %401 = vmatpush2.bf16.msra.mxu0 0
  %402 = vmatprep.subr.bf16.mxu0 0
  %403 = vmatpush2.bf16.msra.mxu0 0
  %404 = vmatprep.subr.bf16.mxu0 0
  %405 = vmatpush2.bf16.msra.mxu0 0
  %406 = vmatprep.subr.bf16.mxu0 0
  %407 = vmatpush2.bf16.msra.mxu0 0
  %408 = vmatprep.mubr.bf16.mxu0 0
  %409 = vmatmul.mubr.bf16.gmra.mxu0 %v374
  %v410 = vpop.f32.mrf.mxu0
  %v411 = vadd.f32 0.0, %v410
  %v412 = vpop.f32.mrf.mxu0
  %v413 = vpop.f32.mrf.mxu0
  %v414 = vpop.f32.mrf.mxu0
  %415 = vdwg.mxu0
  %v416 = vadd.f32 %v330, %v411
  %v417 = vmul.f32 %v416, %v226
  %v418 = vtanh.pop %v417
  %v419 = vmul.f32 %v418, %v226
  %v420 = vadd.f32 %v419, %v227
  %v421 = vmul.f32 %v420, 0.0
  %423 = vrot.lane.b32.xlu0 %v420, 64
  %v424 = vpop.permute.xlu0 %423
  %v426 = vmul.f32 %v420, %v424
  %428 = vrot.lane.b32.xlu0 %v426, 32
  %v429 = vpop.permute.xlu0 %428
  %v431 = vadd.f32 %v421, %v429
  %v432 = vtanh.pop %v431
  %434 = vrot.lane.b32.xlu0 %v432, 64
  %v435 = vpop.permute.xlu0 %434
  %v437 = vmul.f32 %v420, %v435
  %439 = vrot.lane.b32.xlu0 %v437, 32
  %v440 = vpop.permute.xlu0 %439
  %442 = vst.msk [vmem:[#allocation3] sm:$0xff] %vm372, %v440
  %v443 = vpack.c.bf16 %v437, %v437
  %445 = vrot.lane.b32.xlu0 %v443, 32
  %v446 = vpop.permute.xlu0 %445
  %v448 = vsel %vm372, %v446, 0
  %450 = vmatprep.subr.bf16.mxu0 0
  %451 = vmatpush1.bf16.msra.mxu0 0
  %452 = vmatprep.subr.bf16.mxu0 0
  %453 = vmatpush1.bf16.msra.mxu0 0
  %454 = vmatprep.subr.bf16.mxu0 0
  %455 = vmatpush1.bf16.msra.mxu0 0
  %456 = vmatprep.subr.bf16.mxu0 0
  %457 = vmatpush1.bf16.msra.mxu0 0
  %458 = vmatprep.subr.bf16.mxu0 0
  %459 = vmatpush1.bf16.msra.mxu0 0
  %460 = vmatprep.subr.bf16.mxu0 0
  %461 = vmatpush1.bf16.msra.mxu0 0
  %462 = vmatprep.subr.bf16.mxu0 0
  %463 = vmatpush1.bf16.msra.mxu0 %v369
  %464 = vmatprep.subr.bf16.mxu0 0
  %465 = vmatpush1.bf16.msra.mxu0 %v368
  %466 = vmatprep.subr.bf16.mxu0 0
  %467 = vmatpush2.bf16.msra.mxu0 0
  %468 = vmatprep.subr.bf16.mxu0 0
  %469 = vmatpush2.bf16.msra.mxu0 0
  %470 = vmatprep.subr.bf16.mxu0 0
  %471 = vmatpush2.bf16.msra.mxu0 0
  %472 = vmatprep.subr.bf16.mxu0 0
  %473 = vmatpush2.bf16.msra.mxu0 0
  %474 = vmatprep.subr.bf16.mxu0 0
  %475 = vmatpush2.bf16.msra.mxu0 0
  %476 = vmatprep.subr.bf16.mxu0 0
  %477 = vmatpush2.bf16.msra.mxu0 0
  %478 = vmatprep.subr.bf16.mxu0 0
  %479 = vmatpush2.bf16.msra.mxu0 0
  %480 = vmatprep.subr.bf16.mxu0 0
  %481 = vmatpush2.bf16.msra.mxu0 0
  %482 = vmatprep.mubr.bf16.mxu0 0
  %483 = vmatmul.mubr.bf16.gmra.mxu0 %v448
  %v484 = vpop.f32.mrf.mxu0
  %v485 = vadd.f32 0.0, %v484
  %v486 = vpop.f32.mrf.mxu0
  %v487 = vpop.f32.mrf.mxu0
  %v488 = vpop.f32.mrf.mxu0
  %489 = vdwg.mxu0
  %v490 = vadd.f32 %v333, %v485
  %v491 = vmul.f32 %v490, %v226
  %v492 = vtanh.pop %v491
  %v493 = vmul.f32 %v492, %v226
  %v494 = vadd.f32 %v493, %v227
  %v495 = vmul.f32 %v494, %v431
  %497 = vrot.lane.b32.xlu0 %v494, 64
  %v498 = vpop.permute.xlu0 %497
  %v500 = vmul.f32 %v494, %v498
  %502 = vrot.lane.b32.xlu0 %v500, 32
  %v503 = vpop.permute.xlu0 %502
  %v505 = vadd.f32 %v495, %v503
  %v506 = vtanh.pop %v505
  %508 = vrot.lane.b32.xlu0 %v506, 64
  %v509 = vpop.permute.xlu0 %508
  %v511 = vmul.f32 %v494, %v509
  %513 = vrot.lane.b32.xlu0 %v511, 32
  %v514 = vpop.permute.xlu0 %513
  %516 = vst.msk [vmem:[#allocation3 + $0x8] sm:$0xff] %vm372, %v514
  %v517 = vpack.c.bf16 %v511, %v511
  %519 = vrot.lane.b32.xlu0 %v517, 32
  %v520 = vpop.permute.xlu0 %519
  %v522 = vsel %vm372, %v520, 0
  %524 = vmatprep.subr.bf16.mxu0 0
  %525 = vmatpush1.bf16.msra.mxu0 0
  %526 = vmatprep.subr.bf16.mxu0 0
  %527 = vmatpush1.bf16.msra.mxu0 0
  %528 = vmatprep.subr.bf16.mxu0 0
  %529 = vmatpush1.bf16.msra.mxu0 0
  %530 = vmatprep.subr.bf16.mxu0 0
  %531 = vmatpush1.bf16.msra.mxu0 0
  %532 = vmatprep.subr.bf16.mxu0 0
  %533 = vmatpush1.bf16.msra.mxu0 0
  %534 = vmatprep.subr.bf16.mxu0 0
  %535 = vmatpush1.bf16.msra.mxu0 0
  %536 = vmatprep.subr.bf16.mxu0 0
  %537 = vmatpush1.bf16.msra.mxu0 %v369
  %538 = vmatprep.subr.bf16.mxu0 0
  %539 = vmatpush1.bf16.msra.mxu0 %v368
  %540 = vmatprep.subr.bf16.mxu0 0
  %541 = vmatpush2.bf16.msra.mxu0 0
  %542 = vmatprep.subr.bf16.mxu0 0
  %543 = vmatpush2.bf16.msra.mxu0 0
  %544 = vmatprep.subr.bf16.mxu0 0
  %545 = vmatpush2.bf16.msra.mxu0 0
  %546 = vmatprep.subr.bf16.mxu0 0
  %547 = vmatpush2.bf16.msra.mxu0 0
  %548 = vmatprep.subr.bf16.mxu0 0
  %549 = vmatpush2.bf16.msra.mxu0 0
  %550 = vmatprep.subr.bf16.mxu0 0
  %551 = vmatpush2.bf16.msra.mxu0 0
  %552 = vmatprep.subr.bf16.mxu0 0
  %553 = vmatpush2.bf16.msra.mxu0 0
  %554 = vmatprep.subr.bf16.mxu0 0
  %555 = vmatpush2.bf16.msra.mxu0 0
  %556 = vmatprep.mubr.bf16.mxu0 0
  %557 = vmatmul.mubr.bf16.gmra.mxu0 %v522
  %v558 = vpop.f32.mrf.mxu0
  %v559 = vadd.f32 0.0, %v558
  %v560 = vpop.f32.mrf.mxu0
  %v561 = vpop.f32.mrf.mxu0
  %v562 = vpop.f32.mrf.mxu0
  %563 = vdwg.mxu0
  %v564 = vadd.f32 %v338, %v559
  %v565 = vmul.f32 %v564, %v226
  %v566 = vtanh.pop %v565
  %v567 = vmul.f32 %v566, %v226
  %v568 = vadd.f32 %v567, %v227
  %v569 = vmul.f32 %v568, %v505
  %571 = vrot.lane.b32.xlu0 %v568, 64
  %v572 = vpop.permute.xlu0 %571
  %v574 = vmul.f32 %v568, %v572
  %576 = vrot.lane.b32.xlu0 %v574, 32
  %v577 = vpop.permute.xlu0 %576
  %v579 = vadd.f32 %v569, %v577
  %v580 = vtanh.pop %v579
  %582 = vrot.lane.b32.xlu0 %v580, 64
  %v583 = vpop.permute.xlu0 %582
  %v585 = vmul.f32 %v568, %v583
  %587 = vrot.lane.b32.xlu0 %v585, 32
  %v588 = vpop.permute.xlu0 %587
  %590 = vst.msk [vmem:[#allocation3 + $0x10] sm:$0xff] %vm372, %v588
  %v591 = vpack.c.bf16 %v585, %v585
  %593 = vrot.lane.b32.xlu0 %v591, 32
  %v594 = vpop.permute.xlu0 %593
  %v596 = vsel %vm372, %v594, 0
  %598 = vmatprep.subr.bf16.mxu0 0
  %599 = vmatpush1.bf16.msra.mxu0 0
  %600 = vmatprep.subr.bf16.mxu0 0
  %601 = vmatpush1.bf16.msra.mxu0 0
  %602 = vmatprep.subr.bf16.mxu0 0
  %603 = vmatpush1.bf16.msra.mxu0 0
  %604 = vmatprep.subr.bf16.mxu0 0
  %605 = vmatpush1.bf16.msra.mxu0 0
  %606 = vmatprep.subr.bf16.mxu0 0
  %607 = vmatpush1.bf16.msra.mxu0 0
  %608 = vmatprep.subr.bf16.mxu0 0
  %609 = vmatpush1.bf16.msra.mxu0 0
  %610 = vmatprep.subr.bf16.mxu0 0
  %611 = vmatpush1.bf16.msra.mxu0 %v369
  %612 = vmatprep.subr.bf16.mxu0 0
  %613 = vmatpush1.bf16.msra.mxu0 %v368
  %614 = vmatprep.subr.bf16.mxu0 0
  %615 = vmatpush2.bf16.msra.mxu0 0
  %616 = vmatprep.subr.bf16.mxu0 0
  %617 = vmatpush2.bf16.msra.mxu0 0
  %618 = vmatprep.subr.bf16.mxu0 0
  %619 = vmatpush2.bf16.msra.mxu0 0
  %620 = vmatprep.subr.bf16.mxu0 0
  %621 = vmatpush2.bf16.msra.mxu0 0
  %622 = vmatprep.subr.bf16.mxu0 0
  %623 = vmatpush2.bf16.msra.mxu0 0
  %624 = vmatprep.subr.bf16.mxu0 0
  %625 = vmatpush2.bf16.msra.mxu0 0
  %626 = vmatprep.subr.bf16.mxu0 0
  %627 = vmatpush2.bf16.msra.mxu0 0
  %628 = vmatprep.subr.bf16.mxu0 0
  %629 = vmatpush2.bf16.msra.mxu0 0
  %630 = vmatprep.mubr.bf16.mxu0 0
  %631 = vmatmul.mubr.bf16.gmra.mxu0 %v596
  %v632 = vpop.f32.mrf.mxu0
  %v633 = vadd.f32 0.0, %v632
  %v634 = vpop.f32.mrf.mxu0
  %v635 = vpop.f32.mrf.mxu0
  %v636 = vpop.f32.mrf.mxu0
  %637 = vdwg.mxu0
  %v638 = vadd.f32 %v341, %v633
  %v639 = vmul.f32 %v638, %v226
  %v640 = vtanh.pop %v639
  %v641 = vmul.f32 %v640, %v226
  %v642 = vadd.f32 %v641, %v227
  %v643 = vmul.f32 %v642, %v579
  %645 = vrot.lane.b32.xlu0 %v642, 64
  %v646 = vpop.permute.xlu0 %645
  %v648 = vmul.f32 %v642, %v646
  %650 = vrot.lane.b32.xlu0 %v648, 32
  %v651 = vpop.permute.xlu0 %650
  %v653 = vadd.f32 %v643, %v651
  %v654 = vtanh.pop %v653
  %656 = vrot.lane.b32.xlu0 %v654, 64
  %v657 = vpop.permute.xlu0 %656
  %v659 = vmul.f32 %v642, %v657
  %661 = vrot.lane.b32.xlu0 %v659, 32
  %v662 = vpop.permute.xlu0 %661
  %664 = vst.msk [vmem:[#allocation3 + $0x18] sm:$0xff] %vm372, %v662
  %v665 = vpack.c.bf16 %v659, %v659
  %667 = vrot.lane.b32.xlu0 %v665, 32
  %v668 = vpop.permute.xlu0 %667
  %v670 = vsel %vm372, %v668, 0
  %672 = vmatprep.subr.bf16.mxu0 0
  %673 = vmatpush1.bf16.msra.mxu0 0
  %674 = vmatprep.subr.bf16.mxu0 0
  %675 = vmatpush1.bf16.msra.mxu0 0
  %676 = vmatprep.subr.bf16.mxu0 0
  %677 = vmatpush1.bf16.msra.mxu0 0
  %678 = vmatprep.subr.bf16.mxu0 0
  %679 = vmatpush1.bf16.msra.mxu0 0
  %680 = vmatprep.subr.bf16.mxu0 0
  %681 = vmatpush1.bf16.msra.mxu0 0
  %682 = vmatprep.subr.bf16.mxu0 0
  %683 = vmatpush1.bf16.msra.mxu0 0
  %684 = vmatprep.subr.bf16.mxu0 0
  %685 = vmatpush1.bf16.msra.mxu0 %v369
  %686 = vmatprep.subr.bf16.mxu0 0
  %687 = vmatpush1.bf16.msra.mxu0 %v368
  %688 = vmatprep.subr.bf16.mxu0 0
  %689 = vmatpush2.bf16.msra.mxu0 0
  %690 = vmatprep.subr.bf16.mxu0 0
  %691 = vmatpush2.bf16.msra.mxu0 0
  %692 = vmatprep.subr.bf16.mxu0 0
  %693 = vmatpush2.bf16.msra.mxu0 0
  %694 = vmatprep.subr.bf16.mxu0 0
  %695 = vmatpush2.bf16.msra.mxu0 0
  %696 = vmatprep.subr.bf16.mxu0 0
  %697 = vmatpush2.bf16.msra.mxu0 0
  %698 = vmatprep.subr.bf16.mxu0 0
  %699 = vmatpush2.bf16.msra.mxu0 0
  %700 = vmatprep.subr.bf16.mxu0 0
  %701 = vmatpush2.bf16.msra.mxu0 0
  %702 = vmatprep.subr.bf16.mxu0 0
  %703 = vmatpush2.bf16.msra.mxu0 0
  %704 = vmatprep.mubr.bf16.mxu0 0
  %705 = vmatmul.mubr.bf16.gmra.mxu0 %v670
  %v706 = vpop.f32.mrf.mxu0
  %v707 = vadd.f32 0.0, %v706
  %v708 = vpop.f32.mrf.mxu0
  %v709 = vpop.f32.mrf.mxu0
  %v710 = vpop.f32.mrf.mxu0
  %711 = vdwg.mxu0
  %v712 = vadd.f32 %v346, %v707
  %v713 = vmul.f32 %v712, %v226
  %v714 = vtanh.pop %v713
  %v715 = vmul.f32 %v714, %v226
  %v716 = vadd.f32 %v715, %v227
  %v717 = vmul.f32 %v716, %v653
  %719 = vrot.lane.b32.xlu0 %v716, 64
  %v720 = vpop.permute.xlu0 %719
  %v722 = vmul.f32 %v716, %v720
  %724 = vrot.lane.b32.xlu0 %v722, 32
  %v725 = vpop.permute.xlu0 %724
  %v727 = vadd.f32 %v717, %v725
  %v728 = vtanh.pop %v727
  %730 = vrot.lane.b32.xlu0 %v728, 64
  %v731 = vpop.permute.xlu0 %730
  %v733 = vmul.f32 %v716, %v731
  %735 = vrot.lane.b32.xlu0 %v733, 32
  %v736 = vpop.permute.xlu0 %735
  %738 = vst.msk [vmem:[#allocation3 + $0x20] sm:$0xff] %vm372, %v736
  %v739 = vpack.c.bf16 %v733, %v733
  %741 = vrot.lane.b32.xlu0 %v739, 32
  %v742 = vpop.permute.xlu0 %741
  %v744 = vsel %vm372, %v742, 0
  %746 = vmatprep.subr.bf16.mxu0 0
  %747 = vmatpush1.bf16.msra.mxu0 0
  %748 = vmatprep.subr.bf16.mxu0 0
  %749 = vmatpush1.bf16.msra.mxu0 0
  %750 = vmatprep.subr.bf16.mxu0 0
  %751 = vmatpush1.bf16.msra.mxu0 0
  %752 = vmatprep.subr.bf16.mxu0 0
  %753 = vmatpush1.bf16.msra.mxu0 0
  %754 = vmatprep.subr.bf16.mxu0 0
  %755 = vmatpush1.bf16.msra.mxu0 0
  %756 = vmatprep.subr.bf16.mxu0 0
  %757 = vmatpush1.bf16.msra.mxu0 0
  %758 = vmatprep.subr.bf16.mxu0 0
  %759 = vmatpush1.bf16.msra.mxu0 %v369
  %760 = vmatprep.subr.bf16.mxu0 0
  %761 = vmatpush1.bf16.msra.mxu0 %v368
  %762 = vmatprep.subr.bf16.mxu0 0
  %763 = vmatpush2.bf16.msra.mxu0 0
  %764 = vmatprep.subr.bf16.mxu0 0
  %765 = vmatpush2.bf16.msra.mxu0 0
  %766 = vmatprep.subr.bf16.mxu0 0
  %767 = vmatpush2.bf16.msra.mxu0 0
  %768 = vmatprep.subr.bf16.mxu0 0
  %769 = vmatpush2.bf16.msra.mxu0 0
  %770 = vmatprep.subr.bf16.mxu0 0
  %771 = vmatpush2.bf16.msra.mxu0 0
  %772 = vmatprep.subr.bf16.mxu0 0
  %773 = vmatpush2.bf16.msra.mxu0 0
  %774 = vmatprep.subr.bf16.mxu0 0
  %775 = vmatpush2.bf16.msra.mxu0 0
  %776 = vmatprep.subr.bf16.mxu0 0
  %777 = vmatpush2.bf16.msra.mxu0 0
  %778 = vmatprep.mubr.bf16.mxu0 0
  %779 = vmatmul.mubr.bf16.gmra.mxu0 %v744
  %v780 = vpop.f32.mrf.mxu0
  %v781 = vadd.f32 0.0, %v780
  %v782 = vpop.f32.mrf.mxu0
  %v783 = vpop.f32.mrf.mxu0
  %v784 = vpop.f32.mrf.mxu0
  %785 = vdwg.mxu0
  %v786 = vadd.f32 %v349, %v781
  %v787 = vmul.f32 %v786, %v226
  %v788 = vtanh.pop %v787
  %v789 = vmul.f32 %v788, %v226
  %v790 = vadd.f32 %v789, %v227
  %v791 = vmul.f32 %v790, %v727
  %793 = vrot.lane.b32.xlu0 %v790, 64
  %v794 = vpop.permute.xlu0 %793
  %v796 = vmul.f32 %v790, %v794
  %798 = vrot.lane.b32.xlu0 %v796, 32
  %v799 = vpop.permute.xlu0 %798
  %v801 = vadd.f32 %v791, %v799
  %v802 = vtanh.pop %v801
  %804 = vrot.lane.b32.xlu0 %v802, 64
  %v805 = vpop.permute.xlu0 %804
  %v807 = vmul.f32 %v790, %v805
  %809 = vrot.lane.b32.xlu0 %v807, 32
  %v810 = vpop.permute.xlu0 %809
  %812 = vst.msk [vmem:[#allocation3 + $0x28] sm:$0xff] %vm372, %v810
  %v813 = vpack.c.bf16 %v807, %v807
  %815 = vrot.lane.b32.xlu0 %v813, 32
  %v816 = vpop.permute.xlu0 %815
  %v818 = vsel %vm372, %v816, 0
  %820 = vmatprep.subr.bf16.mxu0 0
  %821 = vmatpush1.bf16.msra.mxu0 0
  %822 = vmatprep.subr.bf16.mxu0 0
  %823 = vmatpush1.bf16.msra.mxu0 0
  %824 = vmatprep.subr.bf16.mxu0 0
  %825 = vmatpush1.bf16.msra.mxu0 0
  %826 = vmatprep.subr.bf16.mxu0 0
  %827 = vmatpush1.bf16.msra.mxu0 0
  %828 = vmatprep.subr.bf16.mxu0 0
  %829 = vmatpush1.bf16.msra.mxu0 0
  %830 = vmatprep.subr.bf16.mxu0 0
  %831 = vmatpush1.bf16.msra.mxu0 0
  %832 = vmatprep.subr.bf16.mxu0 0
  %833 = vmatpush1.bf16.msra.mxu0 %v369
  %834 = vmatprep.subr.bf16.mxu0 0
  %835 = vmatpush1.bf16.msra.mxu0 %v368
  %836 = vmatprep.subr.bf16.mxu0 0
  %837 = vmatpush2.bf16.msra.mxu0 0
  %838 = vmatprep.subr.bf16.mxu0 0
  %839 = vmatpush2.bf16.msra.mxu0 0
  %840 = vmatprep.subr.bf16.mxu0 0
  %841 = vmatpush2.bf16.msra.mxu0 0
  %842 = vmatprep.subr.bf16.mxu0 0
  %843 = vmatpush2.bf16.msra.mxu0 0
  %844 = vmatprep.subr.bf16.mxu0 0
  %845 = vmatpush2.bf16.msra.mxu0 0
  %846 = vmatprep.subr.bf16.mxu0 0
  %847 = vmatpush2.bf16.msra.mxu0 0
  %848 = vmatprep.subr.bf16.mxu0 0
  %849 = vmatpush2.bf16.msra.mxu0 0
  %850 = vmatprep.subr.bf16.mxu0 0
  %851 = vmatpush2.bf16.msra.mxu0 0
  %852 = vmatprep.mubr.bf16.mxu0 0
  %853 = vmatmul.mubr.bf16.gmra.mxu0 %v818
  %v854 = vpop.f32.mrf.mxu0
  %v855 = vadd.f32 0.0, %v854
  %v856 = vpop.f32.mrf.mxu0
  %v857 = vpop.f32.mrf.mxu0
  %v858 = vpop.f32.mrf.mxu0
  %859 = vdwg.mxu0
  %v860 = vadd.f32 %v354, %v855
  %v861 = vmul.f32 %v860, %v226
  %v862 = vtanh.pop %v861
  %v863 = vmul.f32 %v862, %v226
  %v864 = vadd.f32 %v863, %v227
  %v865 = vmul.f32 %v864, %v801
  %867 = vrot.lane.b32.xlu0 %v864, 64
  %v868 = vpop.permute.xlu0 %867
  %v870 = vmul.f32 %v864, %v868
  %872 = vrot.lane.b32.xlu0 %v870, 32
  %v873 = vpop.permute.xlu0 %872
  %v875 = vadd.f32 %v865, %v873
  %v876 = vtanh.pop %v875
  %878 = vrot.lane.b32.xlu0 %v876, 64
  %v879 = vpop.permute.xlu0 %878
  %v881 = vmul.f32 %v864, %v879
  %883 = vrot.lane.b32.xlu0 %v881, 32
  %v884 = vpop.permute.xlu0 %883
  %886 = vst.msk [vmem:[#allocation3 + $0x30] sm:$0xff] %vm372, %v884
  %v887 = vpack.c.bf16 %v881, %v881
  %889 = vrot.lane.b32.xlu0 %v887, 32
  %v890 = vpop.permute.xlu0 %889
  %v892 = vsel %vm372, %v890, 0
  %894 = vmatprep.subr.bf16.mxu0 0
  %895 = vmatpush1.bf16.msra.mxu0 0
  %896 = vmatprep.subr.bf16.mxu0 0
  %897 = vmatpush1.bf16.msra.mxu0 0
  %898 = vmatprep.subr.bf16.mxu0 0
  %899 = vmatpush1.bf16.msra.mxu0 0
  %900 = vmatprep.subr.bf16.mxu0 0
  %901 = vmatpush1.bf16.msra.mxu0 0
  %902 = vmatprep.subr.bf16.mxu0 0
  %903 = vmatpush1.bf16.msra.mxu0 0
  %904 = vmatprep.subr.bf16.mxu0 0
  %905 = vmatpush1.bf16.msra.mxu0 0
  %906 = vmatprep.subr.bf16.mxu0 0
  %907 = vmatpush1.bf16.msra.mxu0 %v369
  %908 = vmatprep.subr.bf16.mxu0 0
  %909 = vmatpush1.bf16.msra.mxu0 %v368
  %910 = vmatprep.subr.bf16.mxu0 0
  %911 = vmatpush2.bf16.msra.mxu0 0
  %912 = vmatprep.subr.bf16.mxu0 0
  %913 = vmatpush2.bf16.msra.mxu0 0
  %914 = vmatprep.subr.bf16.mxu0 0
  %915 = vmatpush2.bf16.msra.mxu0 0
  %916 = vmatprep.subr.bf16.mxu0 0
  %917 = vmatpush2.bf16.msra.mxu0 0
  %918 = vmatprep.subr.bf16.mxu0 0
  %919 = vmatpush2.bf16.msra.mxu0 0
  %920 = vmatprep.subr.bf16.mxu0 0
  %921 = vmatpush2.bf16.msra.mxu0 0
  %922 = vmatprep.subr.bf16.mxu0 0
  %923 = vmatpush2.bf16.msra.mxu0 0
  %924 = vmatprep.subr.bf16.mxu0 0
  %925 = vmatpush2.bf16.msra.mxu0 0
  %926 = vmatprep.mubr.bf16.mxu0 0
  %927 = vmatmul.mubr.bf16.gmra.mxu0 %v892
  %v928 = vpop.f32.mrf.mxu0
  %v929 = vadd.f32 0.0, %v928
  %v930 = vpop.f32.mrf.mxu0
  %v931 = vpop.f32.mrf.mxu0
  %v932 = vpop.f32.mrf.mxu0
  %933 = vdwg.mxu0
  %v934 = vadd.f32 %v357, %v929
  %v935 = vmul.f32 %v934, %v226
  %v936 = vtanh.pop %v935
  %v937 = vmul.f32 %v936, %v226
  %v938 = vadd.f32 %v937, %v227
  %v939 = vmul.f32 %v938, %v875
  %941 = vrot.lane.b32.xlu0 %v938, 64
  %v942 = vpop.permute.xlu0 %941
  %v944 = vmul.f32 %v938, %v942
  %946 = vrot.lane.b32.xlu0 %v944, 32
  %v947 = vpop.permute.xlu0 %946
  %v949 = vadd.f32 %v939, %v947
  %v950 = vtanh.pop %v949
  %952 = vrot.lane.b32.xlu0 %v950, 64
  %v953 = vpop.permute.xlu0 %952
  %v955 = vmul.f32 %v938, %v953
  %957 = vrot.lane.b32.xlu0 %v955, 32
  %v958 = vpop.permute.xlu0 %957
  %960 = vst.msk [vmem:[#allocation3 + $0x38] sm:$0xff] %vm372, %v958
  %s961 = scalar_lea.vmem %s2, 32
  %v962 = vld [vmem:[%s961] sm:$0xf]
  %v963 = vld [vmem:[%s961 + $0x4] sm:$0xf]
  %v964 = vld [vmem:[%s961 + $0x8] sm:$0xf]
  %v965 = vld [vmem:[%s961 + $0xc] sm:$0xf]
  %v966 = vld [vmem:[%s961 + $0x10] sm:$0xf]
  %v967 = vld [vmem:[%s961 + $0x14] sm:$0xf]
  %v968 = vld [vmem:[%s961 + $0x18] sm:$0xf]
  %v969 = vld [vmem:[%s961 + $0x1c] sm:$0xf]
  %s970 = scalar_lea.vmem %s3, 16
  %v971 = vld [vmem:[%s970] sm:$0xf]
  %v972 = vld [vmem:[%s970 + $0x4] sm:$0xf]
  %v973 = vld [vmem:[%s970 + $0x8] sm:$0xf]
  %v974 = vld [vmem:[%s970 + $0xc] sm:$0xf]
  %s975 = scalar_lea.vmem %s4, 1
  %v976 = vld [vmem:[%s975] sm:$0x1]
  %v978 = vlaneseq
  %v979 = vshrl.u32 %v978, 7
  %v980 = vsub.s32 0, %v979
  %v981 = vrot.slane %v976, %v980
  %v991 = vunpack.c.l.b16 %v962
  %v992 = vunpack.c.l.b16 %v963
  %v993 = vunpack.c.l.b16 %v964
  %v994 = vunpack.c.l.b16 %v965
  %v995 = vunpack.c.l.b16 %v966
  %v996 = vunpack.c.l.b16 %v967
  %v997 = vunpack.c.l.b16 %v968
  %v998 = vunpack.c.l.b16 %v969
  %v999 = vpack.c.b16 %v992, %v991
  %v1000 = vpack.c.b16 %v994, %v993
  %v1001 = vpack.c.b16 %v996, %v995
  %v1002 = vpack.c.b16 %v998, %v997
  %1007 = vmatprep.subr.bf16.mxu0 0
  %1008 = vmatpush1.bf16.msra.mxu0 0
  %1009 = vmatprep.subr.bf16.mxu0 0
  %1010 = vmatpush1.bf16.msra.mxu0 0
  %1011 = vmatprep.subr.bf16.mxu0 0
  %1012 = vmatpush1.bf16.msra.mxu0 0
  %1013 = vmatprep.subr.bf16.mxu0 0
  %1014 = vmatpush1.bf16.msra.mxu0 0
  %1015 = vmatprep.subr.bf16.mxu0 0
  %1016 = vmatpush1.bf16.msra.mxu0 %v1002
  %1017 = vmatprep.subr.bf16.mxu0 0
  %1018 = vmatpush1.bf16.msra.mxu0 %v1001
  %1019 = vmatprep.subr.bf16.mxu0 0
  %1020 = vmatpush1.bf16.msra.mxu0 %v1000
  %1021 = vmatprep.subr.bf16.mxu0 0
  %1022 = vmatpush1.bf16.msra.mxu0 %v999
  %1023 = vmatprep.subr.bf16.mxu0 0
  %1024 = vmatpush2.bf16.msra.mxu0 0
  %1025 = vmatprep.subr.bf16.mxu0 0
  %1026 = vmatpush2.bf16.msra.mxu0 0
  %1027 = vmatprep.subr.bf16.mxu0 0
  %1028 = vmatpush2.bf16.msra.mxu0 0
  %1029 = vmatprep.subr.bf16.mxu0 0
  %1030 = vmatpush2.bf16.msra.mxu0 0
  %1031 = vmatprep.subr.bf16.mxu0 0
  %1032 = vmatpush2.bf16.msra.mxu0 0
  %1033 = vmatprep.subr.bf16.mxu0 0
  %1034 = vmatpush2.bf16.msra.mxu0 0
  %1035 = vmatprep.subr.bf16.mxu0 0
  %1036 = vmatpush2.bf16.msra.mxu0 0
  %1037 = vmatprep.subr.bf16.mxu0 0
  %1038 = vmatpush2.bf16.msra.mxu0 0
  %1039 = vmatprep.mubr.bf16.mxu0 0
  %1040 = vmatmul.mubr.bf16.gmra.mxu0 %v284
  %v1041 = vpop.f32.mrf.mxu0
  %v1042 = vadd.f32 %v981, %v1041
  %v1043 = vpop.f32.mrf.mxu0
  %v1044 = vpop.f32.mrf.mxu0
  %v1045 = vadd.f32 %v981, %v1044
  %v1046 = vpop.f32.mrf.mxu0
  %1047 = vmatprep.mubr.bf16.mxu0 0
  %1048 = vmatmul.mubr.bf16.gmra.mxu0 %v287
  %v1049 = vpop.f32.mrf.mxu0
  %v1050 = vadd.f32 %v981, %v1049
  %v1051 = vpop.f32.mrf.mxu0
  %v1052 = vpop.f32.mrf.mxu0
  %v1053 = vadd.f32 %v981, %v1052
  %v1054 = vpop.f32.mrf.mxu0
  %1055 = vmatprep.mubr.bf16.mxu0 0
  %1056 = vmatmul.mubr.bf16.gmra.mxu0 %v290
  %v1057 = vpop.f32.mrf.mxu0
  %v1058 = vadd.f32 %v981, %v1057
  %v1059 = vpop.f32.mrf.mxu0
  %v1060 = vpop.f32.mrf.mxu0
  %v1061 = vadd.f32 %v981, %v1060
  %v1062 = vpop.f32.mrf.mxu0
  %1063 = vmatprep.mubr.bf16.mxu0 0
  %1064 = vmatmul.mubr.bf16.gmra.mxu0 %v293
  %v1065 = vpop.f32.mrf.mxu0
  %v1066 = vadd.f32 %v981, %v1065
  %v1067 = vpop.f32.mrf.mxu0
  %v1068 = vpop.f32.mrf.mxu0
  %v1069 = vadd.f32 %v981, %v1068
  %v1070 = vpop.f32.mrf.mxu0
  %1071 = vdwg.mxu0
  %v1076 = vunpack.c.l.b16 %v971
  %v1077 = vunpack.c.l.b16 %v972
  %v1078 = vunpack.c.l.b16 %v973
  %v1079 = vunpack.c.l.b16 %v974
  %v1080 = vpack.c.b16 %v1077, %v1076
  %v1081 = vpack.c.b16 %v1079, %v1078
  %1084 = vmatprep.subr.bf16.mxu0 0
  %1085 = vmatpush1.bf16.msra.mxu0 0
  %1086 = vmatprep.subr.bf16.mxu0 0
  %1087 = vmatpush1.bf16.msra.mxu0 0
  %1088 = vmatprep.subr.bf16.mxu0 0
  %1089 = vmatpush1.bf16.msra.mxu0 0
  %1090 = vmatprep.subr.bf16.mxu0 0
  %1091 = vmatpush1.bf16.msra.mxu0 0
  %1092 = vmatprep.subr.bf16.mxu0 0
  %1093 = vmatpush1.bf16.msra.mxu0 0
  %1094 = vmatprep.subr.bf16.mxu0 0
  %1095 = vmatpush1.bf16.msra.mxu0 0
  %1096 = vmatprep.subr.bf16.mxu0 0
  %1097 = vmatpush1.bf16.msra.mxu0 %v1081
  %1098 = vmatprep.subr.bf16.mxu0 0
  %1099 = vmatpush1.bf16.msra.mxu0 %v1080
  %1100 = vmatprep.subr.bf16.mxu0 0
  %1101 = vmatpush2.bf16.msra.mxu0 0
  %1102 = vmatprep.subr.bf16.mxu0 0
  %1103 = vmatpush2.bf16.msra.mxu0 0
  %1104 = vmatprep.subr.bf16.mxu0 0
  %1105 = vmatpush2.bf16.msra.mxu0 0
  %1106 = vmatprep.subr.bf16.mxu0 0
  %1107 = vmatpush2.bf16.msra.mxu0 0
  %1108 = vmatprep.subr.bf16.mxu0 0
  %1109 = vmatpush2.bf16.msra.mxu0 0
  %1110 = vmatprep.subr.bf16.mxu0 0
  %1111 = vmatpush2.bf16.msra.mxu0 0
  %1112 = vmatprep.subr.bf16.mxu0 0
  %1113 = vmatpush2.bf16.msra.mxu0 0
  %1114 = vmatprep.subr.bf16.mxu0 0
  %1115 = vmatpush2.bf16.msra.mxu0 0
  %1116 = vmatprep.mubr.bf16.mxu0 0
  %1117 = vmatmul.mubr.bf16.gmra.mxu0 %v374
  %v1118 = vpop.f32.mrf.mxu0
  %v1119 = vadd.f32 0.0, %v1118
  %v1120 = vpop.f32.mrf.mxu0
  %v1121 = vpop.f32.mrf.mxu0
  %v1122 = vpop.f32.mrf.mxu0
  %1123 = vdwg.mxu0
  %v1124 = vadd.f32 %v1069, %v1119
  %v1125 = vmul.f32 %v1124, %v226
  %v1126 = vtanh.pop %v1125
  %v1127 = vmul.f32 %v1126, %v226
  %v1128 = vadd.f32 %v1127, %v227
  %v1129 = vmul.f32 %v1128, 0.0
  %1131 = vrot.lane.b32.xlu0 %v1128, 64
  %v1132 = vpop.permute.xlu0 %1131
  %v1134 = vmul.f32 %v1128, %v1132
  %1136 = vrot.lane.b32.xlu0 %v1134, 32
  %v1137 = vpop.permute.xlu0 %1136
  %v1139 = vadd.f32 %v1129, %v1137
  %v1140 = vtanh.pop %v1139
  %1142 = vrot.lane.b32.xlu0 %v1140, 64
  %v1143 = vpop.permute.xlu0 %1142
  %v1145 = vmul.f32 %v1128, %v1143
  %1147 = vrot.lane.b32.xlu0 %v1145, 64
  %v1148 = vpop.permute.xlu0 %1147
  %vm1150 = vcmask 523520
  %1151 = vst.msk [vmem:[#allocation3 + $0x38] sm:$0xff] %vm1150, %v1148
  %v1152 = vpack.c.bf16 %v1145, %v1145
  %1154 = vrot.lane.b32.xlu0 %v1152, 32
  %v1155 = vpop.permute.xlu0 %1154
  %v1157 = vsel %vm372, %v1155, 0
  %1159 = vmatprep.subr.bf16.mxu0 0
  %1160 = vmatpush1.bf16.msra.mxu0 0
  %1161 = vmatprep.subr.bf16.mxu0 0
  %1162 = vmatpush1.bf16.msra.mxu0 0
  %1163 = vmatprep.subr.bf16.mxu0 0
  %1164 = vmatpush1.bf16.msra.mxu0 0
  %1165 = vmatprep.subr.bf16.mxu0 0
  %1166 = vmatpush1.bf16.msra.mxu0 0
  %1167 = vmatprep.subr.bf16.mxu0 0
  %1168 = vmatpush1.bf16.msra.mxu0 0
  %1169 = vmatprep.subr.bf16.mxu0 0
  %1170 = vmatpush1.bf16.msra.mxu0 0
  %1171 = vmatprep.subr.bf16.mxu0 0
  %1172 = vmatpush1.bf16.msra.mxu0 %v1081
  %1173 = vmatprep.subr.bf16.mxu0 0
  %1174 = vmatpush1.bf16.msra.mxu0 %v1080
  %1175 = vmatprep.subr.bf16.mxu0 0
  %1176 = vmatpush2.bf16.msra.mxu0 0
  %1177 = vmatprep.subr.bf16.mxu0 0
  %1178 = vmatpush2.bf16.msra.mxu0 0
  %1179 = vmatprep.subr.bf16.mxu0 0
  %1180 = vmatpush2.bf16.msra.mxu0 0
  %1181 = vmatprep.subr.bf16.mxu0 0
  %1182 = vmatpush2.bf16.msra.mxu0 0
  %1183 = vmatprep.subr.bf16.mxu0 0
  %1184 = vmatpush2.bf16.msra.mxu0 0
  %1185 = vmatprep.subr.bf16.mxu0 0
  %1186 = vmatpush2.bf16.msra.mxu0 0
  %1187 = vmatprep.subr.bf16.mxu0 0
  %1188 = vmatpush2.bf16.msra.mxu0 0
  %1189 = vmatprep.subr.bf16.mxu0 0
  %1190 = vmatpush2.bf16.msra.mxu0 0
  %1191 = vmatprep.mubr.bf16.mxu0 0
  %1192 = vmatmul.mubr.bf16.gmra.mxu0 %v1157
  %v1193 = vpop.f32.mrf.mxu0
  %v1194 = vadd.f32 0.0, %v1193
  %v1195 = vpop.f32.mrf.mxu0
  %v1196 = vpop.f32.mrf.mxu0
  %v1197 = vpop.f32.mrf.mxu0
  %1198 = vdwg.mxu0
  %v1199 = vadd.f32 %v1066, %v1194
  %v1200 = vmul.f32 %v1199, %v226
  %v1201 = vtanh.pop %v1200
  %v1202 = vmul.f32 %v1201, %v226
  %v1203 = vadd.f32 %v1202, %v227
  %v1204 = vmul.f32 %v1203, %v1139
  %1206 = vrot.lane.b32.xlu0 %v1203, 64
  %v1207 = vpop.permute.xlu0 %1206
  %v1209 = vmul.f32 %v1203, %v1207
  %1211 = vrot.lane.b32.xlu0 %v1209, 32
  %v1212 = vpop.permute.xlu0 %1211
  %v1214 = vadd.f32 %v1204, %v1212
  %v1215 = vtanh.pop %v1214
  %1217 = vrot.lane.b32.xlu0 %v1215, 64
  %v1218 = vpop.permute.xlu0 %1217
  %v1220 = vmul.f32 %v1203, %v1218
  %1222 = vrot.lane.b32.xlu0 %v1220, 64
  %v1223 = vpop.permute.xlu0 %1222
  %1225 = vst.msk [vmem:[#allocation3 + $0x30] sm:$0xff] %vm1150, %v1223
  %v1226 = vpack.c.bf16 %v1220, %v1220
  %1228 = vrot.lane.b32.xlu0 %v1226, 32
  %v1229 = vpop.permute.xlu0 %1228
  %v1231 = vsel %vm372, %v1229, 0
  %1233 = vmatprep.subr.bf16.mxu0 0
  %1234 = vmatpush1.bf16.msra.mxu0 0
  %1235 = vmatprep.subr.bf16.mxu0 0
  %1236 = vmatpush1.bf16.msra.mxu0 0
  %1237 = vmatprep.subr.bf16.mxu0 0
  %1238 = vmatpush1.bf16.msra.mxu0 0
  %1239 = vmatprep.subr.bf16.mxu0 0
  %1240 = vmatpush1.bf16.msra.mxu0 0
  %1241 = vmatprep.subr.bf16.mxu0 0
  %1242 = vmatpush1.bf16.msra.mxu0 0
  %1243 = vmatprep.subr.bf16.mxu0 0
  %1244 = vmatpush1.bf16.msra.mxu0 0
  %1245 = vmatprep.subr.bf16.mxu0 0
  %1246 = vmatpush1.bf16.msra.mxu0 %v1081
  %1247 = vmatprep.subr.bf16.mxu0 0
  %1248 = vmatpush1.bf16.msra.mxu0 %v1080
  %1249 = vmatprep.subr.bf16.mxu0 0
  %1250 = vmatpush2.bf16.msra.mxu0 0
  %1251 = vmatprep.subr.bf16.mxu0 0
  %1252 = vmatpush2.bf16.msra.mxu0 0
  %1253 = vmatprep.subr.bf16.mxu0 0
  %1254 = vmatpush2.bf16.msra.mxu0 0
  %1255 = vmatprep.subr.bf16.mxu0 0
  %1256 = vmatpush2.bf16.msra.mxu0 0
  %1257 = vmatprep.subr.bf16.mxu0 0
  %1258 = vmatpush2.bf16.msra.mxu0 0
  %1259 = vmatprep.subr.bf16.mxu0 0
  %1260 = vmatpush2.bf16.msra.mxu0 0
  %1261 = vmatprep.subr.bf16.mxu0 0
  %1262 = vmatpush2.bf16.msra.mxu0 0
  %1263 = vmatprep.subr.bf16.mxu0 0
  %1264 = vmatpush2.bf16.msra.mxu0 0
  %1265 = vmatprep.mubr.bf16.mxu0 0
  %1266 = vmatmul.mubr.bf16.gmra.mxu0 %v1231
  %v1267 = vpop.f32.mrf.mxu0
  %v1268 = vadd.f32 0.0, %v1267
  %v1269 = vpop.f32.mrf.mxu0
  %v1270 = vpop.f32.mrf.mxu0
  %v1271 = vpop.f32.mrf.mxu0
  %1272 = vdwg.mxu0
  %v1273 = vadd.f32 %v1061, %v1268
  %v1274 = vmul.f32 %v1273, %v226
  %v1275 = vtanh.pop %v1274
  %v1276 = vmul.f32 %v1275, %v226
  %v1277 = vadd.f32 %v1276, %v227
  %v1278 = vmul.f32 %v1277, %v1214
  %1280 = vrot.lane.b32.xlu0 %v1277, 64
  %v1281 = vpop.permute.xlu0 %1280
  %v1283 = vmul.f32 %v1277, %v1281
  %1285 = vrot.lane.b32.xlu0 %v1283, 32
  %v1286 = vpop.permute.xlu0 %1285
  %v1288 = vadd.f32 %v1278, %v1286
  %v1289 = vtanh.pop %v1288
  %1291 = vrot.lane.b32.xlu0 %v1289, 64
  %v1292 = vpop.permute.xlu0 %1291
  %v1294 = vmul.f32 %v1277, %v1292
  %1296 = vrot.lane.b32.xlu0 %v1294, 64
  %v1297 = vpop.permute.xlu0 %1296
  %1299 = vst.msk [vmem:[#allocation3 + $0x28] sm:$0xff] %vm1150, %v1297
  %v1300 = vpack.c.bf16 %v1294, %v1294
  %1302 = vrot.lane.b32.xlu0 %v1300, 32
  %v1303 = vpop.permute.xlu0 %1302
  %v1305 = vsel %vm372, %v1303, 0
  %1307 = vmatprep.subr.bf16.mxu0 0
  %1308 = vmatpush1.bf16.msra.mxu0 0
  %1309 = vmatprep.subr.bf16.mxu0 0
  %1310 = vmatpush1.bf16.msra.mxu0 0
  %1311 = vmatprep.subr.bf16.mxu0 0
  %1312 = vmatpush1.bf16.msra.mxu0 0
  %1313 = vmatprep.subr.bf16.mxu0 0
  %1314 = vmatpush1.bf16.msra.mxu0 0
  %1315 = vmatprep.subr.bf16.mxu0 0
  %1316 = vmatpush1.bf16.msra.mxu0 0
  %1317 = vmatprep.subr.bf16.mxu0 0
  %1318 = vmatpush1.bf16.msra.mxu0 0
  %1319 = vmatprep.subr.bf16.mxu0 0
  %1320 = vmatpush1.bf16.msra.mxu0 %v1081
  %1321 = vmatprep.subr.bf16.mxu0 0
  %1322 = vmatpush1.bf16.msra.mxu0 %v1080
  %1323 = vmatprep.subr.bf16.mxu0 0
  %1324 = vmatpush2.bf16.msra.mxu0 0
  %1325 = vmatprep.subr.bf16.mxu0 0
  %1326 = vmatpush2.bf16.msra.mxu0 0
  %1327 = vmatprep.subr.bf16.mxu0 0
  %1328 = vmatpush2.bf16.msra.mxu0 0
  %1329 = vmatprep.subr.bf16.mxu0 0
  %1330 = vmatpush2.bf16.msra.mxu0 0
  %1331 = vmatprep.subr.bf16.mxu0 0
  %1332 = vmatpush2.bf16.msra.mxu0 0
  %1333 = vmatprep.subr.bf16.mxu0 0
  %1334 = vmatpush2.bf16.msra.mxu0 0
  %1335 = vmatprep.subr.bf16.mxu0 0
  %1336 = vmatpush2.bf16.msra.mxu0 0
  %1337 = vmatprep.subr.bf16.mxu0 0
  %1338 = vmatpush2.bf16.msra.mxu0 0
  %1339 = vmatprep.mubr.bf16.mxu0 0
  %1340 = vmatmul.mubr.bf16.gmra.mxu0 %v1305
  %v1341 = vpop.f32.mrf.mxu0
  %v1342 = vadd.f32 0.0, %v1341
  %v1343 = vpop.f32.mrf.mxu0
  %v1344 = vpop.f32.mrf.mxu0
  %v1345 = vpop.f32.mrf.mxu0
  %1346 = vdwg.mxu0
  %v1347 = vadd.f32 %v1058, %v1342
  %v1348 = vmul.f32 %v1347, %v226
  %v1349 = vtanh.pop %v1348
  %v1350 = vmul.f32 %v1349, %v226
  %v1351 = vadd.f32 %v1350, %v227
  %v1352 = vmul.f32 %v1351, %v1288
  %1354 = vrot.lane.b32.xlu0 %v1351, 64
  %v1355 = vpop.permute.xlu0 %1354
  %v1357 = vmul.f32 %v1351, %v1355
  %1359 = vrot.lane.b32.xlu0 %v1357, 32
  %v1360 = vpop.permute.xlu0 %1359
  %v1362 = vadd.f32 %v1352, %v1360
  %v1363 = vtanh.pop %v1362
  %1365 = vrot.lane.b32.xlu0 %v1363, 64
  %v1366 = vpop.permute.xlu0 %1365
  %v1368 = vmul.f32 %v1351, %v1366
  %1370 = vrot.lane.b32.xlu0 %v1368, 64
  %v1371 = vpop.permute.xlu0 %1370
  %1373 = vst.msk [vmem:[#allocation3 + $0x20] sm:$0xff] %vm1150, %v1371
  %v1374 = vpack.c.bf16 %v1368, %v1368
  %1376 = vrot.lane.b32.xlu0 %v1374, 32
  %v1377 = vpop.permute.xlu0 %1376
  %v1379 = vsel %vm372, %v1377, 0
  %1381 = vmatprep.subr.bf16.mxu0 0
  %1382 = vmatpush1.bf16.msra.mxu0 0
  %1383 = vmatprep.subr.bf16.mxu0 0
  %1384 = vmatpush1.bf16.msra.mxu0 0
  %1385 = vmatprep.subr.bf16.mxu0 0
  %1386 = vmatpush1.bf16.msra.mxu0 0
  %1387 = vmatprep.subr.bf16.mxu0 0
  %1388 = vmatpush1.bf16.msra.mxu0 0
  %1389 = vmatprep.subr.bf16.mxu0 0
  %1390 = vmatpush1.bf16.msra.mxu0 0
  %1391 = vmatprep.subr.bf16.mxu0 0
  %1392 = vmatpush1.bf16.msra.mxu0 0
  %1393 = vmatprep.subr.bf16.mxu0 0
  %1394 = vmatpush1.bf16.msra.mxu0 %v1081
  %1395 = vmatprep.subr.bf16.mxu0 0
  %1396 = vmatpush1.bf16.msra.mxu0 %v1080
  %1397 = vmatprep.subr.bf16.mxu0 0
  %1398 = vmatpush2.bf16.msra.mxu0 0
  %1399 = vmatprep.subr.bf16.mxu0 0
  %1400 = vmatpush2.bf16.msra.mxu0 0
  %1401 = vmatprep.subr.bf16.mxu0 0
  %1402 = vmatpush2.bf16.msra.mxu0 0
  %1403 = vmatprep.subr.bf16.mxu0 0
  %1404 = vmatpush2.bf16.msra.mxu0 0
  %1405 = vmatprep.subr.bf16.mxu0 0
  %1406 = vmatpush2.bf16.msra.mxu0 0
  %1407 = vmatprep.subr.bf16.mxu0 0
  %1408 = vmatpush2.bf16.msra.mxu0 0
  %1409 = vmatprep.subr.bf16.mxu0 0
  %1410 = vmatpush2.bf16.msra.mxu0 0
  %1411 = vmatprep.subr.bf16.mxu0 0
  %1412 = vmatpush2.bf16.msra.mxu0 0
  %1413 = vmatprep.mubr.bf16.mxu0 0
  %1414 = vmatmul.mubr.bf16.gmra.mxu0 %v1379
  %v1415 = vpop.f32.mrf.mxu0
  %v1416 = vadd.f32 0.0, %v1415
  %v1417 = vpop.f32.mrf.mxu0
  %v1418 = vpop.f32.mrf.mxu0
  %v1419 = vpop.f32.mrf.mxu0
  %1420 = vdwg.mxu0
  %v1421 = vadd.f32 %v1053, %v1416
  %v1422 = vmul.f32 %v1421, %v226
  %v1423 = vtanh.pop %v1422
  %v1424 = vmul.f32 %v1423, %v226
  %v1425 = vadd.f32 %v1424, %v227
  %v1426 = vmul.f32 %v1425, %v1362
  %1428 = vrot.lane.b32.xlu0 %v1425, 64
  %v1429 = vpop.permute.xlu0 %1428
  %v1431 = vmul.f32 %v1425, %v1429
  %1433 = vrot.lane.b32.xlu0 %v1431, 32
  %v1434 = vpop.permute.xlu0 %1433
  %v1436 = vadd.f32 %v1426, %v1434
  %v1437 = vtanh.pop %v1436
  %1439 = vrot.lane.b32.xlu0 %v1437, 64
  %v1440 = vpop.permute.xlu0 %1439
  %v1442 = vmul.f32 %v1425, %v1440
  %1444 = vrot.lane.b32.xlu0 %v1442, 64
  %v1445 = vpop.permute.xlu0 %1444
  %1447 = vst.msk [vmem:[#allocation3 + $0x18] sm:$0xff] %vm1150, %v1445
  %v1448 = vpack.c.bf16 %v1442, %v1442
  %1450 = vrot.lane.b32.xlu0 %v1448, 32
  %v1451 = vpop.permute.xlu0 %1450
  %v1453 = vsel %vm372, %v1451, 0
  %1455 = vmatprep.subr.bf16.mxu0 0
  %1456 = vmatpush1.bf16.msra.mxu0 0
  %1457 = vmatprep.subr.bf16.mxu0 0
  %1458 = vmatpush1.bf16.msra.mxu0 0
  %1459 = vmatprep.subr.bf16.mxu0 0
  %1460 = vmatpush1.bf16.msra.mxu0 0
  %1461 = vmatprep.subr.bf16.mxu0 0
  %1462 = vmatpush1.bf16.msra.mxu0 0
  %1463 = vmatprep.subr.bf16.mxu0 0
  %1464 = vmatpush1.bf16.msra.mxu0 0
  %1465 = vmatprep.subr.bf16.mxu0 0
  %1466 = vmatpush1.bf16.msra.mxu0 0
  %1467 = vmatprep.subr.bf16.mxu0 0
  %1468 = vmatpush1.bf16.msra.mxu0 %v1081
  %1469 = vmatprep.subr.bf16.mxu0 0
  %1470 = vmatpush1.bf16.msra.mxu0 %v1080
  %1471 = vmatprep.subr.bf16.mxu0 0
  %1472 = vmatpush2.bf16.msra.mxu0 0
  %1473 = vmatprep.subr.bf16.mxu0 0
  %1474 = vmatpush2.bf16.msra.mxu0 0
  %1475 = vmatprep.subr.bf16.mxu0 0
  %1476 = vmatpush2.bf16.msra.mxu0 0
  %1477 = vmatprep.subr.bf16.mxu0 0
  %1478 = vmatpush2.bf16.msra.mxu0 0
  %1479 = vmatprep.subr.bf16.mxu0 0
  %1480 = vmatpush2.bf16.msra.mxu0 0
  %1481 = vmatprep.subr.bf16.mxu0 0
  %1482 = vmatpush2.bf16.msra.mxu0 0
  %1483 = vmatprep.subr.bf16.mxu0 0
  %1484 = vmatpush2.bf16.msra.mxu0 0
  %1485 = vmatprep.subr.bf16.mxu0 0
  %1486 = vmatpush2.bf16.msra.mxu0 0
  %1487 = vmatprep.mubr.bf16.mxu0 0
  %1488 = vmatmul.mubr.bf16.gmra.mxu0 %v1453
  %v1489 = vpop.f32.mrf.mxu0
  %v1490 = vadd.f32 0.0, %v1489
  %v1491 = vpop.f32.mrf.mxu0
  %v1492 = vpop.f32.mrf.mxu0
  %v1493 = vpop.f32.mrf.mxu0
  %1494 = vdwg.mxu0
  %v1495 = vadd.f32 %v1050, %v1490
  %v1496 = vmul.f32 %v1495, %v226
  %v1497 = vtanh.pop %v1496
  %v1498 = vmul.f32 %v1497, %v226
  %v1499 = vadd.f32 %v1498, %v227
  %v1500 = vmul.f32 %v1499, %v1436
  %1502 = vrot.lane.b32.xlu0 %v1499, 64
  %v1503 = vpop.permute.xlu0 %1502
  %v1505 = vmul.f32 %v1499, %v1503
  %1507 = vrot.lane.b32.xlu0 %v1505, 32
  %v1508 = vpop.permute.xlu0 %1507
  %v1510 = vadd.f32 %v1500, %v1508
  %v1511 = vtanh.pop %v1510
  %1513 = vrot.lane.b32.xlu0 %v1511, 64
  %v1514 = vpop.permute.xlu0 %1513
  %v1516 = vmul.f32 %v1499, %v1514
  %1518 = vrot.lane.b32.xlu0 %v1516, 64
  %v1519 = vpop.permute.xlu0 %1518
  %1521 = vst.msk [vmem:[#allocation3 + $0x10] sm:$0xff] %vm1150, %v1519
  %v1522 = vpack.c.bf16 %v1516, %v1516
  %1524 = vrot.lane.b32.xlu0 %v1522, 32
  %v1525 = vpop.permute.xlu0 %1524
  %v1527 = vsel %vm372, %v1525, 0
  %1529 = vmatprep.subr.bf16.mxu0 0
  %1530 = vmatpush1.bf16.msra.mxu0 0
  %1531 = vmatprep.subr.bf16.mxu0 0
  %1532 = vmatpush1.bf16.msra.mxu0 0
  %1533 = vmatprep.subr.bf16.mxu0 0
  %1534 = vmatpush1.bf16.msra.mxu0 0
  %1535 = vmatprep.subr.bf16.mxu0 0
  %1536 = vmatpush1.bf16.msra.mxu0 0
  %1537 = vmatprep.subr.bf16.mxu0 0
  %1538 = vmatpush1.bf16.msra.mxu0 0
  %1539 = vmatprep.subr.bf16.mxu0 0
  %1540 = vmatpush1.bf16.msra.mxu0 0
  %1541 = vmatprep.subr.bf16.mxu0 0
  %1542 = vmatpush1.bf16.msra.mxu0 %v1081
  %1543 = vmatprep.subr.bf16.mxu0 0
  %1544 = vmatpush1.bf16.msra.mxu0 %v1080
  %1545 = vmatprep.subr.bf16.mxu0 0
  %1546 = vmatpush2.bf16.msra.mxu0 0
  %1547 = vmatprep.subr.bf16.mxu0 0
  %1548 = vmatpush2.bf16.msra.mxu0 0
  %1549 = vmatprep.subr.bf16.mxu0 0
  %1550 = vmatpush2.bf16.msra.mxu0 0
  %1551 = vmatprep.subr.bf16.mxu0 0
  %1552 = vmatpush2.bf16.msra.mxu0 0
  %1553 = vmatprep.subr.bf16.mxu0 0
  %1554 = vmatpush2.bf16.msra.mxu0 0
  %1555 = vmatprep.subr.bf16.mxu0 0
  %1556 = vmatpush2.bf16.msra.mxu0 0
  %1557 = vmatprep.subr.bf16.mxu0 0
  %1558 = vmatpush2.bf16.msra.mxu0 0
  %1559 = vmatprep.subr.bf16.mxu0 0
  %1560 = vmatpush2.bf16.msra.mxu0 0
  %1561 = vmatprep.mubr.bf16.mxu0 0
  %1562 = vmatmul.mubr.bf16.gmra.mxu0 %v1527
  %v1563 = vpop.f32.mrf.mxu0
  %v1564 = vadd.f32 0.0, %v1563
  %v1565 = vpop.f32.mrf.mxu0
  %v1566 = vpop.f32.mrf.mxu0
  %v1567 = vpop.f32.mrf.mxu0
  %1568 = vdwg.mxu0
  %v1569 = vadd.f32 %v1045, %v1564
  %v1570 = vmul.f32 %v1569, %v226
  %v1571 = vtanh.pop %v1570
  %v1572 = vmul.f32 %v1571, %v226
  %v1573 = vadd.f32 %v1572, %v227
  %v1574 = vmul.f32 %v1573, %v1510
  %1576 = vrot.lane.b32.xlu0 %v1573, 64
  %v1577 = vpop.permute.xlu0 %1576
  %v1579 = vmul.f32 %v1573, %v1577
  %1581 = vrot.lane.b32.xlu0 %v1579, 32
  %v1582 = vpop.permute.xlu0 %1581
  %v1584 = vadd.f32 %v1574, %v1582
  %v1585 = vtanh.pop %v1584
  %1587 = vrot.lane.b32.xlu0 %v1585, 64
  %v1588 = vpop.permute.xlu0 %1587
  %v1590 = vmul.f32 %v1573, %v1588
  %1592 = vrot.lane.b32.xlu0 %v1590, 64
  %v1593 = vpop.permute.xlu0 %1592
  %1595 = vst.msk [vmem:[#allocation3 + $0x8] sm:$0xff] %vm1150, %v1593
  %v1596 = vpack.c.bf16 %v1590, %v1590
  %1598 = vrot.lane.b32.xlu0 %v1596, 32
  %v1599 = vpop.permute.xlu0 %1598
  %v1601 = vsel %vm372, %v1599, 0
  %1603 = vmatprep.subr.bf16.mxu0 0
  %1604 = vmatpush1.bf16.msra.mxu0 0
  %1605 = vmatprep.subr.bf16.mxu0 0
  %1606 = vmatpush1.bf16.msra.mxu0 0
  %1607 = vmatprep.subr.bf16.mxu0 0
  %1608 = vmatpush1.bf16.msra.mxu0 0
  %1609 = vmatprep.subr.bf16.mxu0 0
  %1610 = vmatpush1.bf16.msra.mxu0 0
  %1611 = vmatprep.subr.bf16.mxu0 0
  %1612 = vmatpush1.bf16.msra.mxu0 0
  %1613 = vmatprep.subr.bf16.mxu0 0
  %1614 = vmatpush1.bf16.msra.mxu0 0
  %1615 = vmatprep.subr.bf16.mxu0 0
  %1616 = vmatpush1.bf16.msra.mxu0 %v1081
  %1617 = vmatprep.subr.bf16.mxu0 0
  %1618 = vmatpush1.bf16.msra.mxu0 %v1080
  %1619 = vmatprep.subr.bf16.mxu0 0
  %1620 = vmatpush2.bf16.msra.mxu0 0
  %1621 = vmatprep.subr.bf16.mxu0 0
  %1622 = vmatpush2.bf16.msra.mxu0 0
  %1623 = vmatprep.subr.bf16.mxu0 0
  %1624 = vmatpush2.bf16.msra.mxu0 0
  %1625 = vmatprep.subr.bf16.mxu0 0
  %1626 = vmatpush2.bf16.msra.mxu0 0
  %1627 = vmatprep.subr.bf16.mxu0 0
  %1628 = vmatpush2.bf16.msra.mxu0 0
  %1629 = vmatprep.subr.bf16.mxu0 0
  %1630 = vmatpush2.bf16.msra.mxu0 0
  %1631 = vmatprep.subr.bf16.mxu0 0
  %1632 = vmatpush2.bf16.msra.mxu0 0
  %1633 = vmatprep.subr.bf16.mxu0 0
  %1634 = vmatpush2.bf16.msra.mxu0 0
  %1635 = vmatprep.mubr.bf16.mxu0 0
  %1636 = vmatmul.mubr.bf16.gmra.mxu0 %v1601
  %v1637 = vpop.f32.mrf.mxu0
  %v1638 = vadd.f32 0.0, %v1637
  %v1639 = vpop.f32.mrf.mxu0
  %v1640 = vpop.f32.mrf.mxu0
  %v1641 = vpop.f32.mrf.mxu0
  %1642 = vdwg.mxu0
  %v1643 = vadd.f32 %v1042, %v1638
  %v1644 = vmul.f32 %v1643, %v226
  %v1645 = vtanh.pop %v1644
  %v1646 = vmul.f32 %v1645, %v226
  %v1647 = vadd.f32 %v1646, %v227
  %v1648 = vmul.f32 %v1647, %v1584
  %1650 = vrot.lane.b32.xlu0 %v1647, 64
  %v1651 = vpop.permute.xlu0 %1650
  %v1653 = vmul.f32 %v1647, %v1651
  %1655 = vrot.lane.b32.xlu0 %v1653, 32
  %v1656 = vpop.permute.xlu0 %1655
  %v1658 = vadd.f32 %v1648, %v1656
  %v1659 = vtanh.pop %v1658
  %1661 = vrot.lane.b32.xlu0 %v1659, 64
  %v1662 = vpop.permute.xlu0 %1661
  %v1664 = vmul.f32 %v1647, %v1662
  %1666 = vrot.lane.b32.xlu0 %v1664, 64
  %v1667 = vpop.permute.xlu0 %1666
  %1669 = vst.msk [vmem:[#allocation3] sm:$0xff] %vm1150, %v1667
  %v1670 = vld [vmem:[#allocation3] sm:$0xff]
  %v1671 = vld [vmem:[#allocation3 + $0x8] sm:$0xff]
  %v1672 = vld [vmem:[#allocation3 + $0x10] sm:$0xff]
  %v1673 = vld [vmem:[#allocation3 + $0x18] sm:$0xff]
  %v1674 = vld [vmem:[#allocation3 + $0x20] sm:$0xff]
  %v1675 = vld [vmem:[#allocation3 + $0x28] sm:$0xff]
  %v1676 = vld [vmem:[#allocation3 + $0x30] sm:$0xff]
  %v1677 = vld [vmem:[#allocation3 + $0x38] sm:$0xff]
  %v1678 = vpack.c.bf16 %v1671, %v1670
  %v1679 = vpack.c.bf16 %v1673, %v1672
  %v1680 = vpack.c.bf16 %v1675, %v1674
  %v1681 = vpack.c.bf16 %v1677, %v1676
  %s1682 = scalar_lea.vmem %s2, 64
  %v1683 = vld [vmem:[%s1682] sm:$0xf]
  %v1684 = vld [vmem:[%s1682 + $0x4] sm:$0xf]
  %v1685 = vld [vmem:[%s1682 + $0x8] sm:$0xf]
  %v1686 = vld [vmem:[%s1682 + $0xc] sm:$0xf]
  %v1687 = vld [vmem:[%s1682 + $0x10] sm:$0xf]
  %v1688 = vld [vmem:[%s1682 + $0x14] sm:$0xf]
  %v1689 = vld [vmem:[%s1682 + $0x18] sm:$0xf]
  %v1690 = vld [vmem:[%s1682 + $0x1c] sm:$0xf]
  %s1691 = scalar_lea.vmem %s3, 32
  %v1692 = vld [vmem:[%s1691] sm:$0xf]
  %v1693 = vld [vmem:[%s1691 + $0x4] sm:$0xf]
  %v1694 = vld [vmem:[%s1691 + $0x8] sm:$0xf]
  %v1695 = vld [vmem:[%s1691 + $0xc] sm:$0xf]
  %s1696 = scalar_lea.vmem %s4, 2
  %v1697 = vld [vmem:[%s1696] sm:$0x1]
  %v1699 = vlaneseq
  %v1700 = vshrl.u32 %v1699, 7
  %v1701 = vsub.s32 0, %v1700
  %v1702 = vrot.slane %v1697, %v1701
  %v1712 = vunpack.c.l.b16 %v1683
  %v1713 = vunpack.c.l.b16 %v1684
  %v1714 = vunpack.c.l.b16 %v1685
  %v1715 = vunpack.c.l.b16 %v1686
  %v1716 = vunpack.c.l.b16 %v1687
  %v1717 = vunpack.c.l.b16 %v1688
  %v1718 = vunpack.c.l.b16 %v1689
  %v1719 = vunpack.c.l.b16 %v1690
  %v1720 = vpack.c.b16 %v1713, %v1712
  %v1721 = vpack.c.b16 %v1715, %v1714
  %v1722 = vpack.c.b16 %v1717, %v1716
  %v1723 = vpack.c.b16 %v1719, %v1718
  %v1729 = vsel %vm27, %v1678, 0
  %v1732 = vsel %vm27, %v1679, 0
  %v1735 = vsel %vm27, %v1680, 0
  %v1738 = vsel %vm27, %v1681, 0
  %1740 = vmatprep.subr.bf16.mxu0 0
  %1741 = vmatpush1.bf16.msra.mxu0 0
  %1742 = vmatprep.subr.bf16.mxu0 0
  %1743 = vmatpush1.bf16.msra.mxu0 0
  %1744 = vmatprep.subr.bf16.mxu0 0
  %1745 = vmatpush1.bf16.msra.mxu0 0
  %1746 = vmatprep.subr.bf16.mxu0 0
  %1747 = vmatpush1.bf16.msra.mxu0 0
  %1748 = vmatprep.subr.bf16.mxu0 0
  %1749 = vmatpush1.bf16.msra.mxu0 %v1723
  %1750 = vmatprep.subr.bf16.mxu0 0
  %1751 = vmatpush1.bf16.msra.mxu0 %v1722
  %1752 = vmatprep.subr.bf16.mxu0 0
  %1753 = vmatpush1.bf16.msra.mxu0 %v1721
  %1754 = vmatprep.subr.bf16.mxu0 0
  %1755 = vmatpush1.bf16.msra.mxu0 %v1720
  %1756 = vmatprep.subr.bf16.mxu0 0
  %1757 = vmatpush2.bf16.msra.mxu0 0
  %1758 = vmatprep.subr.bf16.mxu0 0
  %1759 = vmatpush2.bf16.msra.mxu0 0
  %1760 = vmatprep.subr.bf16.mxu0 0
  %1761 = vmatpush2.bf16.msra.mxu0 0
  %1762 = vmatprep.subr.bf16.mxu0 0
  %1763 = vmatpush2.bf16.msra.mxu0 0
  %1764 = vmatprep.subr.bf16.mxu0 0
  %1765 = vmatpush2.bf16.msra.mxu0 0
  %1766 = vmatprep.subr.bf16.mxu0 0
  %1767 = vmatpush2.bf16.msra.mxu0 0
  %1768 = vmatprep.subr.bf16.mxu0 0
  %1769 = vmatpush2.bf16.msra.mxu0 0
  %1770 = vmatprep.subr.bf16.mxu0 0
  %1771 = vmatpush2.bf16.msra.mxu0 0
  %1772 = vmatprep.mubr.bf16.mxu0 0
  %1773 = vmatmul.mubr.bf16.gmra.mxu0 %v1729
  %v1774 = vpop.f32.mrf.mxu0
  %v1775 = vadd.f32 %v1702, %v1774
  %v1776 = vpop.f32.mrf.mxu0
  %v1777 = vpop.f32.mrf.mxu0
  %v1778 = vadd.f32 %v1702, %v1777
  %v1779 = vpop.f32.mrf.mxu0
  %1780 = vmatprep.mubr.bf16.mxu0 0
  %1781 = vmatmul.mubr.bf16.gmra.mxu0 %v1732
  %v1782 = vpop.f32.mrf.mxu0
  %v1783 = vadd.f32 %v1702, %v1782
  %v1784 = vpop.f32.mrf.mxu0
  %v1785 = vpop.f32.mrf.mxu0
  %v1786 = vadd.f32 %v1702, %v1785
  %v1787 = vpop.f32.mrf.mxu0
  %1788 = vmatprep.mubr.bf16.mxu0 0
  %1789 = vmatmul.mubr.bf16.gmra.mxu0 %v1735
  %v1790 = vpop.f32.mrf.mxu0
  %v1791 = vadd.f32 %v1702, %v1790
  %v1792 = vpop.f32.mrf.mxu0
  %v1793 = vpop.f32.mrf.mxu0
  %v1794 = vadd.f32 %v1702, %v1793
  %v1795 = vpop.f32.mrf.mxu0
  %1796 = vmatprep.mubr.bf16.mxu0 0
  %1797 = vmatmul.mubr.bf16.gmra.mxu0 %v1738
  %v1798 = vpop.f32.mrf.mxu0
  %v1799 = vadd.f32 %v1702, %v1798
  %v1800 = vpop.f32.mrf.mxu0
  %v1801 = vpop.f32.mrf.mxu0
  %v1802 = vadd.f32 %v1702, %v1801
  %v1803 = vpop.f32.mrf.mxu0
  %1804 = vdwg.mxu0
  %v1809 = vunpack.c.l.b16 %v1692
  %v1810 = vunpack.c.l.b16 %v1693
  %v1811 = vunpack.c.l.b16 %v1694
  %v1812 = vunpack.c.l.b16 %v1695
  %v1813 = vpack.c.b16 %v1810, %v1809
  %v1814 = vpack.c.b16 %v1812, %v1811
  %1817 = vmatprep.subr.bf16.mxu0 0
  %1818 = vmatpush1.bf16.msra.mxu0 0
  %1819 = vmatprep.subr.bf16.mxu0 0
  %1820 = vmatpush1.bf16.msra.mxu0 0
  %1821 = vmatprep.subr.bf16.mxu0 0
  %1822 = vmatpush1.bf16.msra.mxu0 0
  %1823 = vmatprep.subr.bf16.mxu0 0
  %1824 = vmatpush1.bf16.msra.mxu0 0
  %1825 = vmatprep.subr.bf16.mxu0 0
  %1826 = vmatpush1.bf16.msra.mxu0 0
  %1827 = vmatprep.subr.bf16.mxu0 0
  %1828 = vmatpush1.bf16.msra.mxu0 0
  %1829 = vmatprep.subr.bf16.mxu0 0
  %1830 = vmatpush1.bf16.msra.mxu0 %v1814
  %1831 = vmatprep.subr.bf16.mxu0 0
  %1832 = vmatpush1.bf16.msra.mxu0 %v1813
  %1833 = vmatprep.subr.bf16.mxu0 0
  %1834 = vmatpush2.bf16.msra.mxu0 0
  %1835 = vmatprep.subr.bf16.mxu0 0
  %1836 = vmatpush2.bf16.msra.mxu0 0
  %1837 = vmatprep.subr.bf16.mxu0 0
  %1838 = vmatpush2.bf16.msra.mxu0 0
  %1839 = vmatprep.subr.bf16.mxu0 0
  %1840 = vmatpush2.bf16.msra.mxu0 0
  %1841 = vmatprep.subr.bf16.mxu0 0
  %1842 = vmatpush2.bf16.msra.mxu0 0
  %1843 = vmatprep.subr.bf16.mxu0 0
  %1844 = vmatpush2.bf16.msra.mxu0 0
  %1845 = vmatprep.subr.bf16.mxu0 0
  %1846 = vmatpush2.bf16.msra.mxu0 0
  %1847 = vmatprep.subr.bf16.mxu0 0
  %1848 = vmatpush2.bf16.msra.mxu0 0
  %1849 = vmatprep.mubr.bf16.mxu0 0
  %1850 = vmatmul.mubr.bf16.gmra.mxu0 %v374
  %v1851 = vpop.f32.mrf.mxu0
  %v1852 = vadd.f32 0.0, %v1851
  %v1853 = vpop.f32.mrf.mxu0
  %v1854 = vpop.f32.mrf.mxu0
  %v1855 = vpop.f32.mrf.mxu0
  %1856 = vdwg.mxu0
  %v1857 = vadd.f32 %v1775, %v1852
  %v1858 = vmul.f32 %v1857, %v226
  %v1859 = vtanh.pop %v1858
  %v1860 = vmul.f32 %v1859, %v226
  %v1861 = vadd.f32 %v1860, %v227
  %v1862 = vmul.f32 %v1861, 0.0
  %1864 = vrot.lane.b32.xlu0 %v1861, 64
  %v1865 = vpop.permute.xlu0 %1864
  %v1867 = vmul.f32 %v1861, %v1865
  %1869 = vrot.lane.b32.xlu0 %v1867, 32
  %v1870 = vpop.permute.xlu0 %1869
  %v1872 = vadd.f32 %v1862, %v1870
  %v1873 = vtanh.pop %v1872
  %1875 = vrot.lane.b32.xlu0 %v1873, 64
  %v1876 = vpop.permute.xlu0 %1875
  %v1878 = vmul.f32 %v1861, %v1876
  %v1879 = vpack.c.bf16 %v1878, %v1878
  %1881 = vrot.lane.b32.xlu0 %v1879, 32
  %v1882 = vpop.permute.xlu0 %1881
  %v1884 = vsel %vm372, %v1882, 0
  %1886 = vmatprep.subr.bf16.mxu0 0
  %1887 = vmatpush1.bf16.msra.mxu0 0
  %1888 = vmatprep.subr.bf16.mxu0 0
  %1889 = vmatpush1.bf16.msra.mxu0 0
  %1890 = vmatprep.subr.bf16.mxu0 0
  %1891 = vmatpush1.bf16.msra.mxu0 0
  %1892 = vmatprep.subr.bf16.mxu0 0
  %1893 = vmatpush1.bf16.msra.mxu0 0
  %1894 = vmatprep.subr.bf16.mxu0 0
  %1895 = vmatpush1.bf16.msra.mxu0 0
  %1896 = vmatprep.subr.bf16.mxu0 0
  %1897 = vmatpush1.bf16.msra.mxu0 0
  %1898 = vmatprep.subr.bf16.mxu0 0
  %1899 = vmatpush1.bf16.msra.mxu0 %v1814
  %1900 = vmatprep.subr.bf16.mxu0 0
  %1901 = vmatpush1.bf16.msra.mxu0 %v1813
  %1902 = vmatprep.subr.bf16.mxu0 0
  %1903 = vmatpush2.bf16.msra.mxu0 0
  %1904 = vmatprep.subr.bf16.mxu0 0
  %1905 = vmatpush2.bf16.msra.mxu0 0
  %1906 = vmatprep.subr.bf16.mxu0 0
  %1907 = vmatpush2.bf16.msra.mxu0 0
  %1908 = vmatprep.subr.bf16.mxu0 0
  %1909 = vmatpush2.bf16.msra.mxu0 0
  %1910 = vmatprep.subr.bf16.mxu0 0
  %1911 = vmatpush2.bf16.msra.mxu0 0
  %1912 = vmatprep.subr.bf16.mxu0 0
  %1913 = vmatpush2.bf16.msra.mxu0 0
  %1914 = vmatprep.subr.bf16.mxu0 0
  %1915 = vmatpush2.bf16.msra.mxu0 0
  %1916 = vmatprep.subr.bf16.mxu0 0
  %1917 = vmatpush2.bf16.msra.mxu0 0
  %1918 = vmatprep.mubr.bf16.mxu0 0
  %1919 = vmatmul.mubr.bf16.gmra.mxu0 %v1884
  %v1920 = vpop.f32.mrf.mxu0
  %v1921 = vadd.f32 0.0, %v1920
  %v1922 = vpop.f32.mrf.mxu0
  %v1923 = vpop.f32.mrf.mxu0
  %v1924 = vpop.f32.mrf.mxu0
  %1925 = vdwg.mxu0
  %v1926 = vadd.f32 %v1778, %v1921
  %v1927 = vmul.f32 %v1926, %v226
  %v1928 = vtanh.pop %v1927
  %v1929 = vmul.f32 %v1928, %v226
  %v1930 = vadd.f32 %v1929, %v227
  %v1931 = vmul.f32 %v1930, %v1872
  %1933 = vrot.lane.b32.xlu0 %v1930, 64
  %v1934 = vpop.permute.xlu0 %1933
  %v1936 = vmul.f32 %v1930, %v1934
  %1938 = vrot.lane.b32.xlu0 %v1936, 32
  %v1939 = vpop.permute.xlu0 %1938
  %v1941 = vadd.f32 %v1931, %v1939
  %v1942 = vtanh.pop %v1941
  %1944 = vrot.lane.b32.xlu0 %v1942, 64
  %v1945 = vpop.permute.xlu0 %1944
  %v1947 = vmul.f32 %v1930, %v1945
  %v1948 = vpack.c.bf16 %v1947, %v1947
  %1950 = vrot.lane.b32.xlu0 %v1948, 32
  %v1951 = vpop.permute.xlu0 %1950
  %v1953 = vsel %vm372, %v1951, 0
  %1955 = vmatprep.subr.bf16.mxu0 0
  %1956 = vmatpush1.bf16.msra.mxu0 0
  %1957 = vmatprep.subr.bf16.mxu0 0
  %1958 = vmatpush1.bf16.msra.mxu0 0
  %1959 = vmatprep.subr.bf16.mxu0 0
  %1960 = vmatpush1.bf16.msra.mxu0 0
  %1961 = vmatprep.subr.bf16.mxu0 0
  %1962 = vmatpush1.bf16.msra.mxu0 0
  %1963 = vmatprep.subr.bf16.mxu0 0
  %1964 = vmatpush1.bf16.msra.mxu0 0
  %1965 = vmatprep.subr.bf16.mxu0 0
  %1966 = vmatpush1.bf16.msra.mxu0 0
  %1967 = vmatprep.subr.bf16.mxu0 0
  %1968 = vmatpush1.bf16.msra.mxu0 %v1814
  %1969 = vmatprep.subr.bf16.mxu0 0
  %1970 = vmatpush1.bf16.msra.mxu0 %v1813
  %1971 = vmatprep.subr.bf16.mxu0 0
  %1972 = vmatpush2.bf16.msra.mxu0 0
  %1973 = vmatprep.subr.bf16.mxu0 0
  %1974 = vmatpush2.bf16.msra.mxu0 0
  %1975 = vmatprep.subr.bf16.mxu0 0
  %1976 = vmatpush2.bf16.msra.mxu0 0
  %1977 = vmatprep.subr.bf16.mxu0 0
  %1978 = vmatpush2.bf16.msra.mxu0 0
  %1979 = vmatprep.subr.bf16.mxu0 0
  %1980 = vmatpush2.bf16.msra.mxu0 0
  %1981 = vmatprep.subr.bf16.mxu0 0
  %1982 = vmatpush2.bf16.msra.mxu0 0
  %1983 = vmatprep.subr.bf16.mxu0 0
  %1984 = vmatpush2.bf16.msra.mxu0 0
  %1985 = vmatprep.subr.bf16.mxu0 0
  %1986 = vmatpush2.bf16.msra.mxu0 0
  %1987 = vmatprep.mubr.bf16.mxu0 0
  %1988 = vmatmul.mubr.bf16.gmra.mxu0 %v1953
  %v1989 = vpop.f32.mrf.mxu0
  %v1990 = vadd.f32 0.0, %v1989
  %v1991 = vpop.f32.mrf.mxu0
  %v1992 = vpop.f32.mrf.mxu0
  %v1993 = vpop.f32.mrf.mxu0
  %1994 = vdwg.mxu0
  %v1995 = vadd.f32 %v1783, %v1990
  %v1996 = vmul.f32 %v1995, %v226
  %v1997 = vtanh.pop %v1996
  %v1998 = vmul.f32 %v1997, %v226
  %v1999 = vadd.f32 %v1998, %v227
  %v2000 = vmul.f32 %v1999, %v1941
  %2002 = vrot.lane.b32.xlu0 %v1999, 64
  %v2003 = vpop.permute.xlu0 %2002
  %v2005 = vmul.f32 %v1999, %v2003
  %2007 = vrot.lane.b32.xlu0 %v2005, 32
  %v2008 = vpop.permute.xlu0 %2007
  %v2010 = vadd.f32 %v2000, %v2008
  %v2011 = vtanh.pop %v2010
  %2013 = vrot.lane.b32.xlu0 %v2011, 64
  %v2014 = vpop.permute.xlu0 %2013
  %v2016 = vmul.f32 %v1999, %v2014
  %v2017 = vpack.c.bf16 %v2016, %v2016
  %2019 = vrot.lane.b32.xlu0 %v2017, 32
  %v2020 = vpop.permute.xlu0 %2019
  %v2022 = vsel %vm372, %v2020, 0
  %2024 = vmatprep.subr.bf16.mxu0 0
  %2025 = vmatpush1.bf16.msra.mxu0 0
  %2026 = vmatprep.subr.bf16.mxu0 0
  %2027 = vmatpush1.bf16.msra.mxu0 0
  %2028 = vmatprep.subr.bf16.mxu0 0
  %2029 = vmatpush1.bf16.msra.mxu0 0
  %2030 = vmatprep.subr.bf16.mxu0 0
  %2031 = vmatpush1.bf16.msra.mxu0 0
  %2032 = vmatprep.subr.bf16.mxu0 0
  %2033 = vmatpush1.bf16.msra.mxu0 0
  %2034 = vmatprep.subr.bf16.mxu0 0
  %2035 = vmatpush1.bf16.msra.mxu0 0
  %2036 = vmatprep.subr.bf16.mxu0 0
  %2037 = vmatpush1.bf16.msra.mxu0 %v1814
  %2038 = vmatprep.subr.bf16.mxu0 0
  %2039 = vmatpush1.bf16.msra.mxu0 %v1813
  %2040 = vmatprep.subr.bf16.mxu0 0
  %2041 = vmatpush2.bf16.msra.mxu0 0
  %2042 = vmatprep.subr.bf16.mxu0 0
  %2043 = vmatpush2.bf16.msra.mxu0 0
  %2044 = vmatprep.subr.bf16.mxu0 0
  %2045 = vmatpush2.bf16.msra.mxu0 0
  %2046 = vmatprep.subr.bf16.mxu0 0
  %2047 = vmatpush2.bf16.msra.mxu0 0
  %2048 = vmatprep.subr.bf16.mxu0 0
  %2049 = vmatpush2.bf16.msra.mxu0 0
  %2050 = vmatprep.subr.bf16.mxu0 0
  %2051 = vmatpush2.bf16.msra.mxu0 0
  %2052 = vmatprep.subr.bf16.mxu0 0
  %2053 = vmatpush2.bf16.msra.mxu0 0
  %2054 = vmatprep.subr.bf16.mxu0 0
  %2055 = vmatpush2.bf16.msra.mxu0 0
  %2056 = vmatprep.mubr.bf16.mxu0 0
  %2057 = vmatmul.mubr.bf16.gmra.mxu0 %v2022
  %v2058 = vpop.f32.mrf.mxu0
  %v2059 = vadd.f32 0.0, %v2058
  %v2060 = vpop.f32.mrf.mxu0
  %v2061 = vpop.f32.mrf.mxu0
  %v2062 = vpop.f32.mrf.mxu0
  %2063 = vdwg.mxu0
  %v2064 = vadd.f32 %v1786, %v2059
  %v2065 = vmul.f32 %v2064, %v226
  %v2066 = vtanh.pop %v2065
  %v2067 = vmul.f32 %v2066, %v226
  %v2068 = vadd.f32 %v2067, %v227
  %v2069 = vmul.f32 %v2068, %v2010
  %2071 = vrot.lane.b32.xlu0 %v2068, 64
  %v2072 = vpop.permute.xlu0 %2071
  %v2074 = vmul.f32 %v2068, %v2072
  %2076 = vrot.lane.b32.xlu0 %v2074, 32
  %v2077 = vpop.permute.xlu0 %2076
  %v2079 = vadd.f32 %v2069, %v2077
  %v2080 = vtanh.pop %v2079
  %2082 = vrot.lane.b32.xlu0 %v2080, 64
  %v2083 = vpop.permute.xlu0 %2082
  %v2085 = vmul.f32 %v2068, %v2083
  %v2086 = vpack.c.bf16 %v2085, %v2085
  %2088 = vrot.lane.b32.xlu0 %v2086, 32
  %v2089 = vpop.permute.xlu0 %2088
  %v2091 = vsel %vm372, %v2089, 0
  %2093 = vmatprep.subr.bf16.mxu0 0
  %2094 = vmatpush1.bf16.msra.mxu0 0
  %2095 = vmatprep.subr.bf16.mxu0 0
  %2096 = vmatpush1.bf16.msra.mxu0 0
  %2097 = vmatprep.subr.bf16.mxu0 0
  %2098 = vmatpush1.bf16.msra.mxu0 0
  %2099 = vmatprep.subr.bf16.mxu0 0
  %2100 = vmatpush1.bf16.msra.mxu0 0
  %2101 = vmatprep.subr.bf16.mxu0 0
  %2102 = vmatpush1.bf16.msra.mxu0 0
  %2103 = vmatprep.subr.bf16.mxu0 0
  %2104 = vmatpush1.bf16.msra.mxu0 0
  %2105 = vmatprep.subr.bf16.mxu0 0
  %2106 = vmatpush1.bf16.msra.mxu0 %v1814
  %2107 = vmatprep.subr.bf16.mxu0 0
  %2108 = vmatpush1.bf16.msra.mxu0 %v1813
  %2109 = vmatprep.subr.bf16.mxu0 0
  %2110 = vmatpush2.bf16.msra.mxu0 0
  %2111 = vmatprep.subr.bf16.mxu0 0
  %2112 = vmatpush2.bf16.msra.mxu0 0
  %2113 = vmatprep.subr.bf16.mxu0 0
  %2114 = vmatpush2.bf16.msra.mxu0 0
  %2115 = vmatprep.subr.bf16.mxu0 0
  %2116 = vmatpush2.bf16.msra.mxu0 0
  %2117 = vmatprep.subr.bf16.mxu0 0
  %2118 = vmatpush2.bf16.msra.mxu0 0
  %2119 = vmatprep.subr.bf16.mxu0 0
  %2120 = vmatpush2.bf16.msra.mxu0 0
  %2121 = vmatprep.subr.bf16.mxu0 0
  %2122 = vmatpush2.bf16.msra.mxu0 0
  %2123 = vmatprep.subr.bf16.mxu0 0
  %2124 = vmatpush2.bf16.msra.mxu0 0
  %2125 = vmatprep.mubr.bf16.mxu0 0
  %2126 = vmatmul.mubr.bf16.gmra.mxu0 %v2091
  %v2127 = vpop.f32.mrf.mxu0
  %v2128 = vadd.f32 0.0, %v2127
  %v2129 = vpop.f32.mrf.mxu0
  %v2130 = vpop.f32.mrf.mxu0
  %v2131 = vpop.f32.mrf.mxu0
  %2132 = vdwg.mxu0
  %v2133 = vadd.f32 %v1791, %v2128
  %v2134 = vmul.f32 %v2133, %v226
  %v2135 = vtanh.pop %v2134
  %v2136 = vmul.f32 %v2135, %v226
  %v2137 = vadd.f32 %v2136, %v227
  %v2138 = vmul.f32 %v2137, %v2079
  %2140 = vrot.lane.b32.xlu0 %v2137, 64
  %v2141 = vpop.permute.xlu0 %2140
  %v2143 = vmul.f32 %v2137, %v2141
  %2145 = vrot.lane.b32.xlu0 %v2143, 32
  %v2146 = vpop.permute.xlu0 %2145
  %v2148 = vadd.f32 %v2138, %v2146
  %v2149 = vtanh.pop %v2148
  %2151 = vrot.lane.b32.xlu0 %v2149, 64
  %v2152 = vpop.permute.xlu0 %2151
  %v2154 = vmul.f32 %v2137, %v2152
  %v2155 = vpack.c.bf16 %v2154, %v2154
  %2157 = vrot.lane.b32.xlu0 %v2155, 32
  %v2158 = vpop.permute.xlu0 %2157
  %v2160 = vsel %vm372, %v2158, 0
  %2162 = vmatprep.subr.bf16.mxu0 0
  %2163 = vmatpush1.bf16.msra.mxu0 0
  %2164 = vmatprep.subr.bf16.mxu0 0
  %2165 = vmatpush1.bf16.msra.mxu0 0
  %2166 = vmatprep.subr.bf16.mxu0 0
  %2167 = vmatpush1.bf16.msra.mxu0 0
  %2168 = vmatprep.subr.bf16.mxu0 0
  %2169 = vmatpush1.bf16.msra.mxu0 0
  %2170 = vmatprep.subr.bf16.mxu0 0
  %2171 = vmatpush1.bf16.msra.mxu0 0
  %2172 = vmatprep.subr.bf16.mxu0 0
  %2173 = vmatpush1.bf16.msra.mxu0 0
  %2174 = vmatprep.subr.bf16.mxu0 0
  %2175 = vmatpush1.bf16.msra.mxu0 %v1814
  %2176 = vmatprep.subr.bf16.mxu0 0
  %2177 = vmatpush1.bf16.msra.mxu0 %v1813
  %2178 = vmatprep.subr.bf16.mxu0 0
  %2179 = vmatpush2.bf16.msra.mxu0 0
  %2180 = vmatprep.subr.bf16.mxu0 0
  %2181 = vmatpush2.bf16.msra.mxu0 0
  %2182 = vmatprep.subr.bf16.mxu0 0
  %2183 = vmatpush2.bf16.msra.mxu0 0
  %2184 = vmatprep.subr.bf16.mxu0 0
  %2185 = vmatpush2.bf16.msra.mxu0 0
  %2186 = vmatprep.subr.bf16.mxu0 0
  %2187 = vmatpush2.bf16.msra.mxu0 0
  %2188 = vmatprep.subr.bf16.mxu0 0
  %2189 = vmatpush2.bf16.msra.mxu0 0
  %2190 = vmatprep.subr.bf16.mxu0 0
  %2191 = vmatpush2.bf16.msra.mxu0 0
  %2192 = vmatprep.subr.bf16.mxu0 0
  %2193 = vmatpush2.bf16.msra.mxu0 0
  %2194 = vmatprep.mubr.bf16.mxu0 0
  %2195 = vmatmul.mubr.bf16.gmra.mxu0 %v2160
  %v2196 = vpop.f32.mrf.mxu0
  %v2197 = vadd.f32 0.0, %v2196
  %v2198 = vpop.f32.mrf.mxu0
  %v2199 = vpop.f32.mrf.mxu0
  %v2200 = vpop.f32.mrf.mxu0
  %2201 = vdwg.mxu0
  %v2202 = vadd.f32 %v1794, %v2197
  %v2203 = vmul.f32 %v2202, %v226
  %v2204 = vtanh.pop %v2203
  %v2205 = vmul.f32 %v2204, %v226
  %v2206 = vadd.f32 %v2205, %v227
  %v2207 = vmul.f32 %v2206, %v2148
  %2209 = vrot.lane.b32.xlu0 %v2206, 64
  %v2210 = vpop.permute.xlu0 %2209
  %v2212 = vmul.f32 %v2206, %v2210
  %2214 = vrot.lane.b32.xlu0 %v2212, 32
  %v2215 = vpop.permute.xlu0 %2214
  %v2217 = vadd.f32 %v2207, %v2215
  %v2218 = vtanh.pop %v2217
  %2220 = vrot.lane.b32.xlu0 %v2218, 64
  %v2221 = vpop.permute.xlu0 %2220
  %v2223 = vmul.f32 %v2206, %v2221
  %v2224 = vpack.c.bf16 %v2223, %v2223
  %2226 = vrot.lane.b32.xlu0 %v2224, 32
  %v2227 = vpop.permute.xlu0 %2226
  %v2229 = vsel %vm372, %v2227, 0
  %2231 = vmatprep.subr.bf16.mxu0 0
  %2232 = vmatpush1.bf16.msra.mxu0 0
  %2233 = vmatprep.subr.bf16.mxu0 0
  %2234 = vmatpush1.bf16.msra.mxu0 0
  %2235 = vmatprep.subr.bf16.mxu0 0
  %2236 = vmatpush1.bf16.msra.mxu0 0
  %2237 = vmatprep.subr.bf16.mxu0 0
  %2238 = vmatpush1.bf16.msra.mxu0 0
  %2239 = vmatprep.subr.bf16.mxu0 0
  %2240 = vmatpush1.bf16.msra.mxu0 0
  %2241 = vmatprep.subr.bf16.mxu0 0
  %2242 = vmatpush1.bf16.msra.mxu0 0
  %2243 = vmatprep.subr.bf16.mxu0 0
  %2244 = vmatpush1.bf16.msra.mxu0 %v1814
  %2245 = vmatprep.subr.bf16.mxu0 0
  %2246 = vmatpush1.bf16.msra.mxu0 %v1813
  %2247 = vmatprep.subr.bf16.mxu0 0
  %2248 = vmatpush2.bf16.msra.mxu0 0
  %2249 = vmatprep.subr.bf16.mxu0 0
  %2250 = vmatpush2.bf16.msra.mxu0 0
  %2251 = vmatprep.subr.bf16.mxu0 0
  %2252 = vmatpush2.bf16.msra.mxu0 0
  %2253 = vmatprep.subr.bf16.mxu0 0
  %2254 = vmatpush2.bf16.msra.mxu0 0
  %2255 = vmatprep.subr.bf16.mxu0 0
  %2256 = vmatpush2.bf16.msra.mxu0 0
  %2257 = vmatprep.subr.bf16.mxu0 0
  %2258 = vmatpush2.bf16.msra.mxu0 0
  %2259 = vmatprep.subr.bf16.mxu0 0
  %2260 = vmatpush2.bf16.msra.mxu0 0
  %2261 = vmatprep.subr.bf16.mxu0 0
  %2262 = vmatpush2.bf16.msra.mxu0 0
  %2263 = vmatprep.mubr.bf16.mxu0 0
  %2264 = vmatmul.mubr.bf16.gmra.mxu0 %v2229
  %v2265 = vpop.f32.mrf.mxu0
  %v2266 = vadd.f32 0.0, %v2265
  %v2267 = vpop.f32.mrf.mxu0
  %v2268 = vpop.f32.mrf.mxu0
  %v2269 = vpop.f32.mrf.mxu0
  %2270 = vdwg.mxu0
  %v2271 = vadd.f32 %v1799, %v2266
  %v2272 = vmul.f32 %v2271, %v226
  %v2273 = vtanh.pop %v2272
  %v2274 = vmul.f32 %v2273, %v226
  %v2275 = vadd.f32 %v2274, %v227
  %v2276 = vmul.f32 %v2275, %v2217
  %2278 = vrot.lane.b32.xlu0 %v2275, 64
  %v2279 = vpop.permute.xlu0 %2278
  %v2281 = vmul.f32 %v2275, %v2279
  %2283 = vrot.lane.b32.xlu0 %v2281, 32
  %v2284 = vpop.permute.xlu0 %2283
  %v2286 = vadd.f32 %v2276, %v2284
  %v2287 = vtanh.pop %v2286
  %2289 = vrot.lane.b32.xlu0 %v2287, 64
  %v2290 = vpop.permute.xlu0 %2289
  %v2292 = vmul.f32 %v2275, %v2290
  %v2293 = vpack.c.bf16 %v2292, %v2292
  %2295 = vrot.lane.b32.xlu0 %v2293, 32
  %v2296 = vpop.permute.xlu0 %2295
  %v2298 = vsel %vm372, %v2296, 0
  %2300 = vmatprep.subr.bf16.mxu0 0
  %2301 = vmatpush1.bf16.msra.mxu0 0
  %2302 = vmatprep.subr.bf16.mxu0 0
  %2303 = vmatpush1.bf16.msra.mxu0 0
  %2304 = vmatprep.subr.bf16.mxu0 0
  %2305 = vmatpush1.bf16.msra.mxu0 0
  %2306 = vmatprep.subr.bf16.mxu0 0
  %2307 = vmatpush1.bf16.msra.mxu0 0
  %2308 = vmatprep.subr.bf16.mxu0 0
  %2309 = vmatpush1.bf16.msra.mxu0 0
  %2310 = vmatprep.subr.bf16.mxu0 0
  %2311 = vmatpush1.bf16.msra.mxu0 0
  %2312 = vmatprep.subr.bf16.mxu0 0
  %2313 = vmatpush1.bf16.msra.mxu0 %v1814
  %2314 = vmatprep.subr.bf16.mxu0 0
  %2315 = vmatpush1.bf16.msra.mxu0 %v1813
  %2316 = vmatprep.subr.bf16.mxu0 0
  %2317 = vmatpush2.bf16.msra.mxu0 0
  %2318 = vmatprep.subr.bf16.mxu0 0
  %2319 = vmatpush2.bf16.msra.mxu0 0
  %2320 = vmatprep.subr.bf16.mxu0 0
  %2321 = vmatpush2.bf16.msra.mxu0 0
  %2322 = vmatprep.subr.bf16.mxu0 0
  %2323 = vmatpush2.bf16.msra.mxu0 0
  %2324 = vmatprep.subr.bf16.mxu0 0
  %2325 = vmatpush2.bf16.msra.mxu0 0
  %2326 = vmatprep.subr.bf16.mxu0 0
  %2327 = vmatpush2.bf16.msra.mxu0 0
  %2328 = vmatprep.subr.bf16.mxu0 0
  %2329 = vmatpush2.bf16.msra.mxu0 0
  %2330 = vmatprep.subr.bf16.mxu0 0
  %2331 = vmatpush2.bf16.msra.mxu0 0
  %2332 = vmatprep.mubr.bf16.mxu0 0
  %2333 = vmatmul.mubr.bf16.gmra.mxu0 %v2298
  %v2334 = vpop.f32.mrf.mxu0
  %v2335 = vadd.f32 0.0, %v2334
  %v2336 = vpop.f32.mrf.mxu0
  %v2337 = vpop.f32.mrf.mxu0
  %v2338 = vpop.f32.mrf.mxu0
  %2339 = vdwg.mxu0
  %v2340 = vadd.f32 %v1802, %v2335
  %v2341 = vmul.f32 %v2340, %v226
  %v2342 = vtanh.pop %v2341
  %v2343 = vmul.f32 %v2342, %v226
  %v2344 = vadd.f32 %v2343, %v227
  %v2345 = vmul.f32 %v2344, %v2286
  %2347 = vrot.lane.b32.xlu0 %v2344, 64
  %v2348 = vpop.permute.xlu0 %2347
  %v2350 = vmul.f32 %v2344, %v2348
  %2352 = vrot.lane.b32.xlu0 %v2350, 32
  %v2353 = vpop.permute.xlu0 %2352
  %v2355 = vadd.f32 %v2345, %v2353
  %v2356 = vtanh.pop %v2355
  %2358 = vrot.lane.b32.xlu0 %v2356, 64
  %v2359 = vpop.permute.xlu0 %2358
  %v2361 = vmul.f32 %v2344, %v2359
  %s2362 = scalar_lea.vmem %s2, 96
  %v2363 = vld [vmem:[%s2362] sm:$0xf]
  %v2364 = vld [vmem:[%s2362 + $0x4] sm:$0xf]
  %v2365 = vld [vmem:[%s2362 + $0x8] sm:$0xf]
  %v2366 = vld [vmem:[%s2362 + $0xc] sm:$0xf]
  %v2367 = vld [vmem:[%s2362 + $0x10] sm:$0xf]
  %v2368 = vld [vmem:[%s2362 + $0x14] sm:$0xf]
  %v2369 = vld [vmem:[%s2362 + $0x18] sm:$0xf]
  %v2370 = vld [vmem:[%s2362 + $0x1c] sm:$0xf]
  %s2371 = scalar_lea.vmem %s3, 48
  %v2372 = vld [vmem:[%s2371] sm:$0xf]
  %v2373 = vld [vmem:[%s2371 + $0x4] sm:$0xf]
  %v2374 = vld [vmem:[%s2371 + $0x8] sm:$0xf]
  %v2375 = vld [vmem:[%s2371 + $0xc] sm:$0xf]
  %s2376 = scalar_lea.vmem %s4, 3
  %v2377 = vld [vmem:[%s2376] sm:$0x1]
  %v2379 = vlaneseq
  %v2380 = vshrl.u32 %v2379, 7
  %v2381 = vsub.s32 0, %v2380
  %v2382 = vrot.slane %v2377, %v2381
  %v2392 = vunpack.c.l.b16 %v2363
  %v2393 = vunpack.c.l.b16 %v2364
  %v2394 = vunpack.c.l.b16 %v2365
  %v2395 = vunpack.c.l.b16 %v2366
  %v2396 = vunpack.c.l.b16 %v2367
  %v2397 = vunpack.c.l.b16 %v2368
  %v2398 = vunpack.c.l.b16 %v2369
  %v2399 = vunpack.c.l.b16 %v2370
  %v2400 = vpack.c.b16 %v2393, %v2392
  %v2401 = vpack.c.b16 %v2395, %v2394
  %v2402 = vpack.c.b16 %v2397, %v2396
  %v2403 = vpack.c.b16 %v2399, %v2398
  %2408 = vmatprep.subr.bf16.mxu0 0
  %2409 = vmatpush1.bf16.msra.mxu0 0
  %2410 = vmatprep.subr.bf16.mxu0 0
  %2411 = vmatpush1.bf16.msra.mxu0 0
  %2412 = vmatprep.subr.bf16.mxu0 0
  %2413 = vmatpush1.bf16.msra.mxu0 0
  %2414 = vmatprep.subr.bf16.mxu0 0
  %2415 = vmatpush1.bf16.msra.mxu0 0
  %2416 = vmatprep.subr.bf16.mxu0 0
  %2417 = vmatpush1.bf16.msra.mxu0 %v2403
  %2418 = vmatprep.subr.bf16.mxu0 0
  %2419 = vmatpush1.bf16.msra.mxu0 %v2402
  %2420 = vmatprep.subr.bf16.mxu0 0
  %2421 = vmatpush1.bf16.msra.mxu0 %v2401
  %2422 = vmatprep.subr.bf16.mxu0 0
  %2423 = vmatpush1.bf16.msra.mxu0 %v2400
  %2424 = vmatprep.subr.bf16.mxu0 0
  %2425 = vmatpush2.bf16.msra.mxu0 0
  %2426 = vmatprep.subr.bf16.mxu0 0
  %2427 = vmatpush2.bf16.msra.mxu0 0
  %2428 = vmatprep.subr.bf16.mxu0 0
  %2429 = vmatpush2.bf16.msra.mxu0 0
  %2430 = vmatprep.subr.bf16.mxu0 0
  %2431 = vmatpush2.bf16.msra.mxu0 0
  %2432 = vmatprep.subr.bf16.mxu0 0
  %2433 = vmatpush2.bf16.msra.mxu0 0
  %2434 = vmatprep.subr.bf16.mxu0 0
  %2435 = vmatpush2.bf16.msra.mxu0 0
  %2436 = vmatprep.subr.bf16.mxu0 0
  %2437 = vmatpush2.bf16.msra.mxu0 0
  %2438 = vmatprep.subr.bf16.mxu0 0
  %2439 = vmatpush2.bf16.msra.mxu0 0
  %2440 = vmatprep.mubr.bf16.mxu0 0
  %2441 = vmatmul.mubr.bf16.gmra.mxu0 %v1729
  %v2442 = vpop.f32.mrf.mxu0
  %v2443 = vadd.f32 %v2382, %v2442
  %v2444 = vpop.f32.mrf.mxu0
  %v2445 = vpop.f32.mrf.mxu0
  %v2446 = vadd.f32 %v2382, %v2445
  %v2447 = vpop.f32.mrf.mxu0
  %2448 = vmatprep.mubr.bf16.mxu0 0
  %2449 = vmatmul.mubr.bf16.gmra.mxu0 %v1732
  %v2450 = vpop.f32.mrf.mxu0
  %v2451 = vadd.f32 %v2382, %v2450
  %v2452 = vpop.f32.mrf.mxu0
  %v2453 = vpop.f32.mrf.mxu0
  %v2454 = vadd.f32 %v2382, %v2453
  %v2455 = vpop.f32.mrf.mxu0
  %2456 = vmatprep.mubr.bf16.mxu0 0
  %2457 = vmatmul.mubr.bf16.gmra.mxu0 %v1735
  %v2458 = vpop.f32.mrf.mxu0
  %v2459 = vadd.f32 %v2382, %v2458
  %v2460 = vpop.f32.mrf.mxu0
  %v2461 = vpop.f32.mrf.mxu0
  %v2462 = vadd.f32 %v2382, %v2461
  %v2463 = vpop.f32.mrf.mxu0
  %2464 = vmatprep.mubr.bf16.mxu0 0
  %2465 = vmatmul.mubr.bf16.gmra.mxu0 %v1738
  %v2466 = vpop.f32.mrf.mxu0
  %v2467 = vadd.f32 %v2382, %v2466
  %v2468 = vpop.f32.mrf.mxu0
  %v2469 = vpop.f32.mrf.mxu0
  %v2470 = vadd.f32 %v2382, %v2469
  %v2471 = vpop.f32.mrf.mxu0
  %2472 = vdwg.mxu0
  %v2477 = vunpack.c.l.b16 %v2372
  %v2478 = vunpack.c.l.b16 %v2373
  %v2479 = vunpack.c.l.b16 %v2374
  %v2480 = vunpack.c.l.b16 %v2375
  %v2481 = vpack.c.b16 %v2478, %v2477
  %v2482 = vpack.c.b16 %v2480, %v2479
  %2485 = vmatprep.subr.bf16.mxu0 0
  %2486 = vmatpush1.bf16.msra.mxu0 0
  %2487 = vmatprep.subr.bf16.mxu0 0
  %2488 = vmatpush1.bf16.msra.mxu0 0
  %2489 = vmatprep.subr.bf16.mxu0 0
  %2490 = vmatpush1.bf16.msra.mxu0 0
  %2491 = vmatprep.subr.bf16.mxu0 0
  %2492 = vmatpush1.bf16.msra.mxu0 0
  %2493 = vmatprep.subr.bf16.mxu0 0
  %2494 = vmatpush1.bf16.msra.mxu0 0
  %2495 = vmatprep.subr.bf16.mxu0 0
  %2496 = vmatpush1.bf16.msra.mxu0 0
  %2497 = vmatprep.subr.bf16.mxu0 0
  %2498 = vmatpush1.bf16.msra.mxu0 %v2482
  %2499 = vmatprep.subr.bf16.mxu0 0
  %2500 = vmatpush1.bf16.msra.mxu0 %v2481
  %2501 = vmatprep.subr.bf16.mxu0 0
  %2502 = vmatpush2.bf16.msra.mxu0 0
  %2503 = vmatprep.subr.bf16.mxu0 0
  %2504 = vmatpush2.bf16.msra.mxu0 0
  %2505 = vmatprep.subr.bf16.mxu0 0
  %2506 = vmatpush2.bf16.msra.mxu0 0
  %2507 = vmatprep.subr.bf16.mxu0 0
  %2508 = vmatpush2.bf16.msra.mxu0 0
  %2509 = vmatprep.subr.bf16.mxu0 0
  %2510 = vmatpush2.bf16.msra.mxu0 0
  %2511 = vmatprep.subr.bf16.mxu0 0
  %2512 = vmatpush2.bf16.msra.mxu0 0
  %2513 = vmatprep.subr.bf16.mxu0 0
  %2514 = vmatpush2.bf16.msra.mxu0 0
  %2515 = vmatprep.subr.bf16.mxu0 0
  %2516 = vmatpush2.bf16.msra.mxu0 0
  %2517 = vmatprep.mubr.bf16.mxu0 0
  %2518 = vmatmul.mubr.bf16.gmra.mxu0 %v374
  %v2519 = vpop.f32.mrf.mxu0
  %v2520 = vadd.f32 0.0, %v2519
  %v2521 = vpop.f32.mrf.mxu0
  %v2522 = vpop.f32.mrf.mxu0
  %v2523 = vpop.f32.mrf.mxu0
  %2524 = vdwg.mxu0
  %v2525 = vadd.f32 %v2470, %v2520
  %v2526 = vmul.f32 %v2525, %v226
  %v2527 = vtanh.pop %v2526
  %v2528 = vmul.f32 %v2527, %v226
  %v2529 = vadd.f32 %v2528, %v227
  %v2530 = vmul.f32 %v2529, 0.0
  %2532 = vrot.lane.b32.xlu0 %v2529, 64
  %v2533 = vpop.permute.xlu0 %2532
  %v2535 = vmul.f32 %v2529, %v2533
  %2537 = vrot.lane.b32.xlu0 %v2535, 32
  %v2538 = vpop.permute.xlu0 %2537
  %v2540 = vadd.f32 %v2530, %v2538
  %v2541 = vtanh.pop %v2540
  %2543 = vrot.lane.b32.xlu0 %v2541, 64
  %v2544 = vpop.permute.xlu0 %2543
  %v2546 = vmul.f32 %v2529, %v2544
  %v2547 = vpack.c.bf16 %v2546, %v2546
  %2549 = vrot.lane.b32.xlu0 %v2547, 32
  %v2550 = vpop.permute.xlu0 %2549
  %v2552 = vsel %vm372, %v2550, 0
  %2554 = vmatprep.subr.bf16.mxu0 0
  %2555 = vmatpush1.bf16.msra.mxu0 0
  %2556 = vmatprep.subr.bf16.mxu0 0
  %2557 = vmatpush1.bf16.msra.mxu0 0
  %2558 = vmatprep.subr.bf16.mxu0 0
  %2559 = vmatpush1.bf16.msra.mxu0 0
  %2560 = vmatprep.subr.bf16.mxu0 0
  %2561 = vmatpush1.bf16.msra.mxu0 0
  %2562 = vmatprep.subr.bf16.mxu0 0
  %2563 = vmatpush1.bf16.msra.mxu0 0
  %2564 = vmatprep.subr.bf16.mxu0 0
  %2565 = vmatpush1.bf16.msra.mxu0 0
  %2566 = vmatprep.subr.bf16.mxu0 0
  %2567 = vmatpush1.bf16.msra.mxu0 %v2482
  %2568 = vmatprep.subr.bf16.mxu0 0
  %2569 = vmatpush1.bf16.msra.mxu0 %v2481
  %2570 = vmatprep.subr.bf16.mxu0 0
  %2571 = vmatpush2.bf16.msra.mxu0 0
  %2572 = vmatprep.subr.bf16.mxu0 0
  %2573 = vmatpush2.bf16.msra.mxu0 0
  %2574 = vmatprep.subr.bf16.mxu0 0
  %2575 = vmatpush2.bf16.msra.mxu0 0
  %2576 = vmatprep.subr.bf16.mxu0 0
  %2577 = vmatpush2.bf16.msra.mxu0 0
  %2578 = vmatprep.subr.bf16.mxu0 0
  %2579 = vmatpush2.bf16.msra.mxu0 0
  %2580 = vmatprep.subr.bf16.mxu0 0
  %2581 = vmatpush2.bf16.msra.mxu0 0
  %2582 = vmatprep.subr.bf16.mxu0 0
  %2583 = vmatpush2.bf16.msra.mxu0 0
  %2584 = vmatprep.subr.bf16.mxu0 0
  %2585 = vmatpush2.bf16.msra.mxu0 0
  %2586 = vmatprep.mubr.bf16.mxu0 0
  %2587 = vmatmul.mubr.bf16.gmra.mxu0 %v2552
  %v2588 = vpop.f32.mrf.mxu0
  %v2589 = vadd.f32 0.0, %v2588
  %v2590 = vpop.f32.mrf.mxu0
  %v2591 = vpop.f32.mrf.mxu0
  %v2592 = vpop.f32.mrf.mxu0
  %2593 = vdwg.mxu0
  %v2594 = vadd.f32 %v2467, %v2589
  %v2595 = vmul.f32 %v2594, %v226
  %v2596 = vtanh.pop %v2595
  %v2597 = vmul.f32 %v2596, %v226
  %v2598 = vadd.f32 %v2597, %v227
  %v2599 = vmul.f32 %v2598, %v2540
  %2601 = vrot.lane.b32.xlu0 %v2598, 64
  %v2602 = vpop.permute.xlu0 %2601
  %v2604 = vmul.f32 %v2598, %v2602
  %2606 = vrot.lane.b32.xlu0 %v2604, 32
  %v2607 = vpop.permute.xlu0 %2606
  %v2609 = vadd.f32 %v2599, %v2607
  %v2610 = vtanh.pop %v2609
  %2612 = vrot.lane.b32.xlu0 %v2610, 64
  %v2613 = vpop.permute.xlu0 %2612
  %v2615 = vmul.f32 %v2598, %v2613
  %v2616 = vpack.c.bf16 %v2615, %v2615
  %2618 = vrot.lane.b32.xlu0 %v2616, 32
  %v2619 = vpop.permute.xlu0 %2618
  %v2621 = vsel %vm372, %v2619, 0
  %2623 = vmatprep.subr.bf16.mxu0 0
  %2624 = vmatpush1.bf16.msra.mxu0 0
  %2625 = vmatprep.subr.bf16.mxu0 0
  %2626 = vmatpush1.bf16.msra.mxu0 0
  %2627 = vmatprep.subr.bf16.mxu0 0
  %2628 = vmatpush1.bf16.msra.mxu0 0
  %2629 = vmatprep.subr.bf16.mxu0 0
  %2630 = vmatpush1.bf16.msra.mxu0 0
  %2631 = vmatprep.subr.bf16.mxu0 0
  %2632 = vmatpush1.bf16.msra.mxu0 0
  %2633 = vmatprep.subr.bf16.mxu0 0
  %2634 = vmatpush1.bf16.msra.mxu0 0
  %2635 = vmatprep.subr.bf16.mxu0 0
  %2636 = vmatpush1.bf16.msra.mxu0 %v2482
  %2637 = vmatprep.subr.bf16.mxu0 0
  %2638 = vmatpush1.bf16.msra.mxu0 %v2481
  %2639 = vmatprep.subr.bf16.mxu0 0
  %2640 = vmatpush2.bf16.msra.mxu0 0
  %2641 = vmatprep.subr.bf16.mxu0 0
  %2642 = vmatpush2.bf16.msra.mxu0 0
  %2643 = vmatprep.subr.bf16.mxu0 0
  %2644 = vmatpush2.bf16.msra.mxu0 0
  %2645 = vmatprep.subr.bf16.mxu0 0
  %2646 = vmatpush2.bf16.msra.mxu0 0
  %2647 = vmatprep.subr.bf16.mxu0 0
  %2648 = vmatpush2.bf16.msra.mxu0 0
  %2649 = vmatprep.subr.bf16.mxu0 0
  %2650 = vmatpush2.bf16.msra.mxu0 0
  %2651 = vmatprep.subr.bf16.mxu0 0
  %2652 = vmatpush2.bf16.msra.mxu0 0
  %2653 = vmatprep.subr.bf16.mxu0 0
  %2654 = vmatpush2.bf16.msra.mxu0 0
  %2655 = vmatprep.mubr.bf16.mxu0 0
  %2656 = vmatmul.mubr.bf16.gmra.mxu0 %v2621
  %v2657 = vpop.f32.mrf.mxu0
  %v2658 = vadd.f32 0.0, %v2657
  %v2659 = vpop.f32.mrf.mxu0
  %v2660 = vpop.f32.mrf.mxu0
  %v2661 = vpop.f32.mrf.mxu0
  %2662 = vdwg.mxu0
  %v2663 = vadd.f32 %v2462, %v2658
  %v2664 = vmul.f32 %v2663, %v226
  %v2665 = vtanh.pop %v2664
  %v2666 = vmul.f32 %v2665, %v226
  %v2667 = vadd.f32 %v2666, %v227
  %v2668 = vmul.f32 %v2667, %v2609
  %2670 = vrot.lane.b32.xlu0 %v2667, 64
  %v2671 = vpop.permute.xlu0 %2670
  %v2673 = vmul.f32 %v2667, %v2671
  %2675 = vrot.lane.b32.xlu0 %v2673, 32
  %v2676 = vpop.permute.xlu0 %2675
  %v2678 = vadd.f32 %v2668, %v2676
  %v2679 = vtanh.pop %v2678
  %2681 = vrot.lane.b32.xlu0 %v2679, 64
  %v2682 = vpop.permute.xlu0 %2681
  %v2684 = vmul.f32 %v2667, %v2682
  %v2685 = vpack.c.bf16 %v2684, %v2684
  %2687 = vrot.lane.b32.xlu0 %v2685, 32
  %v2688 = vpop.permute.xlu0 %2687
  %v2690 = vsel %vm372, %v2688, 0
  %2692 = vmatprep.subr.bf16.mxu0 0
  %2693 = vmatpush1.bf16.msra.mxu0 0
  %2694 = vmatprep.subr.bf16.mxu0 0
  %2695 = vmatpush1.bf16.msra.mxu0 0
  %2696 = vmatprep.subr.bf16.mxu0 0
  %2697 = vmatpush1.bf16.msra.mxu0 0
  %2698 = vmatprep.subr.bf16.mxu0 0
  %2699 = vmatpush1.bf16.msra.mxu0 0
  %2700 = vmatprep.subr.bf16.mxu0 0
  %2701 = vmatpush1.bf16.msra.mxu0 0
  %2702 = vmatprep.subr.bf16.mxu0 0
  %2703 = vmatpush1.bf16.msra.mxu0 0
  %2704 = vmatprep.subr.bf16.mxu0 0
  %2705 = vmatpush1.bf16.msra.mxu0 %v2482
  %2706 = vmatprep.subr.bf16.mxu0 0
  %2707 = vmatpush1.bf16.msra.mxu0 %v2481
  %2708 = vmatprep.subr.bf16.mxu0 0
  %2709 = vmatpush2.bf16.msra.mxu0 0
  %2710 = vmatprep.subr.bf16.mxu0 0
  %2711 = vmatpush2.bf16.msra.mxu0 0
  %2712 = vmatprep.subr.bf16.mxu0 0
  %2713 = vmatpush2.bf16.msra.mxu0 0
  %2714 = vmatprep.subr.bf16.mxu0 0
  %2715 = vmatpush2.bf16.msra.mxu0 0
  %2716 = vmatprep.subr.bf16.mxu0 0
  %2717 = vmatpush2.bf16.msra.mxu0 0
  %2718 = vmatprep.subr.bf16.mxu0 0
  %2719 = vmatpush2.bf16.msra.mxu0 0
  %2720 = vmatprep.subr.bf16.mxu0 0
  %2721 = vmatpush2.bf16.msra.mxu0 0
  %2722 = vmatprep.subr.bf16.mxu0 0
  %2723 = vmatpush2.bf16.msra.mxu0 0
  %2724 = vmatprep.mubr.bf16.mxu0 0
  %2725 = vmatmul.mubr.bf16.gmra.mxu0 %v2690
  %v2726 = vpop.f32.mrf.mxu0
  %v2727 = vadd.f32 0.0, %v2726
  %v2728 = vpop.f32.mrf.mxu0
  %v2729 = vpop.f32.mrf.mxu0
  %v2730 = vpop.f32.mrf.mxu0
  %2731 = vdwg.mxu0
  %v2732 = vadd.f32 %v2459, %v2727
  %v2733 = vmul.f32 %v2732, %v226
  %v2734 = vtanh.pop %v2733
  %v2735 = vmul.f32 %v2734, %v226
  %v2736 = vadd.f32 %v2735, %v227
  %v2737 = vmul.f32 %v2736, %v2678
  %2739 = vrot.lane.b32.xlu0 %v2736, 64
  %v2740 = vpop.permute.xlu0 %2739
  %v2742 = vmul.f32 %v2736, %v2740
  %2744 = vrot.lane.b32.xlu0 %v2742, 32
  %v2745 = vpop.permute.xlu0 %2744
  %v2747 = vadd.f32 %v2737, %v2745
  %v2748 = vtanh.pop %v2747
  %2750 = vrot.lane.b32.xlu0 %v2748, 64
  %v2751 = vpop.permute.xlu0 %2750
  %v2753 = vmul.f32 %v2736, %v2751
  %v2754 = vpack.c.bf16 %v2753, %v2753
  %2756 = vrot.lane.b32.xlu0 %v2754, 32
  %v2757 = vpop.permute.xlu0 %2756
  %v2759 = vsel %vm372, %v2757, 0
  %2761 = vmatprep.subr.bf16.mxu0 0
  %2762 = vmatpush1.bf16.msra.mxu0 0
  %2763 = vmatprep.subr.bf16.mxu0 0
  %2764 = vmatpush1.bf16.msra.mxu0 0
  %2765 = vmatprep.subr.bf16.mxu0 0
  %2766 = vmatpush1.bf16.msra.mxu0 0
  %2767 = vmatprep.subr.bf16.mxu0 0
  %2768 = vmatpush1.bf16.msra.mxu0 0
  %2769 = vmatprep.subr.bf16.mxu0 0
  %2770 = vmatpush1.bf16.msra.mxu0 0
  %2771 = vmatprep.subr.bf16.mxu0 0
  %2772 = vmatpush1.bf16.msra.mxu0 0
  %2773 = vmatprep.subr.bf16.mxu0 0
  %2774 = vmatpush1.bf16.msra.mxu0 %v2482
  %2775 = vmatprep.subr.bf16.mxu0 0
  %2776 = vmatpush1.bf16.msra.mxu0 %v2481
  %2777 = vmatprep.subr.bf16.mxu0 0
  %2778 = vmatpush2.bf16.msra.mxu0 0
  %2779 = vmatprep.subr.bf16.mxu0 0
  %2780 = vmatpush2.bf16.msra.mxu0 0
  %2781 = vmatprep.subr.bf16.mxu0 0
  %2782 = vmatpush2.bf16.msra.mxu0 0
  %2783 = vmatprep.subr.bf16.mxu0 0
  %2784 = vmatpush2.bf16.msra.mxu0 0
  %2785 = vmatprep.subr.bf16.mxu0 0
  %2786 = vmatpush2.bf16.msra.mxu0 0
  %2787 = vmatprep.subr.bf16.mxu0 0
  %2788 = vmatpush2.bf16.msra.mxu0 0
  %2789 = vmatprep.subr.bf16.mxu0 0
  %2790 = vmatpush2.bf16.msra.mxu0 0
  %2791 = vmatprep.subr.bf16.mxu0 0
  %2792 = vmatpush2.bf16.msra.mxu0 0
  %2793 = vmatprep.mubr.bf16.mxu0 0
  %2794 = vmatmul.mubr.bf16.gmra.mxu0 %v2759
  %v2795 = vpop.f32.mrf.mxu0
  %v2796 = vadd.f32 0.0, %v2795
  %v2797 = vpop.f32.mrf.mxu0
  %v2798 = vpop.f32.mrf.mxu0
  %v2799 = vpop.f32.mrf.mxu0
  %2800 = vdwg.mxu0
  %v2801 = vadd.f32 %v2454, %v2796
  %v2802 = vmul.f32 %v2801, %v226
  %v2803 = vtanh.pop %v2802
  %v2804 = vmul.f32 %v2803, %v226
  %v2805 = vadd.f32 %v2804, %v227
  %v2806 = vmul.f32 %v2805, %v2747
  %2808 = vrot.lane.b32.xlu0 %v2805, 64
  %v2809 = vpop.permute.xlu0 %2808
  %v2811 = vmul.f32 %v2805, %v2809
  %2813 = vrot.lane.b32.xlu0 %v2811, 32
  %v2814 = vpop.permute.xlu0 %2813
  %v2816 = vadd.f32 %v2806, %v2814
  %v2817 = vtanh.pop %v2816
  %2819 = vrot.lane.b32.xlu0 %v2817, 64
  %v2820 = vpop.permute.xlu0 %2819
  %v2822 = vmul.f32 %v2805, %v2820
  %v2823 = vpack.c.bf16 %v2822, %v2822
  %2825 = vrot.lane.b32.xlu0 %v2823, 32
  %v2826 = vpop.permute.xlu0 %2825
  %v2828 = vsel %vm372, %v2826, 0
  %2830 = vmatprep.subr.bf16.mxu0 0
  %2831 = vmatpush1.bf16.msra.mxu0 0
  %2832 = vmatprep.subr.bf16.mxu0 0
  %2833 = vmatpush1.bf16.msra.mxu0 0
  %2834 = vmatprep.subr.bf16.mxu0 0
  %2835 = vmatpush1.bf16.msra.mxu0 0
  %2836 = vmatprep.subr.bf16.mxu0 0
  %2837 = vmatpush1.bf16.msra.mxu0 0
  %2838 = vmatprep.subr.bf16.mxu0 0
  %2839 = vmatpush1.bf16.msra.mxu0 0
  %2840 = vmatprep.subr.bf16.mxu0 0
  %2841 = vmatpush1.bf16.msra.mxu0 0
  %2842 = vmatprep.subr.bf16.mxu0 0
  %2843 = vmatpush1.bf16.msra.mxu0 %v2482
  %2844 = vmatprep.subr.bf16.mxu0 0
  %2845 = vmatpush1.bf16.msra.mxu0 %v2481
  %2846 = vmatprep.subr.bf16.mxu0 0
  %2847 = vmatpush2.bf16.msra.mxu0 0
  %2848 = vmatprep.subr.bf16.mxu0 0
  %2849 = vmatpush2.bf16.msra.mxu0 0
  %2850 = vmatprep.subr.bf16.mxu0 0
  %2851 = vmatpush2.bf16.msra.mxu0 0
  %2852 = vmatprep.subr.bf16.mxu0 0
  %2853 = vmatpush2.bf16.msra.mxu0 0
  %2854 = vmatprep.subr.bf16.mxu0 0
  %2855 = vmatpush2.bf16.msra.mxu0 0
  %2856 = vmatprep.subr.bf16.mxu0 0
  %2857 = vmatpush2.bf16.msra.mxu0 0
  %2858 = vmatprep.subr.bf16.mxu0 0
  %2859 = vmatpush2.bf16.msra.mxu0 0
  %2860 = vmatprep.subr.bf16.mxu0 0
  %2861 = vmatpush2.bf16.msra.mxu0 0
  %2862 = vmatprep.mubr.bf16.mxu0 0
  %2863 = vmatmul.mubr.bf16.gmra.mxu0 %v2828
  %v2864 = vpop.f32.mrf.mxu0
  %v2865 = vadd.f32 0.0, %v2864
  %v2866 = vpop.f32.mrf.mxu0
  %v2867 = vpop.f32.mrf.mxu0
  %v2868 = vpop.f32.mrf.mxu0
  %2869 = vdwg.mxu0
  %v2870 = vadd.f32 %v2451, %v2865
  %v2871 = vmul.f32 %v2870, %v226
  %v2872 = vtanh.pop %v2871
  %v2873 = vmul.f32 %v2872, %v226
  %v2874 = vadd.f32 %v2873, %v227
  %v2875 = vmul.f32 %v2874, %v2816
  %2877 = vrot.lane.b32.xlu0 %v2874, 64
  %v2878 = vpop.permute.xlu0 %2877
  %v2880 = vmul.f32 %v2874, %v2878
  %2882 = vrot.lane.b32.xlu0 %v2880, 32
  %v2883 = vpop.permute.xlu0 %2882
  %v2885 = vadd.f32 %v2875, %v2883
  %v2886 = vtanh.pop %v2885
  %2888 = vrot.lane.b32.xlu0 %v2886, 64
  %v2889 = vpop.permute.xlu0 %2888
  %v2891 = vmul.f32 %v2874, %v2889
  %v2892 = vpack.c.bf16 %v2891, %v2891
  %2894 = vrot.lane.b32.xlu0 %v2892, 32
  %v2895 = vpop.permute.xlu0 %2894
  %v2897 = vsel %vm372, %v2895, 0
  %2899 = vmatprep.subr.bf16.mxu0 0
  %2900 = vmatpush1.bf16.msra.mxu0 0
  %2901 = vmatprep.subr.bf16.mxu0 0
  %2902 = vmatpush1.bf16.msra.mxu0 0
  %2903 = vmatprep.subr.bf16.mxu0 0
  %2904 = vmatpush1.bf16.msra.mxu0 0
  %2905 = vmatprep.subr.bf16.mxu0 0
  %2906 = vmatpush1.bf16.msra.mxu0 0
  %2907 = vmatprep.subr.bf16.mxu0 0
  %2908 = vmatpush1.bf16.msra.mxu0 0
  %2909 = vmatprep.subr.bf16.mxu0 0
  %2910 = vmatpush1.bf16.msra.mxu0 0
  %2911 = vmatprep.subr.bf16.mxu0 0
  %2912 = vmatpush1.bf16.msra.mxu0 %v2482
  %2913 = vmatprep.subr.bf16.mxu0 0
  %2914 = vmatpush1.bf16.msra.mxu0 %v2481
  %2915 = vmatprep.subr.bf16.mxu0 0
  %2916 = vmatpush2.bf16.msra.mxu0 0
  %2917 = vmatprep.subr.bf16.mxu0 0
  %2918 = vmatpush2.bf16.msra.mxu0 0
  %2919 = vmatprep.subr.bf16.mxu0 0
  %2920 = vmatpush2.bf16.msra.mxu0 0
  %2921 = vmatprep.subr.bf16.mxu0 0
  %2922 = vmatpush2.bf16.msra.mxu0 0
  %2923 = vmatprep.subr.bf16.mxu0 0
  %2924 = vmatpush2.bf16.msra.mxu0 0
  %2925 = vmatprep.subr.bf16.mxu0 0
  %2926 = vmatpush2.bf16.msra.mxu0 0
  %2927 = vmatprep.subr.bf16.mxu0 0
  %2928 = vmatpush2.bf16.msra.mxu0 0
  %2929 = vmatprep.subr.bf16.mxu0 0
  %2930 = vmatpush2.bf16.msra.mxu0 0
  %2931 = vmatprep.mubr.bf16.mxu0 0
  %2932 = vmatmul.mubr.bf16.gmra.mxu0 %v2897
  %v2933 = vpop.f32.mrf.mxu0
  %v2934 = vadd.f32 0.0, %v2933
  %v2935 = vpop.f32.mrf.mxu0
  %v2936 = vpop.f32.mrf.mxu0
  %v2937 = vpop.f32.mrf.mxu0
  %2938 = vdwg.mxu0
  %v2939 = vadd.f32 %v2446, %v2934
  %v2940 = vmul.f32 %v2939, %v226
  %v2941 = vtanh.pop %v2940
  %v2942 = vmul.f32 %v2941, %v226
  %v2943 = vadd.f32 %v2942, %v227
  %v2944 = vmul.f32 %v2943, %v2885
  %2946 = vrot.lane.b32.xlu0 %v2943, 64
  %v2947 = vpop.permute.xlu0 %2946
  %v2949 = vmul.f32 %v2943, %v2947
  %2951 = vrot.lane.b32.xlu0 %v2949, 32
  %v2952 = vpop.permute.xlu0 %2951
  %v2954 = vadd.f32 %v2944, %v2952
  %v2955 = vtanh.pop %v2954
  %2957 = vrot.lane.b32.xlu0 %v2955, 64
  %v2958 = vpop.permute.xlu0 %2957
  %v2960 = vmul.f32 %v2943, %v2958
  %v2961 = vpack.c.bf16 %v2960, %v2960
  %2963 = vrot.lane.b32.xlu0 %v2961, 32
  %v2964 = vpop.permute.xlu0 %2963
  %v2966 = vsel %vm372, %v2964, 0
  %2968 = vmatprep.subr.bf16.mxu0 0
  %2969 = vmatpush1.bf16.msra.mxu0 0
  %2970 = vmatprep.subr.bf16.mxu0 0
  %2971 = vmatpush1.bf16.msra.mxu0 0
  %2972 = vmatprep.subr.bf16.mxu0 0
  %2973 = vmatpush1.bf16.msra.mxu0 0
  %2974 = vmatprep.subr.bf16.mxu0 0
  %2975 = vmatpush1.bf16.msra.mxu0 0
  %2976 = vmatprep.subr.bf16.mxu0 0
  %2977 = vmatpush1.bf16.msra.mxu0 0
  %2978 = vmatprep.subr.bf16.mxu0 0
  %2979 = vmatpush1.bf16.msra.mxu0 0
  %2980 = vmatprep.subr.bf16.mxu0 0
  %2981 = vmatpush1.bf16.msra.mxu0 %v2482
  %2982 = vmatprep.subr.bf16.mxu0 0
  %2983 = vmatpush1.bf16.msra.mxu0 %v2481
  %2984 = vmatprep.subr.bf16.mxu0 0
  %2985 = vmatpush2.bf16.msra.mxu0 0
  %2986 = vmatprep.subr.bf16.mxu0 0
  %2987 = vmatpush2.bf16.msra.mxu0 0
  %2988 = vmatprep.subr.bf16.mxu0 0
  %2989 = vmatpush2.bf16.msra.mxu0 0
  %2990 = vmatprep.subr.bf16.mxu0 0
  %2991 = vmatpush2.bf16.msra.mxu0 0
  %2992 = vmatprep.subr.bf16.mxu0 0
  %2993 = vmatpush2.bf16.msra.mxu0 0
  %2994 = vmatprep.subr.bf16.mxu0 0
  %2995 = vmatpush2.bf16.msra.mxu0 0
  %2996 = vmatprep.subr.bf16.mxu0 0
  %2997 = vmatpush2.bf16.msra.mxu0 0
  %2998 = vmatprep.subr.bf16.mxu0 0
  %2999 = vmatpush2.bf16.msra.mxu0 0
  %3000 = vmatprep.mubr.bf16.mxu0 0
  %3001 = vmatmul.mubr.bf16.gmra.mxu0 %v2966
  %v3002 = vpop.f32.mrf.mxu0
  %v3003 = vadd.f32 0.0, %v3002
  %v3004 = vpop.f32.mrf.mxu0
  %v3005 = vpop.f32.mrf.mxu0
  %v3006 = vpop.f32.mrf.mxu0
  %3007 = vdwg.mxu0
  %v3008 = vadd.f32 %v2443, %v3003
  %v3009 = vmul.f32 %v3008, %v226
  %v3010 = vtanh.pop %v3009
  %v3011 = vmul.f32 %v3010, %v226
  %v3012 = vadd.f32 %v3011, %v227
  %v3013 = vmul.f32 %v3012, %v2954
  %3015 = vrot.lane.b32.xlu0 %v3012, 64
  %v3016 = vpop.permute.xlu0 %3015
  %v3018 = vmul.f32 %v3012, %v3016
  %3020 = vrot.lane.b32.xlu0 %v3018, 32
  %v3021 = vpop.permute.xlu0 %3020
  %v3023 = vadd.f32 %v3013, %v3021
  %v3024 = vtanh.pop %v3023
  %3026 = vrot.lane.b32.xlu0 %v3024, 64
  %v3027 = vpop.permute.xlu0 %3026
  %v3029 = vmul.f32 %v3012, %v3027
  %3031 = vrot.lane.b32.xlu0 %v3029, 32
  %v3032 = vpop.permute.xlu0 %3031
  %3035 = vrot.lane.b32.xlu0 %v2361, 64
  %v3036 = vpop.permute.xlu0 %3035
  %v3038 = vsel %vm372, %v3032, %v3036
  %v3039 = vmul.f32 %v3038, 0.5
  %v3040 = vmul.f32 %v3038, 0.70710677
  %v3041 = verf.f32.pop %v3040
  %v3042 = vadd.f32 %v3041, 1.0
  %v3043 = vmul.f32 %v3039, %v3042
  %v3044 = vld [vmem:[%s5] sm:$0xff]
  %v3045 = vld [vmem:[%s5 + $0x8] sm:$0xff]
  %v3046 = vld [vmem:[%s5 + $0x10] sm:$0xff]
  %v3047 = vld [vmem:[%s5 + $0x18] sm:$0xff]
  %v3048 = vld [vmem:[%s5 + $0x20] sm:$0xff]
  %v3049 = vld [vmem:[%s5 + $0x28] sm:$0xff]
  %v3050 = vld [vmem:[%s5 + $0x30] sm:$0xff]
  %v3051 = vld [vmem:[%s5 + $0x38] sm:$0xff]
  %v3052 = vld [vmem:[%s6] sm:$0x1]
  %v3054 = vlaneseq
  %v3055 = vshrl.u32 %v3054, 7
  %v3056 = vsub.s32 0, %v3055
  %v3057 = vrot.slane %v3052, %v3056
  %v3060 = vsel %vm27, %v3043, 0
  %3062 = vmatprep.subr.mxu0 0.0
  %3063 = vmatpush1.msra.mxu0 0.0
  %3064 = vmatprep.subr.mxu0 0.0
  %3065 = vmatpush1.msra.mxu0 0.0
  %3066 = vmatprep.subr.mxu0 0.0
  %3067 = vmatpush1.msra.mxu0 0.0
  %3068 = vmatprep.subr.mxu0 0.0
  %3069 = vmatpush1.msra.mxu0 0.0
  %3070 = vmatprep.subr.mxu0 0.0
  %3071 = vmatpush1.msra.mxu0 0.0
  %3072 = vmatprep.subr.mxu0 0.0
  %3073 = vmatpush1.msra.mxu0 0.0
  %3074 = vmatprep.subr.mxu0 0.0
  %3075 = vmatpush1.msra.mxu0 0.0
  %3076 = vmatprep.subr.mxu0 0.0
  %3077 = vmatpush1.msra.mxu0 0.0
  %3078 = vmatprep.subr.mxu0 0.0
  %3079 = vmatpush1.msra.mxu0 %v3051
  %3080 = vmatprep.subr.mxu0 0.0
  %3081 = vmatpush1.msra.mxu0 %v3050
  %3082 = vmatprep.subr.mxu0 0.0
  %3083 = vmatpush1.msra.mxu0 %v3049
  %3084 = vmatprep.subr.mxu0 0.0
  %3085 = vmatpush1.msra.mxu0 %v3048
  %3086 = vmatprep.subr.mxu0 0.0
  %3087 = vmatpush1.msra.mxu0 %v3047
  %3088 = vmatprep.subr.mxu0 0.0
  %3089 = vmatpush1.msra.mxu0 %v3046
  %3090 = vmatprep.subr.mxu0 0.0
  %3091 = vmatpush1.msra.mxu0 %v3045
  %3092 = vmatprep.subr.mxu0 0.0
  %3093 = vmatpush1.msra.mxu0 %v3044
  %3094 = vmatprep.subr.mxu0 0.0
  %3095 = vmatpush2.msra.mxu0 0.0
  %3096 = vmatprep.subr.mxu0 0.0
  %3097 = vmatpush2.msra.mxu0 0.0
  %3098 = vmatprep.subr.mxu0 0.0
  %3099 = vmatpush2.msra.mxu0 0.0
  %3100 = vmatprep.subr.mxu0 0.0
  %3101 = vmatpush2.msra.mxu0 0.0
  %3102 = vmatprep.subr.mxu0 0.0
  %3103 = vmatpush2.msra.mxu0 0.0
  %3104 = vmatprep.subr.mxu0 0.0
  %3105 = vmatpush2.msra.mxu0 0.0
  %3106 = vmatprep.subr.mxu0 0.0
  %3107 = vmatpush2.msra.mxu0 0.0
  %3108 = vmatprep.subr.mxu0 0.0
  %3109 = vmatpush2.msra.mxu0 0.0
  %3110 = vmatprep.subr.mxu0 0.0
  %3111 = vmatpush2.msra.mxu0 0.0
  %3112 = vmatprep.subr.mxu0 0.0
  %3113 = vmatpush2.msra.mxu0 0.0
  %3114 = vmatprep.subr.mxu0 0.0
  %3115 = vmatpush2.msra.mxu0 0.0
  %3116 = vmatprep.subr.mxu0 0.0
  %3117 = vmatpush2.msra.mxu0 0.0
  %3118 = vmatprep.subr.mxu0 0.0
  %3119 = vmatpush2.msra.mxu0 0.0
  %3120 = vmatprep.subr.mxu0 0.0
  %3121 = vmatpush2.msra.mxu0 0.0
  %3122 = vmatprep.subr.mxu0 0.0
  %3123 = vmatpush2.msra.mxu0 0.0
  %3124 = vmatprep.subr.mxu0 0.0
  %3125 = vmatpush2.msra.mxu0 0.0
  %3126 = vmatprep.mubr.f32.mxu0 0.0
  %3127 = vmatmul.mubr.f32.gmra.mxu0 %v3060
  %v3128 = vpop.f32.mrf.mxu0
  %v3129 = vadd.f32 %v3057, %v3128
  %v3130 = vpop.f32.mrf.mxu0
  %3131 = vdwg.mxu0
  %3132 = vst [vmem:[%s7] sm:$0xff] %v3129
  // Predicated region
  $region30: #{lstm_classifier_forward.1} parent=0 // pred_check
    _
  $region31: #{lstm_classifier_forward.1} parent=0 // pred_check_branch
    %3134 = sbr.rel (0) target = $region33
  $region32: #{lstm_classifier_forward.1} parent=0 // pred_region
    _
  $region33: #{lstm_classifier_forward.1} parent=0 // pred_fallthru
    _
  // Predicated region
  $region34: #{lstm_classifier_forward.1} parent=0 // pred_check
    _
  $region35: #{lstm_classifier_forward.1} parent=0 // pred_check_branch
    %3136 = sbr.rel (0) target = $region37
  $region36: #{lstm_classifier_forward.1} parent=0 // pred_region
    _
  $region37: #{lstm_classifier_forward.1} parent=0 // pred_fallthru
    _

</llo_original>
